<compile_context>
chip_gen: v7x
topology: tpu7x:2x2x1
jax: 0.10.0
libtpu: 0.0.40
codegen_flags: <defaults>
</compile_context>

<pallas_src>
import jax
import jax.numpy as jnp
from jax.experimental import pallas as pl
from jax.experimental.pallas import tpu as pltpu

HID_DIM = 32          # opt.hid_dim; must be 32 so cat(text32, image32) -> 2*hid_dim
VGG_FEAT = 512        # VGG19 feature channels
BERT_DIM = 768        # BERT pooler_output width
NEG_SLOPE = 0.01      # F.leaky_relu default negative_slope


def _round_up(x, m):
    return (x + m - 1) // m * m


def spotfake_head_kernel(img_ref, txt_ref,
                         w_img_ref, b_img_ref,
                         w_txt_ref, b_txt_ref,
                         w_cls_txt_ref, w_cls_img_ref, b_cls_ref,
                         out_ref):
    # Image branch: the spatial mean is folded into w_img_ref (= repeat(w_img, HW)/HW),
    # so the whole branch is a single lane-dense bf16 MXU matmul with f32 accumulation.
    img_h = jnp.dot(img_ref[...], w_img_ref[...],
                    preferred_element_type=jnp.float32) + b_img_ref[...]        # [TB, 32]
    img_h = jnp.where(img_h > 0, img_h, NEG_SLOPE * img_h)                      # leaky_relu

    # Text branch: bert_fc on the (already pooled) BERT pooler output.
    txt_h = jnp.dot(txt_ref[...], w_txt_ref[...],
                    preferred_element_type=jnp.float32) + b_txt_ref[...]        # [TB, 32]

    # Classifier with split weight == c_fc1(cat([text, image], 1)); no concatenate.
    out_ref[...] = (jnp.dot(txt_h, w_cls_txt_ref[...], preferred_element_type=jnp.float32)
                    + jnp.dot(img_h, w_cls_img_ref[...], preferred_element_type=jnp.float32)
                    + b_cls_ref[...])                                           # [TB, 2]


def spotfake_head(image_feat, text_pooled, params, *, batch_tile=256):
    """image_feat: [B, 512, H, W] (NCHW VGG19 features); text_pooled: [B, 768] (BERT pooler)."""
    B, C, H, W = image_feat.shape
    assert C == VGG_FEAT and text_pooled.shape == (B, BERT_DIM)
    HW = H * W
    K_img = C * HW

    # Lane-dense image slab [B, C*HW]; bf16 halves HBM bytes of the dominant operand.
    img_slab = image_feat.reshape(B, K_img).astype(jnp.bfloat16)
    txt = text_pooled.astype(jnp.float32)

    # Fold the spatial mean into the image projection: row c*HW+s of w_img_exp is w_img[c]/HW.
    w_img_exp = (jnp.repeat(params["w_img"], HW, axis=0) / HW).astype(jnp.bfloat16)  # [K_img, 32]
    # Split classifier weight (text rows first, matching torch.cat order) -> no in-kernel concat.
    w_cls_txt = params["w_cls"][:HID_DIM]       # [32, 2]
    w_cls_img = params["w_cls"][HID_DIM:]       # [32, 2]

    # Batch tiling: 1-D grid; Pallas double-buffers the big image tile and overlaps DMA/MXU.
    TB = min(batch_tile, _round_up(B, 8))
    Bp = _round_up(B, TB)
    if Bp != B:
        img_slab = jnp.pad(img_slab, ((0, Bp - B), (0, 0)))
        txt = jnp.pad(txt, ((0, Bp - B), (0, 0)))
    grid = (Bp // TB,)

    tile = lambda i: (i, 0)     # batch-tiled operands
    const = lambda i: (0, 0)    # weights/biases stay resident across batch tiles

    # VMEM budget: double-buffered tiles + resident weights + headroom; cap at 64 MiB (v7x).
    vmem_need = 2 * (TB * K_img * 2            # image tile (bf16)
                     + TB * BERT_DIM * 4       # text tile (f32)
                     + TB * 2 * 4              # output tile
                     + K_img * HID_DIM * 2     # w_img_exp (bf16)
                     + BERT_DIM * HID_DIM * 4  # w_txt
                     + 2 * HID_DIM * 2 * 4     # split w_cls
                     + 3 * 128 * 4)            # biases (lane-padded)
    vmem_limit = int(min(max(vmem_need + (2 << 20), 32 * 1024 * 1024), 64 * 1024 * 1024))

    flops = 2 * Bp * (K_img * HID_DIM + BERT_DIM * HID_DIM + 2 * HID_DIM * 2)
    bytes_accessed = (Bp * K_img * 2 + Bp * BERT_DIM * 4 + Bp * 2 * 4
                      + K_img * HID_DIM * 2 + BERT_DIM * HID_DIM * 4)

    out = pl.pallas_call(
        spotfake_head_kernel,
        out_shape=jax.ShapeDtypeStruct((Bp, 2), jnp.float32),
        grid=grid,
        in_specs=[
            pl.BlockSpec((TB, K_img), tile),            # image slab (bf16)
            pl.BlockSpec((TB, BERT_DIM), tile),         # text pooler output
            pl.BlockSpec((K_img, HID_DIM), const),      # w_img_exp (mean folded in, bf16)
            pl.BlockSpec((1, HID_DIM), const),          # b_img
            pl.BlockSpec((BERT_DIM, HID_DIM), const),   # w_txt
            pl.BlockSpec((1, HID_DIM), const),          # b_txt
            pl.BlockSpec((HID_DIM, 2), const),          # w_cls[:32]  (text half)
            pl.BlockSpec((HID_DIM, 2), const),          # w_cls[32:]  (image half)
            pl.BlockSpec((1, 2), const),                # b_cls
        ],
        out_specs=pl.BlockSpec((TB, 2), tile),
        compiler_params=pltpu.CompilerParams(
            dimension_semantics=("parallel",),          # Megacore split on v7x; no-op on v5e/v6e
            vmem_limit_bytes=vmem_limit,
        ),
        cost_estimate=pl.CostEstimate(flops=flops, transcendentals=0,
                                      bytes_accessed=bytes_accessed),
    )(img_slab, txt,
      w_img_exp, params["b_img"],
      params["w_txt"], params["b_txt"],
      w_cls_txt, w_cls_img, params["b_cls"])
    return out[:B]


def init_params(key):
    """Deterministic PyTorch-Linear-style init: U(-1/sqrt(fan_in), 1/sqrt(fan_in))."""
    ks = jax.random.split(key, 6)

    def lin(kw, kb, fan_in, fan_out):
        bound = 1.0 / jnp.sqrt(fan_in)
        w = jax.random.uniform(kw, (fan_in, fan_out), jnp.float32, -bound, bound)
        b = jax.random.uniform(kb, (1, fan_out), jnp.float32, -bound, bound)
        return w, b

    w_img, b_img = lin(ks[0], ks[1], VGG_FEAT, HID_DIM)          # image_fc1: 512 -> 32
    w_txt, b_txt = lin(ks[2], ks[3], BERT_DIM, HID_DIM)          # bert_fc:   768 -> 32
    w_cls, b_cls = lin(ks[4], ks[5], 2 * HID_DIM, 2)             # c_fc1:     64  -> 2
    return dict(w_img=w_img, b_img=b_img, w_txt=w_txt, b_txt=b_txt,
                w_cls=w_cls, b_cls=b_cls)


def reference(image_feat, text_pooled, p):
    pooled = image_feat.mean(-1).mean(-1)
    img_h = pooled @ p["w_img"] + p["b_img"]
    img_h = jnp.where(img_h > 0, img_h, NEG_SLOPE * img_h)
    txt_h = text_pooled @ p["w_txt"] + p["b_txt"]
    feat = jnp.concatenate([txt_h, img_h], axis=1)
    return feat @ p["w_cls"] + p["b_cls"]


if __name__ == "__main__":
    key = jax.random.PRNGKey(0)
    k_img, k_txt, k_par = jax.random.split(key, 3)

    B, H, W = 8, 4, 4
    image_feat = jax.random.normal(k_img, (B, VGG_FEAT, H, W), jnp.float32)   # vgg19 output
    text_pooled = jax.random.normal(k_txt, (B, BERT_DIM), jnp.float32)        # bert pooler_output
    params = init_params(k_par)

    out = spotfake_head(image_feat, text_pooled, params)
    out = jax.block_until_ready(out)

    ref = reference(image_feat, text_pooled, params)
    assert out.shape == (B, 2)
    # bf16 image features / folded-mean weight introduce ~0.5% relative error vs f32 reference.
    assert jnp.allclose(out, ref, atol=1e-2, rtol=1e-2), "mismatch vs reference"
    print("KERNEL_OK")
</pallas_src>

<mosaic_0001>
module attributes {stable_mosaic.version = 11 : i64} {
  func.func @spotfake_head_kernel(%arg0: i32, %arg1: memref<8x8192xbf16, #tpu.memory_space<vmem>>, %arg2: memref<8x768xf32, #tpu.memory_space<vmem>>, %arg3: memref<8192x32xbf16, #tpu.memory_space<vmem>>, %arg4: memref<1x32xf32, #tpu.memory_space<vmem>>, %arg5: memref<768x32xf32, #tpu.memory_space<vmem>>, %arg6: memref<1x32xf32, #tpu.memory_space<vmem>>, %arg7: memref<32x2xf32, #tpu.memory_space<vmem>>, %arg8: memref<32x2xf32, #tpu.memory_space<vmem>>, %arg9: memref<1x2xf32, #tpu.memory_space<vmem>>, %arg10: memref<8x2xf32, #tpu.memory_space<vmem>>) attributes {dimension_semantics = [#tpu.dimension_semantics<parallel>], iteration_bounds = array<i64: 1>, scalar_prefetch = 0 : i64, scratch_operands = 0 : i64, tpu.core_type = #tpu.core_type<tc>, window_params = [{transform_indices = @transform_0, window_bounds = array<i64: 8, 8192>}, {transform_indices = @transform_1, window_bounds = array<i64: 8, 768>}, {pipeline_mode = #tpu.pipeline_mode<synchronous>, transform_indices = @transform_2, window_bounds = array<i64: 8192, 32>}, {pipeline_mode = #tpu.pipeline_mode<synchronous>, transform_indices = @transform_3, window_bounds = array<i64: 1, 32>}, {pipeline_mode = #tpu.pipeline_mode<synchronous>, transform_indices = @transform_4, window_bounds = array<i64: 768, 32>}, {pipeline_mode = #tpu.pipeline_mode<synchronous>, transform_indices = @transform_5, window_bounds = array<i64: 1, 32>}, {pipeline_mode = #tpu.pipeline_mode<synchronous>, transform_indices = @transform_6, window_bounds = array<i64: 32, 2>}, {pipeline_mode = #tpu.pipeline_mode<synchronous>, transform_indices = @transform_7, window_bounds = array<i64: 32, 2>}, {pipeline_mode = #tpu.pipeline_mode<synchronous>, transform_indices = @transform_8, window_bounds = array<i64: 1, 2>}, {transform_indices = @transform_9, window_bounds = array<i64: 8, 2>}]} {
    %c0 = arith.constant 0 : index
    %c0_0 = arith.constant 0 : index
    %0 = vector.load %arg1[%c0, %c0_0] : memref<8x8192xbf16, #tpu.memory_space<vmem>>, vector<8x8192xbf16>
    %c0_1 = arith.constant 0 : index
    %c0_2 = arith.constant 0 : index
    %1 = vector.load %arg3[%c0_1, %c0_2] : memref<8192x32xbf16, #tpu.memory_space<vmem>>, vector<8192x32xbf16>
    %cst = arith.constant dense<0.000000e+00> : vector<8x32xf32>
    %2 = tpu.matmul %0, %1, %cst {dimension_numbers = #tpu.dot_dimension_numbers<[1], [0], [0], [1], [0, 0, 1, 1], [], []>} : vector<8x8192xbf16>, vector<8192x32xbf16>, vector<8x32xf32> -> vector<8x32xf32>
    %c0_3 = arith.constant 0 : index
    %c0_4 = arith.constant 0 : index
    %3 = vector.load %arg4[%c0_3, %c0_4] : memref<1x32xf32, #tpu.memory_space<vmem>>, vector<1x32xf32>
    %4 = vector.broadcast %3 : vector<1x32xf32> to vector<8x32xf32>
    %5 = arith.addf %2, %4 : vector<8x32xf32>
    %cst_5 = arith.constant 0.000000e+00 : f32
    %6 = vector.broadcast %cst_5 : f32 to vector<8x32xf32>
    %7 = arith.cmpf ogt, %5, %6 : vector<8x32xf32>
    %cst_6 = arith.constant 0.00999999977 : f32
    %8 = vector.broadcast %cst_6 : f32 to vector<8x32xf32>
    %9 = arith.mulf %8, %5 : vector<8x32xf32>
    %10 = arith.select %7, %5, %9 : vector<8x32xi1>, vector<8x32xf32>
    %c0_7 = arith.constant 0 : index
    %c0_8 = arith.constant 0 : index
    %11 = vector.load %arg2[%c0_7, %c0_8] : memref<8x768xf32, #tpu.memory_space<vmem>>, vector<8x768xf32>
    %c0_9 = arith.constant 0 : index
    %c0_10 = arith.constant 0 : index
    %12 = vector.load %arg5[%c0_9, %c0_10] : memref<768x32xf32, #tpu.memory_space<vmem>>, vector<768x32xf32>
    %cst_11 = arith.constant dense<0.000000e+00> : vector<8x32xf32>
    %13 = tpu.matmul %11, %12, %cst_11 {dimension_numbers = #tpu.dot_dimension_numbers<[1], [0], [0], [1], [0, 0, 1, 1], [], []>} : vector<8x768xf32>, vector<768x32xf32>, vector<8x32xf32> -> vector<8x32xf32>
    %c0_12 = arith.constant 0 : index
    %c0_13 = arith.constant 0 : index
    %14 = vector.load %arg6[%c0_12, %c0_13] : memref<1x32xf32, #tpu.memory_space<vmem>>, vector<1x32xf32>
    %15 = vector.broadcast %14 : vector<1x32xf32> to vector<8x32xf32>
    %16 = arith.addf %13, %15 : vector<8x32xf32>
    %c0_14 = arith.constant 0 : index
    %c0_15 = arith.constant 0 : index
    %17 = vector.load %arg7[%c0_14, %c0_15] : memref<32x2xf32, #tpu.memory_space<vmem>>, vector<32x2xf32>
    %cst_16 = arith.constant dense<0.000000e+00> : vector<8x2xf32>
    %18 = tpu.matmul %16, %17, %cst_16 {dimension_numbers = #tpu.dot_dimension_numbers<[1], [0], [0], [1], [0, 0, 1, 1], [], []>} : vector<8x32xf32>, vector<32x2xf32>, vector<8x2xf32> -> vector<8x2xf32>
    %c0_17 = arith.constant 0 : index
    %c0_18 = arith.constant 0 : index
    %19 = vector.load %arg8[%c0_17, %c0_18] : memref<32x2xf32, #tpu.memory_space<vmem>>, vector<32x2xf32>
    %cst_19 = arith.constant dense<0.000000e+00> : vector<8x2xf32>
    %20 = tpu.matmul %10, %19, %cst_19 {dimension_numbers = #tpu.dot_dimension_numbers<[1], [0], [0], [1], [0, 0, 1, 1], [], []>} : vector<8x32xf32>, vector<32x2xf32>, vector<8x2xf32> -> vector<8x2xf32>
    %21 = arith.addf %18, %20 : vector<8x2xf32>
    %c0_20 = arith.constant 0 : index
    %c0_21 = arith.constant 0 : index
    %22 = vector.load %arg9[%c0_20, %c0_21] : memref<1x2xf32, #tpu.memory_space<vmem>>, vector<1x2xf32>
    %23 = vector.broadcast %22 : vector<1x2xf32> to vector<8x2xf32>
    %24 = arith.addf %21, %23 : vector<8x2xf32>
    %c0_22 = arith.constant 0 : index
    %c0_23 = arith.constant 0 : index
    %25 = vector.load %arg10[%c0_22, %c0_23] : memref<8x2xf32, #tpu.memory_space<vmem>>, vector<8x2xf32>
    tpu.vector_store %arg10[%c0_22, %c0_23], %24 {strides = array<i32>} : memref<8x2xf32, #tpu.memory_space<vmem>>, vector<8x2xf32>,
    return
  }
  func.func @transform_0(%arg0: i32) -> (i32, i32) {
    %c0_i32 = arith.constant 0 : i32
    %c0_i32_0 = arith.constant 0 : i32
    return %arg0, %c0_i32 : i32, i32
  }
  func.func @transform_1(%arg0: i32) -> (i32, i32) {
    %c0_i32 = arith.constant 0 : i32
    %c0_i32_0 = arith.constant 0 : i32
    return %arg0, %c0_i32 : i32, i32
  }
  func.func @transform_2(%arg0: i32) -> (i32, i32) {
    %c0_i32 = arith.constant 0 : i32
    %c0_i32_0 = arith.constant 0 : i32
    %c0_i32_1 = arith.constant 0 : i32
    return %c0_i32, %c0_i32_0 : i32, i32
  }
  func.func @transform_3(%arg0: i32) -> (i32, i32) {
    %c0_i32 = arith.constant 0 : i32
    %c0_i32_0 = arith.constant 0 : i32
    %c0_i32_1 = arith.constant 0 : i32
    return %c0_i32, %c0_i32_0 : i32, i32
  }
  func.func @transform_4(%arg0: i32) -> (i32, i32) {
    %c0_i32 = arith.constant 0 : i32
    %c0_i32_0 = arith.constant 0 : i32
    %c0_i32_1 = arith.constant 0 : i32
    return %c0_i32, %c0_i32_0 : i32, i32
  }
  func.func @transform_5(%arg0: i32) -> (i32, i32) {
    %c0_i32 = arith.constant 0 : i32
    %c0_i32_0 = arith.constant 0 : i32
    %c0_i32_1 = arith.constant 0 : i32
    return %c0_i32, %c0_i32_0 : i32, i32
  }
  func.func @transform_6(%arg0: i32) -> (i32, i32) {
    %c0_i32 = arith.constant 0 : i32
    %c0_i32_0 = arith.constant 0 : i32
    %c0_i32_1 = arith.constant 0 : i32
    return %c0_i32, %c0_i32_0 : i32, i32
  }
  func.func @transform_7(%arg0: i32) -> (i32, i32) {
    %c0_i32 = arith.constant 0 : i32
    %c0_i32_0 = arith.constant 0 : i32
    %c0_i32_1 = arith.constant 0 : i32
    return %c0_i32, %c0_i32_0 : i32, i32
  }
  func.func @transform_8(%arg0: i32) -> (i32, i32) {
    %c0_i32 = arith.constant 0 : i32
    %c0_i32_0 = arith.constant 0 : i32
    %c0_i32_1 = arith.constant 0 : i32
    return %c0_i32, %c0_i32_0 : i32, i32
  }
  func.func @transform_9(%arg0: i32) -> (i32, i32) {
    %c0_i32 = arith.constant 0 : i32
    %c0_i32_0 = arith.constant 0 : i32
    return %arg0, %c0_i32 : i32, i32
  }
}

</mosaic_0001>

<llo_original>
// kernel: tpu_custom_call.1
$region0: #{tpu_custom_call.1}
  #allocation0 [shape = 'u32[]', space=smem, size = 0x4, offset = 0x4, fixed_abs, tag = 'smem constant byte address 0x4 - core index']
  #allocation1 [shape = 'u32[144,128]{1,0:T(1,128)}', space=vmem, size = 0x12000, scoped, tag = 'internal scratch']
  %s0 = inlined_call_operand.vmem [shape: bf16[8,8192], index: 0, kind: input, shape index: {}]
  %s1 = inlined_call_operand.vmem [shape: f32[8,768], index: 1, kind: input, shape index: {}]
  %s2 = inlined_call_operand.vmem [shape: bf16[8192,32], index: 2, kind: input, shape index: {}]
  %s3 = inlined_call_operand.vmem [shape: f32[1,32], index: 3, kind: input, shape index: {}]
  %s4 = inlined_call_operand.vmem [shape: f32[768,32], index: 4, kind: input, shape index: {}]
  %s5 = inlined_call_operand.vmem [shape: f32[1,32], index: 5, kind: input, shape index: {}]
  %s6 = inlined_call_operand.vmem [shape: f32[32,2], index: 6, kind: input, shape index: {}]
  %s7 = inlined_call_operand.vmem [shape: f32[32,2], index: 7, kind: input, shape index: {}]
  %s8 = inlined_call_operand.vmem [shape: f32[1,2], index: 8, kind: input, shape index: {}]
  %s9 = inlined_call_operand.vmem [shape: f32[8,2], index: 9, kind: output, shape index: {}]
  %s10 = sld [smem:[#allocation0]]
  $region46: #{tpu_custom_call.1} parent=0
    _
  %s12 = ssub.s32 1, %s10
  %s13 = scalar_select 0, %s12, %s10
  // Predicated region
  $region2: #{tpu_custom_call.1} parent=0 // pred_check
    _
  $region3: #{tpu_custom_call.1} parent=0 // pred_check_branch
    %15 = sbr.rel (0) target = $region5
  $region4: #{tpu_custom_call.1} parent=0 // pred_region
    _
  $region5: #{tpu_custom_call.1} parent=0 // pred_fallthru
    _
  // Predicated region
  $region6: #{tpu_custom_call.1} parent=0 // pred_check
    _
  $region7: #{tpu_custom_call.1} parent=0 // pred_check_branch
    %17 = sbr.rel (0) target = $region9
  $region8: #{tpu_custom_call.1} parent=0 // pred_region
    _
  $region9: #{tpu_custom_call.1} parent=0 // pred_fallthru
    _
  // Predicated region
  $region10: #{tpu_custom_call.1} parent=0 // pred_check
    _
  $region11: #{tpu_custom_call.1} parent=0 // pred_check_branch
    %19 = sbr.rel (0) target = $region13
  $region12: #{tpu_custom_call.1} parent=0 // pred_region
    _
  $region13: #{tpu_custom_call.1} parent=0 // pred_fallthru
    _
  // Predicated region
  $region14: #{tpu_custom_call.1} parent=0 // pred_check
    _
  $region15: #{tpu_custom_call.1} parent=0 // pred_check_branch
    %21 = sbr.rel (0) target = $region17
  $region16: #{tpu_custom_call.1} parent=0 // pred_region
    _
  $region17: #{tpu_custom_call.1} parent=0 // pred_fallthru
    _
  // Predicated region
  $region18: #{tpu_custom_call.1} parent=0 // pred_check
    _
  $region19: #{tpu_custom_call.1} parent=0 // pred_check_branch
    %23 = sbr.rel (0) target = $region21
  $region20: #{tpu_custom_call.1} parent=0 // pred_region
    _
  $region21: #{tpu_custom_call.1} parent=0 // pred_fallthru
    _
  // Predicated region
  $region22: #{tpu_custom_call.1} parent=0 // pred_check
    _
  $region23: #{tpu_custom_call.1} parent=0 // pred_check_branch
    %25 = sbr.rel (0) target = $region25
  $region24: #{tpu_custom_call.1} parent=0 // pred_region
    _
  $region25: #{tpu_custom_call.1} parent=0 // pred_fallthru
    _
  // Predicated region
  $region26: #{tpu_custom_call.1} parent=0 // pred_check
    _
  $region27: #{tpu_custom_call.1} parent=0 // pred_check_branch
    %27 = sbr.rel (0) target = $region29
  $region28: #{tpu_custom_call.1} parent=0 // pred_region
    _
  $region29: #{tpu_custom_call.1} parent=0 // pred_fallthru
    _
  // Predicated region
  $region30: #{tpu_custom_call.1} parent=0 // pred_check
    _
  $region31: #{tpu_custom_call.1} parent=0 // pred_check_branch
    %29 = sbr.rel (0) target = $region33
  $region32: #{tpu_custom_call.1} parent=0 // pred_region
    _
  $region33: #{tpu_custom_call.1} parent=0 // pred_fallthru
    _
  // Predicated region
  $region34: #{tpu_custom_call.1} parent=0 // pred_check
    _
  $region35: #{tpu_custom_call.1} parent=0 // pred_check_branch
    %31 = sbr.rel (0) target = $region37
  $region36: #{tpu_custom_call.1} parent=0 // pred_region
    _
  $region37: #{tpu_custom_call.1} parent=0 // pred_fallthru
    _
  %v33 = vld [vmem:[%s0] sm:$0xff]
  %v34 = vld [vmem:[%s0 + $0x8] sm:$0xff]
  %v35 = vld [vmem:[%s0 + $0x10] sm:$0xff]
  %v36 = vld [vmem:[%s0 + $0x18] sm:$0xff]
  %v37 = vld [vmem:[%s0 + $0x20] sm:$0xff]
  %v38 = vld [vmem:[%s0 + $0x28] sm:$0xff]
  %v39 = vld [vmem:[%s0 + $0x30] sm:$0xff]
  %v40 = vld [vmem:[%s0 + $0x38] sm:$0xff]
  %v41 = vld [vmem:[%s0 + $0x40] sm:$0xff]
  %v42 = vld [vmem:[%s0 + $0x48] sm:$0xff]
  %v43 = vld [vmem:[%s0 + $0x50] sm:$0xff]
  %v44 = vld [vmem:[%s0 + $0x58] sm:$0xff]
  %v45 = vld [vmem:[%s0 + $0x60] sm:$0xff]
  %v46 = vld [vmem:[%s0 + $0x68] sm:$0xff]
  %v47 = vld [vmem:[%s0 + $0x70] sm:$0xff]
  %v48 = vld [vmem:[%s0 + $0x78] sm:$0xff]
  %v49 = vld [vmem:[%s0 + $0x80] sm:$0xff]
  %v50 = vld [vmem:[%s0 + $0x88] sm:$0xff]
  %v51 = vld [vmem:[%s0 + $0x90] sm:$0xff]
  %v52 = vld [vmem:[%s0 + $0x98] sm:$0xff]
  %v53 = vld [vmem:[%s0 + $0xa0] sm:$0xff]
  %v54 = vld [vmem:[%s0 + $0xa8] sm:$0xff]
  %v55 = vld [vmem:[%s0 + $0xb0] sm:$0xff]
  %v56 = vld [vmem:[%s0 + $0xb8] sm:$0xff]
  %v57 = vld [vmem:[%s0 + $0xc0] sm:$0xff]
  %v58 = vld [vmem:[%s0 + $0xc8] sm:$0xff]
  %v59 = vld [vmem:[%s0 + $0xd0] sm:$0xff]
  %v60 = vld [vmem:[%s0 + $0xd8] sm:$0xff]
  %v61 = vld [vmem:[%s0 + $0xe0] sm:$0xff]
  %v62 = vld [vmem:[%s0 + $0xe8] sm:$0xff]
  %v63 = vld [vmem:[%s0 + $0xf0] sm:$0xff]
  %v64 = vld [vmem:[%s0 + $0xf8] sm:$0xff]
  %v65 = vld [vmem:[%s2] sm:$0xf]
  %v66 = vld [vmem:[%s2 + $0x4] sm:$0xf]
  %v67 = vld [vmem:[%s2 + $0x8] sm:$0xf]
  %v68 = vld [vmem:[%s2 + $0xc] sm:$0xf]
  %v69 = vld [vmem:[%s2 + $0x10] sm:$0xf]
  %v70 = vld [vmem:[%s2 + $0x14] sm:$0xf]
  %v71 = vld [vmem:[%s2 + $0x18] sm:$0xf]
  %v72 = vld [vmem:[%s2 + $0x1c] sm:$0xf]
  %v73 = vld [vmem:[%s2 + $0x20] sm:$0xf]
  %v74 = vld [vmem:[%s2 + $0x24] sm:$0xf]
  %v75 = vld [vmem:[%s2 + $0x28] sm:$0xf]
  %v76 = vld [vmem:[%s2 + $0x2c] sm:$0xf]
  %v77 = vld [vmem:[%s2 + $0x30] sm:$0xf]
  %v78 = vld [vmem:[%s2 + $0x34] sm:$0xf]
  %v79 = vld [vmem:[%s2 + $0x38] sm:$0xf]
  %v80 = vld [vmem:[%s2 + $0x3c] sm:$0xf]
  %v81 = vld [vmem:[%s2 + $0x40] sm:$0xf]
  %v82 = vld [vmem:[%s2 + $0x44] sm:$0xf]
  %v83 = vld [vmem:[%s2 + $0x48] sm:$0xf]
  %v84 = vld [vmem:[%s2 + $0x4c] sm:$0xf]
  %v85 = vld [vmem:[%s2 + $0x50] sm:$0xf]
  %v86 = vld [vmem:[%s2 + $0x54] sm:$0xf]
  %v87 = vld [vmem:[%s2 + $0x58] sm:$0xf]
  %v88 = vld [vmem:[%s2 + $0x5c] sm:$0xf]
  %v89 = vld [vmem:[%s2 + $0x60] sm:$0xf]
  %v90 = vld [vmem:[%s2 + $0x64] sm:$0xf]
  %v91 = vld [vmem:[%s2 + $0x68] sm:$0xf]
  %v92 = vld [vmem:[%s2 + $0x6c] sm:$0xf]
  %v93 = vld [vmem:[%s2 + $0x70] sm:$0xf]
  %v94 = vld [vmem:[%s2 + $0x74] sm:$0xf]
  %v95 = vld [vmem:[%s2 + $0x78] sm:$0xf]
  %v96 = vld [vmem:[%s2 + $0x7c] sm:$0xf]
  %v97 = vld [vmem:[%s2 + $0x80] sm:$0xf]
  %v98 = vld [vmem:[%s2 + $0x84] sm:$0xf]
  %v99 = vld [vmem:[%s2 + $0x88] sm:$0xf]
  %v100 = vld [vmem:[%s2 + $0x8c] sm:$0xf]
  %v101 = vld [vmem:[%s2 + $0x90] sm:$0xf]
  %v102 = vld [vmem:[%s2 + $0x94] sm:$0xf]
  %v103 = vld [vmem:[%s2 + $0x98] sm:$0xf]
  %v104 = vld [vmem:[%s2 + $0x9c] sm:$0xf]
  %v105 = vld [vmem:[%s2 + $0xa0] sm:$0xf]
  %v106 = vld [vmem:[%s2 + $0xa4] sm:$0xf]
  %v107 = vld [vmem:[%s2 + $0xa8] sm:$0xf]
  %v108 = vld [vmem:[%s2 + $0xac] sm:$0xf]
  %v109 = vld [vmem:[%s2 + $0xb0] sm:$0xf]
  %v110 = vld [vmem:[%s2 + $0xb4] sm:$0xf]
  %v111 = vld [vmem:[%s2 + $0xb8] sm:$0xf]
  %v112 = vld [vmem:[%s2 + $0xbc] sm:$0xf]
  %v113 = vld [vmem:[%s2 + $0xc0] sm:$0xf]
  %v114 = vld [vmem:[%s2 + $0xc4] sm:$0xf]
  %v115 = vld [vmem:[%s2 + $0xc8] sm:$0xf]
  %v116 = vld [vmem:[%s2 + $0xcc] sm:$0xf]
  %v117 = vld [vmem:[%s2 + $0xd0] sm:$0xf]
  %v118 = vld [vmem:[%s2 + $0xd4] sm:$0xf]
  %v119 = vld [vmem:[%s2 + $0xd8] sm:$0xf]
  %v120 = vld [vmem:[%s2 + $0xdc] sm:$0xf]
  %v121 = vld [vmem:[%s2 + $0xe0] sm:$0xf]
  %v122 = vld [vmem:[%s2 + $0xe4] sm:$0xf]
  %v123 = vld [vmem:[%s2 + $0xe8] sm:$0xf]
  %v124 = vld [vmem:[%s2 + $0xec] sm:$0xf]
  %v125 = vld [vmem:[%s2 + $0xf0] sm:$0xf]
  %v126 = vld [vmem:[%s2 + $0xf4] sm:$0xf]
  %v127 = vld [vmem:[%s2 + $0xf8] sm:$0xf]
  %v128 = vld [vmem:[%s2 + $0xfc] sm:$0xf]
  %v129 = vld [vmem:[%s2 + $0x100] sm:$0xf]
  %v130 = vld [vmem:[%s2 + $0x104] sm:$0xf]
  %v131 = vld [vmem:[%s2 + $0x108] sm:$0xf]
  %v132 = vld [vmem:[%s2 + $0x10c] sm:$0xf]
  %v133 = vld [vmem:[%s2 + $0x110] sm:$0xf]
  %v134 = vld [vmem:[%s2 + $0x114] sm:$0xf]
  %v135 = vld [vmem:[%s2 + $0x118] sm:$0xf]
  %v136 = vld [vmem:[%s2 + $0x11c] sm:$0xf]
  %v137 = vld [vmem:[%s2 + $0x120] sm:$0xf]
  %v138 = vld [vmem:[%s2 + $0x124] sm:$0xf]
  %v139 = vld [vmem:[%s2 + $0x128] sm:$0xf]
  %v140 = vld [vmem:[%s2 + $0x12c] sm:$0xf]
  %v141 = vld [vmem:[%s2 + $0x130] sm:$0xf]
  %v142 = vld [vmem:[%s2 + $0x134] sm:$0xf]
  %v143 = vld [vmem:[%s2 + $0x138] sm:$0xf]
  %v144 = vld [vmem:[%s2 + $0x13c] sm:$0xf]
  %v145 = vld [vmem:[%s2 + $0x140] sm:$0xf]
  %v146 = vld [vmem:[%s2 + $0x144] sm:$0xf]
  %v147 = vld [vmem:[%s2 + $0x148] sm:$0xf]
  %v148 = vld [vmem:[%s2 + $0x14c] sm:$0xf]
  %v149 = vld [vmem:[%s2 + $0x150] sm:$0xf]
  %v150 = vld [vmem:[%s2 + $0x154] sm:$0xf]
  %v151 = vld [vmem:[%s2 + $0x158] sm:$0xf]
  %v152 = vld [vmem:[%s2 + $0x15c] sm:$0xf]
  %v153 = vld [vmem:[%s2 + $0x160] sm:$0xf]
  %v154 = vld [vmem:[%s2 + $0x164] sm:$0xf]
  %v155 = vld [vmem:[%s2 + $0x168] sm:$0xf]
  %v156 = vld [vmem:[%s2 + $0x16c] sm:$0xf]
  %v157 = vld [vmem:[%s2 + $0x170] sm:$0xf]
  %v158 = vld [vmem:[%s2 + $0x174] sm:$0xf]
  %v159 = vld [vmem:[%s2 + $0x178] sm:$0xf]
  %v160 = vld [vmem:[%s2 + $0x17c] sm:$0xf]
  %v161 = vld [vmem:[%s2 + $0x180] sm:$0xf]
  %v162 = vld [vmem:[%s2 + $0x184] sm:$0xf]
  %v163 = vld [vmem:[%s2 + $0x188] sm:$0xf]
  %v164 = vld [vmem:[%s2 + $0x18c] sm:$0xf]
  %v165 = vld [vmem:[%s2 + $0x190] sm:$0xf]
  %v166 = vld [vmem:[%s2 + $0x194] sm:$0xf]
  %v167 = vld [vmem:[%s2 + $0x198] sm:$0xf]
  %v168 = vld [vmem:[%s2 + $0x19c] sm:$0xf]
  %v169 = vld [vmem:[%s2 + $0x1a0] sm:$0xf]
  %v170 = vld [vmem:[%s2 + $0x1a4] sm:$0xf]
  %v171 = vld [vmem:[%s2 + $0x1a8] sm:$0xf]
  %v172 = vld [vmem:[%s2 + $0x1ac] sm:$0xf]
  %v173 = vld [vmem:[%s2 + $0x1b0] sm:$0xf]
  %v174 = vld [vmem:[%s2 + $0x1b4] sm:$0xf]
  %v175 = vld [vmem:[%s2 + $0x1b8] sm:$0xf]
  %v176 = vld [vmem:[%s2 + $0x1bc] sm:$0xf]
  %v177 = vld [vmem:[%s2 + $0x1c0] sm:$0xf]
  %v178 = vld [vmem:[%s2 + $0x1c4] sm:$0xf]
  %v179 = vld [vmem:[%s2 + $0x1c8] sm:$0xf]
  %v180 = vld [vmem:[%s2 + $0x1cc] sm:$0xf]
  %v181 = vld [vmem:[%s2 + $0x1d0] sm:$0xf]
  %v182 = vld [vmem:[%s2 + $0x1d4] sm:$0xf]
  %v183 = vld [vmem:[%s2 + $0x1d8] sm:$0xf]
  %v184 = vld [vmem:[%s2 + $0x1dc] sm:$0xf]
  %v185 = vld [vmem:[%s2 + $0x1e0] sm:$0xf]
  %v186 = vld [vmem:[%s2 + $0x1e4] sm:$0xf]
  %v187 = vld [vmem:[%s2 + $0x1e8] sm:$0xf]
  %v188 = vld [vmem:[%s2 + $0x1ec] sm:$0xf]
  %v189 = vld [vmem:[%s2 + $0x1f0] sm:$0xf]
  %v190 = vld [vmem:[%s2 + $0x1f4] sm:$0xf]
  %v191 = vld [vmem:[%s2 + $0x1f8] sm:$0xf]
  %v192 = vld [vmem:[%s2 + $0x1fc] sm:$0xf]
  %v193 = vld [vmem:[%s2 + $0x200] sm:$0xf]
  %v194 = vld [vmem:[%s2 + $0x204] sm:$0xf]
  %v195 = vld [vmem:[%s2 + $0x208] sm:$0xf]
  %v196 = vld [vmem:[%s2 + $0x20c] sm:$0xf]
  %v197 = vld [vmem:[%s2 + $0x210] sm:$0xf]
  %v198 = vld [vmem:[%s2 + $0x214] sm:$0xf]
  %v199 = vld [vmem:[%s2 + $0x218] sm:$0xf]
  %v200 = vld [vmem:[%s2 + $0x21c] sm:$0xf]
  %v201 = vld [vmem:[%s2 + $0x220] sm:$0xf]
  %v202 = vld [vmem:[%s2 + $0x224] sm:$0xf]
  %v203 = vld [vmem:[%s2 + $0x228] sm:$0xf]
  %v204 = vld [vmem:[%s2 + $0x22c] sm:$0xf]
  %v205 = vld [vmem:[%s2 + $0x230] sm:$0xf]
  %v206 = vld [vmem:[%s2 + $0x234] sm:$0xf]
  %v207 = vld [vmem:[%s2 + $0x238] sm:$0xf]
  %v208 = vld [vmem:[%s2 + $0x23c] sm:$0xf]
  %v209 = vld [vmem:[%s2 + $0x240] sm:$0xf]
  %v210 = vld [vmem:[%s2 + $0x244] sm:$0xf]
  %v211 = vld [vmem:[%s2 + $0x248] sm:$0xf]
  %v212 = vld [vmem:[%s2 + $0x24c] sm:$0xf]
  %v213 = vld [vmem:[%s2 + $0x250] sm:$0xf]
  %v214 = vld [vmem:[%s2 + $0x254] sm:$0xf]
  %v215 = vld [vmem:[%s2 + $0x258] sm:$0xf]
  %v216 = vld [vmem:[%s2 + $0x25c] sm:$0xf]
  %v217 = vld [vmem:[%s2 + $0x260] sm:$0xf]
  %v218 = vld [vmem:[%s2 + $0x264] sm:$0xf]
  %v219 = vld [vmem:[%s2 + $0x268] sm:$0xf]
  %v220 = vld [vmem:[%s2 + $0x26c] sm:$0xf]
  %v221 = vld [vmem:[%s2 + $0x270] sm:$0xf]
  %v222 = vld [vmem:[%s2 + $0x274] sm:$0xf]
  %v223 = vld [vmem:[%s2 + $0x278] sm:$0xf]
  %v224 = vld [vmem:[%s2 + $0x27c] sm:$0xf]
  %v225 = vld [vmem:[%s2 + $0x280] sm:$0xf]
  %v226 = vld [vmem:[%s2 + $0x284] sm:$0xf]
  %v227 = vld [vmem:[%s2 + $0x288] sm:$0xf]
  %v228 = vld [vmem:[%s2 + $0x28c] sm:$0xf]
  %v229 = vld [vmem:[%s2 + $0x290] sm:$0xf]
  %v230 = vld [vmem:[%s2 + $0x294] sm:$0xf]
  %v231 = vld [vmem:[%s2 + $0x298] sm:$0xf]
  %v232 = vld [vmem:[%s2 + $0x29c] sm:$0xf]
  %v233 = vld [vmem:[%s2 + $0x2a0] sm:$0xf]
  %v234 = vld [vmem:[%s2 + $0x2a4] sm:$0xf]
  %v235 = vld [vmem:[%s2 + $0x2a8] sm:$0xf]
  %v236 = vld [vmem:[%s2 + $0x2ac] sm:$0xf]
  %v237 = vld [vmem:[%s2 + $0x2b0] sm:$0xf]
  %v238 = vld [vmem:[%s2 + $0x2b4] sm:$0xf]
  %v239 = vld [vmem:[%s2 + $0x2b8] sm:$0xf]
  %v240 = vld [vmem:[%s2 + $0x2bc] sm:$0xf]
  %v241 = vld [vmem:[%s2 + $0x2c0] sm:$0xf]
  %v242 = vld [vmem:[%s2 + $0x2c4] sm:$0xf]
  %v243 = vld [vmem:[%s2 + $0x2c8] sm:$0xf]
  %v244 = vld [vmem:[%s2 + $0x2cc] sm:$0xf]
  %v245 = vld [vmem:[%s2 + $0x2d0] sm:$0xf]
  %v246 = vld [vmem:[%s2 + $0x2d4] sm:$0xf]
  %v247 = vld [vmem:[%s2 + $0x2d8] sm:$0xf]
  %v248 = vld [vmem:[%s2 + $0x2dc] sm:$0xf]
  %v249 = vld [vmem:[%s2 + $0x2e0] sm:$0xf]
  %v250 = vld [vmem:[%s2 + $0x2e4] sm:$0xf]
  %v251 = vld [vmem:[%s2 + $0x2e8] sm:$0xf]
  %v252 = vld [vmem:[%s2 + $0x2ec] sm:$0xf]
  %v253 = vld [vmem:[%s2 + $0x2f0] sm:$0xf]
  %v254 = vld [vmem:[%s2 + $0x2f4] sm:$0xf]
  %v255 = vld [vmem:[%s2 + $0x2f8] sm:$0xf]
  %v256 = vld [vmem:[%s2 + $0x2fc] sm:$0xf]
  %v257 = vld [vmem:[%s2 + $0x300] sm:$0xf]
  %v258 = vld [vmem:[%s2 + $0x304] sm:$0xf]
  %v259 = vld [vmem:[%s2 + $0x308] sm:$0xf]
  %v260 = vld [vmem:[%s2 + $0x30c] sm:$0xf]
  %v261 = vld [vmem:[%s2 + $0x310] sm:$0xf]
  %v262 = vld [vmem:[%s2 + $0x314] sm:$0xf]
  %v263 = vld [vmem:[%s2 + $0x318] sm:$0xf]
  %v264 = vld [vmem:[%s2 + $0x31c] sm:$0xf]
  %v265 = vld [vmem:[%s2 + $0x320] sm:$0xf]
  %v266 = vld [vmem:[%s2 + $0x324] sm:$0xf]
  %v267 = vld [vmem:[%s2 + $0x328] sm:$0xf]
  %v268 = vld [vmem:[%s2 + $0x32c] sm:$0xf]
  %v269 = vld [vmem:[%s2 + $0x330] sm:$0xf]
  %v270 = vld [vmem:[%s2 + $0x334] sm:$0xf]
  %v271 = vld [vmem:[%s2 + $0x338] sm:$0xf]
  %v272 = vld [vmem:[%s2 + $0x33c] sm:$0xf]
  %v273 = vld [vmem:[%s2 + $0x340] sm:$0xf]
  %v274 = vld [vmem:[%s2 + $0x344] sm:$0xf]
  %v275 = vld [vmem:[%s2 + $0x348] sm:$0xf]
  %v276 = vld [vmem:[%s2 + $0x34c] sm:$0xf]
  %v277 = vld [vmem:[%s2 + $0x350] sm:$0xf]
  %v278 = vld [vmem:[%s2 + $0x354] sm:$0xf]
  %v279 = vld [vmem:[%s2 + $0x358] sm:$0xf]
  %v280 = vld [vmem:[%s2 + $0x35c] sm:$0xf]
  %v281 = vld [vmem:[%s2 + $0x360] sm:$0xf]
  %v282 = vld [vmem:[%s2 + $0x364] sm:$0xf]
  %v283 = vld [vmem:[%s2 + $0x368] sm:$0xf]
  %v284 = vld [vmem:[%s2 + $0x36c] sm:$0xf]
  %v285 = vld [vmem:[%s2 + $0x370] sm:$0xf]
  %v286 = vld [vmem:[%s2 + $0x374] sm:$0xf]
  %v287 = vld [vmem:[%s2 + $0x378] sm:$0xf]
  %v288 = vld [vmem:[%s2 + $0x37c] sm:$0xf]
  %v289 = vld [vmem:[%s2 + $0x380] sm:$0xf]
  %v290 = vld [vmem:[%s2 + $0x384] sm:$0xf]
  %v291 = vld [vmem:[%s2 + $0x388] sm:$0xf]
  %v292 = vld [vmem:[%s2 + $0x38c] sm:$0xf]
  %v293 = vld [vmem:[%s2 + $0x390] sm:$0xf]
  %v294 = vld [vmem:[%s2 + $0x394] sm:$0xf]
  %v295 = vld [vmem:[%s2 + $0x398] sm:$0xf]
  %v296 = vld [vmem:[%s2 + $0x39c] sm:$0xf]
  %v297 = vld [vmem:[%s2 + $0x3a0] sm:$0xf]
  %v298 = vld [vmem:[%s2 + $0x3a4] sm:$0xf]
  %v299 = vld [vmem:[%s2 + $0x3a8] sm:$0xf]
  %v300 = vld [vmem:[%s2 + $0x3ac] sm:$0xf]
  %v301 = vld [vmem:[%s2 + $0x3b0] sm:$0xf]
  %v302 = vld [vmem:[%s2 + $0x3b4] sm:$0xf]
  %v303 = vld [vmem:[%s2 + $0x3b8] sm:$0xf]
  %v304 = vld [vmem:[%s2 + $0x3bc] sm:$0xf]
  %v305 = vld [vmem:[%s2 + $0x3c0] sm:$0xf]
  %v306 = vld [vmem:[%s2 + $0x3c4] sm:$0xf]
  %v307 = vld [vmem:[%s2 + $0x3c8] sm:$0xf]
  %v308 = vld [vmem:[%s2 + $0x3cc] sm:$0xf]
  %v309 = vld [vmem:[%s2 + $0x3d0] sm:$0xf]
  %v310 = vld [vmem:[%s2 + $0x3d4] sm:$0xf]
  %v311 = vld [vmem:[%s2 + $0x3d8] sm:$0xf]
  %v312 = vld [vmem:[%s2 + $0x3dc] sm:$0xf]
  %v313 = vld [vmem:[%s2 + $0x3e0] sm:$0xf]
  %v314 = vld [vmem:[%s2 + $0x3e4] sm:$0xf]
  %v315 = vld [vmem:[%s2 + $0x3e8] sm:$0xf]
  %v316 = vld [vmem:[%s2 + $0x3ec] sm:$0xf]
  %v317 = vld [vmem:[%s2 + $0x3f0] sm:$0xf]
  %v318 = vld [vmem:[%s2 + $0x3f4] sm:$0xf]
  %v319 = vld [vmem:[%s2 + $0x3f8] sm:$0xf]
  %v320 = vld [vmem:[%s2 + $0x3fc] sm:$0xf]
  %v321 = vld [vmem:[%s2 + $0x400] sm:$0xf]
  %v322 = vld [vmem:[%s2 + $0x404] sm:$0xf]
  %v323 = vld [vmem:[%s2 + $0x408] sm:$0xf]
  %v324 = vld [vmem:[%s2 + $0x40c] sm:$0xf]
  %v325 = vld [vmem:[%s2 + $0x410] sm:$0xf]
  %v326 = vld [vmem:[%s2 + $0x414] sm:$0xf]
  %v327 = vld [vmem:[%s2 + $0x418] sm:$0xf]
  %v328 = vld [vmem:[%s2 + $0x41c] sm:$0xf]
  %v329 = vld [vmem:[%s2 + $0x420] sm:$0xf]
  %v330 = vld [vmem:[%s2 + $0x424] sm:$0xf]
  %v331 = vld [vmem:[%s2 + $0x428] sm:$0xf]
  %v332 = vld [vmem:[%s2 + $0x42c] sm:$0xf]
  %v333 = vld [vmem:[%s2 + $0x430] sm:$0xf]
  %v334 = vld [vmem:[%s2 + $0x434] sm:$0xf]
  %v335 = vld [vmem:[%s2 + $0x438] sm:$0xf]
  %v336 = vld [vmem:[%s2 + $0x43c] sm:$0xf]
  %v337 = vld [vmem:[%s2 + $0x440] sm:$0xf]
  %v338 = vld [vmem:[%s2 + $0x444] sm:$0xf]
  %v339 = vld [vmem:[%s2 + $0x448] sm:$0xf]
  %v340 = vld [vmem:[%s2 + $0x44c] sm:$0xf]
  %v341 = vld [vmem:[%s2 + $0x450] sm:$0xf]
  %v342 = vld [vmem:[%s2 + $0x454] sm:$0xf]
  %v343 = vld [vmem:[%s2 + $0x458] sm:$0xf]
  %v344 = vld [vmem:[%s2 + $0x45c] sm:$0xf]
  %v345 = vld [vmem:[%s2 + $0x460] sm:$0xf]
  %v346 = vld [vmem:[%s2 + $0x464] sm:$0xf]
  %v347 = vld [vmem:[%s2 + $0x468] sm:$0xf]
  %v348 = vld [vmem:[%s2 + $0x46c] sm:$0xf]
  %v349 = vld [vmem:[%s2 + $0x470] sm:$0xf]
  %v350 = vld [vmem:[%s2 + $0x474] sm:$0xf]
  %v351 = vld [vmem:[%s2 + $0x478] sm:$0xf]
  %v352 = vld [vmem:[%s2 + $0x47c] sm:$0xf]
  %v353 = vld [vmem:[%s2 + $0x480] sm:$0xf]
  %v354 = vld [vmem:[%s2 + $0x484] sm:$0xf]
  %v355 = vld [vmem:[%s2 + $0x488] sm:$0xf]
  %v356 = vld [vmem:[%s2 + $0x48c] sm:$0xf]
  %v357 = vld [vmem:[%s2 + $0x490] sm:$0xf]
  %v358 = vld [vmem:[%s2 + $0x494] sm:$0xf]
  %v359 = vld [vmem:[%s2 + $0x498] sm:$0xf]
  %v360 = vld [vmem:[%s2 + $0x49c] sm:$0xf]
  %v361 = vld [vmem:[%s2 + $0x4a0] sm:$0xf]
  %v362 = vld [vmem:[%s2 + $0x4a4] sm:$0xf]
  %v363 = vld [vmem:[%s2 + $0x4a8] sm:$0xf]
  %v364 = vld [vmem:[%s2 + $0x4ac] sm:$0xf]
  %v365 = vld [vmem:[%s2 + $0x4b0] sm:$0xf]
  %v366 = vld [vmem:[%s2 + $0x4b4] sm:$0xf]
  %v367 = vld [vmem:[%s2 + $0x4b8] sm:$0xf]
  %v368 = vld [vmem:[%s2 + $0x4bc] sm:$0xf]
  %v369 = vld [vmem:[%s2 + $0x4c0] sm:$0xf]
  %v370 = vld [vmem:[%s2 + $0x4c4] sm:$0xf]
  %v371 = vld [vmem:[%s2 + $0x4c8] sm:$0xf]
  %v372 = vld [vmem:[%s2 + $0x4cc] sm:$0xf]
  %v373 = vld [vmem:[%s2 + $0x4d0] sm:$0xf]
  %v374 = vld [vmem:[%s2 + $0x4d4] sm:$0xf]
  %v375 = vld [vmem:[%s2 + $0x4d8] sm:$0xf]
  %v376 = vld [vmem:[%s2 + $0x4dc] sm:$0xf]
  %v377 = vld [vmem:[%s2 + $0x4e0] sm:$0xf]
  %v378 = vld [vmem:[%s2 + $0x4e4] sm:$0xf]
  %v379 = vld [vmem:[%s2 + $0x4e8] sm:$0xf]
  %v380 = vld [vmem:[%s2 + $0x4ec] sm:$0xf]
  %v381 = vld [vmem:[%s2 + $0x4f0] sm:$0xf]
  %v382 = vld [vmem:[%s2 + $0x4f4] sm:$0xf]
  %v383 = vld [vmem:[%s2 + $0x4f8] sm:$0xf]
  %v384 = vld [vmem:[%s2 + $0x4fc] sm:$0xf]
  %v385 = vld [vmem:[%s2 + $0x500] sm:$0xf]
  %v386 = vld [vmem:[%s2 + $0x504] sm:$0xf]
  %v387 = vld [vmem:[%s2 + $0x508] sm:$0xf]
  %v388 = vld [vmem:[%s2 + $0x50c] sm:$0xf]
  %v389 = vld [vmem:[%s2 + $0x510] sm:$0xf]
  %v390 = vld [vmem:[%s2 + $0x514] sm:$0xf]
  %v391 = vld [vmem:[%s2 + $0x518] sm:$0xf]
  %v392 = vld [vmem:[%s2 + $0x51c] sm:$0xf]
  %v393 = vld [vmem:[%s2 + $0x520] sm:$0xf]
  %v394 = vld [vmem:[%s2 + $0x524] sm:$0xf]
  %v395 = vld [vmem:[%s2 + $0x528] sm:$0xf]
  %v396 = vld [vmem:[%s2 + $0x52c] sm:$0xf]
  %v397 = vld [vmem:[%s2 + $0x530] sm:$0xf]
  %v398 = vld [vmem:[%s2 + $0x534] sm:$0xf]
  %v399 = vld [vmem:[%s2 + $0x538] sm:$0xf]
  %v400 = vld [vmem:[%s2 + $0x53c] sm:$0xf]
  %v401 = vld [vmem:[%s2 + $0x540] sm:$0xf]
  %v402 = vld [vmem:[%s2 + $0x544] sm:$0xf]
  %v403 = vld [vmem:[%s2 + $0x548] sm:$0xf]
  %v404 = vld [vmem:[%s2 + $0x54c] sm:$0xf]
  %v405 = vld [vmem:[%s2 + $0x550] sm:$0xf]
  %v406 = vld [vmem:[%s2 + $0x554] sm:$0xf]
  %v407 = vld [vmem:[%s2 + $0x558] sm:$0xf]
  %v408 = vld [vmem:[%s2 + $0x55c] sm:$0xf]
  %v409 = vld [vmem:[%s2 + $0x560] sm:$0xf]
  %v410 = vld [vmem:[%s2 + $0x564] sm:$0xf]
  %v411 = vld [vmem:[%s2 + $0x568] sm:$0xf]
  %v412 = vld [vmem:[%s2 + $0x56c] sm:$0xf]
  %v413 = vld [vmem:[%s2 + $0x570] sm:$0xf]
  %v414 = vld [vmem:[%s2 + $0x574] sm:$0xf]
  %v415 = vld [vmem:[%s2 + $0x578] sm:$0xf]
  %v416 = vld [vmem:[%s2 + $0x57c] sm:$0xf]
  %v417 = vld [vmem:[%s2 + $0x580] sm:$0xf]
  %v418 = vld [vmem:[%s2 + $0x584] sm:$0xf]
  %v419 = vld [vmem:[%s2 + $0x588] sm:$0xf]
  %v420 = vld [vmem:[%s2 + $0x58c] sm:$0xf]
  %v421 = vld [vmem:[%s2 + $0x590] sm:$0xf]
  %v422 = vld [vmem:[%s2 + $0x594] sm:$0xf]
  %v423 = vld [vmem:[%s2 + $0x598] sm:$0xf]
  %v424 = vld [vmem:[%s2 + $0x59c] sm:$0xf]
  %v425 = vld [vmem:[%s2 + $0x5a0] sm:$0xf]
  %v426 = vld [vmem:[%s2 + $0x5a4] sm:$0xf]
  %v427 = vld [vmem:[%s2 + $0x5a8] sm:$0xf]
  %v428 = vld [vmem:[%s2 + $0x5ac] sm:$0xf]
  %v429 = vld [vmem:[%s2 + $0x5b0] sm:$0xf]
  %v430 = vld [vmem:[%s2 + $0x5b4] sm:$0xf]
  %v431 = vld [vmem:[%s2 + $0x5b8] sm:$0xf]
  %v432 = vld [vmem:[%s2 + $0x5bc] sm:$0xf]
  %v433 = vld [vmem:[%s2 + $0x5c0] sm:$0xf]
  %v434 = vld [vmem:[%s2 + $0x5c4] sm:$0xf]
  %v435 = vld [vmem:[%s2 + $0x5c8] sm:$0xf]
  %v436 = vld [vmem:[%s2 + $0x5cc] sm:$0xf]
  %v437 = vld [vmem:[%s2 + $0x5d0] sm:$0xf]
  %v438 = vld [vmem:[%s2 + $0x5d4] sm:$0xf]
  %v439 = vld [vmem:[%s2 + $0x5d8] sm:$0xf]
  %v440 = vld [vmem:[%s2 + $0x5dc] sm:$0xf]
  %v441 = vld [vmem:[%s2 + $0x5e0] sm:$0xf]
  %v442 = vld [vmem:[%s2 + $0x5e4] sm:$0xf]
  %v443 = vld [vmem:[%s2 + $0x5e8] sm:$0xf]
  %v444 = vld [vmem:[%s2 + $0x5ec] sm:$0xf]
  %v445 = vld [vmem:[%s2 + $0x5f0] sm:$0xf]
  %v446 = vld [vmem:[%s2 + $0x5f4] sm:$0xf]
  %v447 = vld [vmem:[%s2 + $0x5f8] sm:$0xf]
  %v448 = vld [vmem:[%s2 + $0x5fc] sm:$0xf]
  %v449 = vld [vmem:[%s2 + $0x600] sm:$0xf]
  %v450 = vld [vmem:[%s2 + $0x604] sm:$0xf]
  %v451 = vld [vmem:[%s2 + $0x608] sm:$0xf]
  %v452 = vld [vmem:[%s2 + $0x60c] sm:$0xf]
  %v453 = vld [vmem:[%s2 + $0x610] sm:$0xf]
  %v454 = vld [vmem:[%s2 + $0x614] sm:$0xf]
  %v455 = vld [vmem:[%s2 + $0x618] sm:$0xf]
  %v456 = vld [vmem:[%s2 + $0x61c] sm:$0xf]
  %v457 = vld [vmem:[%s2 + $0x620] sm:$0xf]
  %v458 = vld [vmem:[%s2 + $0x624] sm:$0xf]
  %v459 = vld [vmem:[%s2 + $0x628] sm:$0xf]
  %v460 = vld [vmem:[%s2 + $0x62c] sm:$0xf]
  %v461 = vld [vmem:[%s2 + $0x630] sm:$0xf]
  %v462 = vld [vmem:[%s2 + $0x634] sm:$0xf]
  %v463 = vld [vmem:[%s2 + $0x638] sm:$0xf]
  %v464 = vld [vmem:[%s2 + $0x63c] sm:$0xf]
  %v465 = vld [vmem:[%s2 + $0x640] sm:$0xf]
  %v466 = vld [vmem:[%s2 + $0x644] sm:$0xf]
  %v467 = vld [vmem:[%s2 + $0x648] sm:$0xf]
  %v468 = vld [vmem:[%s2 + $0x64c] sm:$0xf]
  %v469 = vld [vmem:[%s2 + $0x650] sm:$0xf]
  %v470 = vld [vmem:[%s2 + $0x654] sm:$0xf]
  %v471 = vld [vmem:[%s2 + $0x658] sm:$0xf]
  %v472 = vld [vmem:[%s2 + $0x65c] sm:$0xf]
  %v473 = vld [vmem:[%s2 + $0x660] sm:$0xf]
  %v474 = vld [vmem:[%s2 + $0x664] sm:$0xf]
  %v475 = vld [vmem:[%s2 + $0x668] sm:$0xf]
  %v476 = vld [vmem:[%s2 + $0x66c] sm:$0xf]
  %v477 = vld [vmem:[%s2 + $0x670] sm:$0xf]
  %v478 = vld [vmem:[%s2 + $0x674] sm:$0xf]
  %v479 = vld [vmem:[%s2 + $0x678] sm:$0xf]
  %v480 = vld [vmem:[%s2 + $0x67c] sm:$0xf]
  %v481 = vld [vmem:[%s2 + $0x680] sm:$0xf]
  %v482 = vld [vmem:[%s2 + $0x684] sm:$0xf]
  %v483 = vld [vmem:[%s2 + $0x688] sm:$0xf]
  %v484 = vld [vmem:[%s2 + $0x68c] sm:$0xf]
  %v485 = vld [vmem:[%s2 + $0x690] sm:$0xf]
  %v486 = vld [vmem:[%s2 + $0x694] sm:$0xf]
  %v487 = vld [vmem:[%s2 + $0x698] sm:$0xf]
  %v488 = vld [vmem:[%s2 + $0x69c] sm:$0xf]
  %v489 = vld [vmem:[%s2 + $0x6a0] sm:$0xf]
  %v490 = vld [vmem:[%s2 + $0x6a4] sm:$0xf]
  %v491 = vld [vmem:[%s2 + $0x6a8] sm:$0xf]
  %v492 = vld [vmem:[%s2 + $0x6ac] sm:$0xf]
  %v493 = vld [vmem:[%s2 + $0x6b0] sm:$0xf]
  %v494 = vld [vmem:[%s2 + $0x6b4] sm:$0xf]
  %v495 = vld [vmem:[%s2 + $0x6b8] sm:$0xf]
  %v496 = vld [vmem:[%s2 + $0x6bc] sm:$0xf]
  %v497 = vld [vmem:[%s2 + $0x6c0] sm:$0xf]
  %v498 = vld [vmem:[%s2 + $0x6c4] sm:$0xf]
  %v499 = vld [vmem:[%s2 + $0x6c8] sm:$0xf]
  %v500 = vld [vmem:[%s2 + $0x6cc] sm:$0xf]
  %v501 = vld [vmem:[%s2 + $0x6d0] sm:$0xf]
  %v502 = vld [vmem:[%s2 + $0x6d4] sm:$0xf]
  %v503 = vld [vmem:[%s2 + $0x6d8] sm:$0xf]
  %v504 = vld [vmem:[%s2 + $0x6dc] sm:$0xf]
  %v505 = vld [vmem:[%s2 + $0x6e0] sm:$0xf]
  %v506 = vld [vmem:[%s2 + $0x6e4] sm:$0xf]
  %v507 = vld [vmem:[%s2 + $0x6e8] sm:$0xf]
  %v508 = vld [vmem:[%s2 + $0x6ec] sm:$0xf]
  %v509 = vld [vmem:[%s2 + $0x6f0] sm:$0xf]
  %v510 = vld [vmem:[%s2 + $0x6f4] sm:$0xf]
  %v511 = vld [vmem:[%s2 + $0x6f8] sm:$0xf]
  %v512 = vld [vmem:[%s2 + $0x6fc] sm:$0xf]
  %v513 = vld [vmem:[%s2 + $0x700] sm:$0xf]
  %v514 = vld [vmem:[%s2 + $0x704] sm:$0xf]
  %v515 = vld [vmem:[%s2 + $0x708] sm:$0xf]
  %v516 = vld [vmem:[%s2 + $0x70c] sm:$0xf]
  %v517 = vld [vmem:[%s2 + $0x710] sm:$0xf]
  %v518 = vld [vmem:[%s2 + $0x714] sm:$0xf]
  %v519 = vld [vmem:[%s2 + $0x718] sm:$0xf]
  %v520 = vld [vmem:[%s2 + $0x71c] sm:$0xf]
  %v521 = vld [vmem:[%s2 + $0x720] sm:$0xf]
  %v522 = vld [vmem:[%s2 + $0x724] sm:$0xf]
  %v523 = vld [vmem:[%s2 + $0x728] sm:$0xf]
  %v524 = vld [vmem:[%s2 + $0x72c] sm:$0xf]
  %v525 = vld [vmem:[%s2 + $0x730] sm:$0xf]
  %v526 = vld [vmem:[%s2 + $0x734] sm:$0xf]
  %v527 = vld [vmem:[%s2 + $0x738] sm:$0xf]
  %v528 = vld [vmem:[%s2 + $0x73c] sm:$0xf]
  %v529 = vld [vmem:[%s2 + $0x740] sm:$0xf]
  %v530 = vld [vmem:[%s2 + $0x744] sm:$0xf]
  %v531 = vld [vmem:[%s2 + $0x748] sm:$0xf]
  %v532 = vld [vmem:[%s2 + $0x74c] sm:$0xf]
  %v533 = vld [vmem:[%s2 + $0x750] sm:$0xf]
  %v534 = vld [vmem:[%s2 + $0x754] sm:$0xf]
  %v535 = vld [vmem:[%s2 + $0x758] sm:$0xf]
  %v536 = vld [vmem:[%s2 + $0x75c] sm:$0xf]
  %v537 = vld [vmem:[%s2 + $0x760] sm:$0xf]
  %v538 = vld [vmem:[%s2 + $0x764] sm:$0xf]
  %v539 = vld [vmem:[%s2 + $0x768] sm:$0xf]
  %v540 = vld [vmem:[%s2 + $0x76c] sm:$0xf]
  %v541 = vld [vmem:[%s2 + $0x770] sm:$0xf]
  %v542 = vld [vmem:[%s2 + $0x774] sm:$0xf]
  %v543 = vld [vmem:[%s2 + $0x778] sm:$0xf]
  %v544 = vld [vmem:[%s2 + $0x77c] sm:$0xf]
  %v545 = vld [vmem:[%s2 + $0x780] sm:$0xf]
  %v546 = vld [vmem:[%s2 + $0x784] sm:$0xf]
  %v547 = vld [vmem:[%s2 + $0x788] sm:$0xf]
  %v548 = vld [vmem:[%s2 + $0x78c] sm:$0xf]
  %v549 = vld [vmem:[%s2 + $0x790] sm:$0xf]
  %v550 = vld [vmem:[%s2 + $0x794] sm:$0xf]
  %v551 = vld [vmem:[%s2 + $0x798] sm:$0xf]
  %v552 = vld [vmem:[%s2 + $0x79c] sm:$0xf]
  %v553 = vld [vmem:[%s2 + $0x7a0] sm:$0xf]
  %v554 = vld [vmem:[%s2 + $0x7a4] sm:$0xf]
  %v555 = vld [vmem:[%s2 + $0x7a8] sm:$0xf]
  %v556 = vld [vmem:[%s2 + $0x7ac] sm:$0xf]
  %v557 = vld [vmem:[%s2 + $0x7b0] sm:$0xf]
  %v558 = vld [vmem:[%s2 + $0x7b4] sm:$0xf]
  %v559 = vld [vmem:[%s2 + $0x7b8] sm:$0xf]
  %v560 = vld [vmem:[%s2 + $0x7bc] sm:$0xf]
  %v561 = vld [vmem:[%s2 + $0x7c0] sm:$0xf]
  %v562 = vld [vmem:[%s2 + $0x7c4] sm:$0xf]
  %v563 = vld [vmem:[%s2 + $0x7c8] sm:$0xf]
  %v564 = vld [vmem:[%s2 + $0x7cc] sm:$0xf]
  %v565 = vld [vmem:[%s2 + $0x7d0] sm:$0xf]
  %v566 = vld [vmem:[%s2 + $0x7d4] sm:$0xf]
  %v567 = vld [vmem:[%s2 + $0x7d8] sm:$0xf]
  %v568 = vld [vmem:[%s2 + $0x7dc] sm:$0xf]
  %v569 = vld [vmem:[%s2 + $0x7e0] sm:$0xf]
  %v570 = vld [vmem:[%s2 + $0x7e4] sm:$0xf]
  %v571 = vld [vmem:[%s2 + $0x7e8] sm:$0xf]
  %v572 = vld [vmem:[%s2 + $0x7ec] sm:$0xf]
  %v573 = vld [vmem:[%s2 + $0x7f0] sm:$0xf]
  %v574 = vld [vmem:[%s2 + $0x7f4] sm:$0xf]
  %v575 = vld [vmem:[%s2 + $0x7f8] sm:$0xf]
  %v576 = vld [vmem:[%s2 + $0x7fc] sm:$0xf]
  %v577 = vld [vmem:[%s2 + $0x800] sm:$0xf]
  %v578 = vld [vmem:[%s2 + $0x804] sm:$0xf]
  %v579 = vld [vmem:[%s2 + $0x808] sm:$0xf]
  %v580 = vld [vmem:[%s2 + $0x80c] sm:$0xf]
  %v581 = vld [vmem:[%s2 + $0x810] sm:$0xf]
  %v582 = vld [vmem:[%s2 + $0x814] sm:$0xf]
  %v583 = vld [vmem:[%s2 + $0x818] sm:$0xf]
  %v584 = vld [vmem:[%s2 + $0x81c] sm:$0xf]
  %v585 = vld [vmem:[%s2 + $0x820] sm:$0xf]
  %v586 = vld [vmem:[%s2 + $0x824] sm:$0xf]
  %v587 = vld [vmem:[%s2 + $0x828] sm:$0xf]
  %v588 = vld [vmem:[%s2 + $0x82c] sm:$0xf]
  %v589 = vld [vmem:[%s2 + $0x830] sm:$0xf]
  %v590 = vld [vmem:[%s2 + $0x834] sm:$0xf]
  %v591 = vld [vmem:[%s2 + $0x838] sm:$0xf]
  %v592 = vld [vmem:[%s2 + $0x83c] sm:$0xf]
  %v593 = vld [vmem:[%s2 + $0x840] sm:$0xf]
  %v594 = vld [vmem:[%s2 + $0x844] sm:$0xf]
  %v595 = vld [vmem:[%s2 + $0x848] sm:$0xf]
  %v596 = vld [vmem:[%s2 + $0x84c] sm:$0xf]
  %v597 = vld [vmem:[%s2 + $0x850] sm:$0xf]
  %v598 = vld [vmem:[%s2 + $0x854] sm:$0xf]
  %v599 = vld [vmem:[%s2 + $0x858] sm:$0xf]
  %v600 = vld [vmem:[%s2 + $0x85c] sm:$0xf]
  %v601 = vld [vmem:[%s2 + $0x860] sm:$0xf]
  %v602 = vld [vmem:[%s2 + $0x864] sm:$0xf]
  %v603 = vld [vmem:[%s2 + $0x868] sm:$0xf]
  %v604 = vld [vmem:[%s2 + $0x86c] sm:$0xf]
  %v605 = vld [vmem:[%s2 + $0x870] sm:$0xf]
  %v606 = vld [vmem:[%s2 + $0x874] sm:$0xf]
  %v607 = vld [vmem:[%s2 + $0x878] sm:$0xf]
  %v608 = vld [vmem:[%s2 + $0x87c] sm:$0xf]
  %v609 = vld [vmem:[%s2 + $0x880] sm:$0xf]
  %v610 = vld [vmem:[%s2 + $0x884] sm:$0xf]
  %v611 = vld [vmem:[%s2 + $0x888] sm:$0xf]
  %v612 = vld [vmem:[%s2 + $0x88c] sm:$0xf]
  %v613 = vld [vmem:[%s2 + $0x890] sm:$0xf]
  %v614 = vld [vmem:[%s2 + $0x894] sm:$0xf]
  %v615 = vld [vmem:[%s2 + $0x898] sm:$0xf]
  %v616 = vld [vmem:[%s2 + $0x89c] sm:$0xf]
  %v617 = vld [vmem:[%s2 + $0x8a0] sm:$0xf]
  %v618 = vld [vmem:[%s2 + $0x8a4] sm:$0xf]
  %v619 = vld [vmem:[%s2 + $0x8a8] sm:$0xf]
  %v620 = vld [vmem:[%s2 + $0x8ac] sm:$0xf]
  %v621 = vld [vmem:[%s2 + $0x8b0] sm:$0xf]
  %v622 = vld [vmem:[%s2 + $0x8b4] sm:$0xf]
  %v623 = vld [vmem:[%s2 + $0x8b8] sm:$0xf]
  %v624 = vld [vmem:[%s2 + $0x8bc] sm:$0xf]
  %v625 = vld [vmem:[%s2 + $0x8c0] sm:$0xf]
  %v626 = vld [vmem:[%s2 + $0x8c4] sm:$0xf]
  %v627 = vld [vmem:[%s2 + $0x8c8] sm:$0xf]
  %v628 = vld [vmem:[%s2 + $0x8cc] sm:$0xf]
  %v629 = vld [vmem:[%s2 + $0x8d0] sm:$0xf]
  %v630 = vld [vmem:[%s2 + $0x8d4] sm:$0xf]
  %v631 = vld [vmem:[%s2 + $0x8d8] sm:$0xf]
  %v632 = vld [vmem:[%s2 + $0x8dc] sm:$0xf]
  %v633 = vld [vmem:[%s2 + $0x8e0] sm:$0xf]
  %v634 = vld [vmem:[%s2 + $0x8e4] sm:$0xf]
  %v635 = vld [vmem:[%s2 + $0x8e8] sm:$0xf]
  %v636 = vld [vmem:[%s2 + $0x8ec] sm:$0xf]
  %v637 = vld [vmem:[%s2 + $0x8f0] sm:$0xf]
  %v638 = vld [vmem:[%s2 + $0x8f4] sm:$0xf]
  %v639 = vld [vmem:[%s2 + $0x8f8] sm:$0xf]
  %v640 = vld [vmem:[%s2 + $0x8fc] sm:$0xf]
  %v641 = vld [vmem:[%s2 + $0x900] sm:$0xf]
  %v642 = vld [vmem:[%s2 + $0x904] sm:$0xf]
  %v643 = vld [vmem:[%s2 + $0x908] sm:$0xf]
  %v644 = vld [vmem:[%s2 + $0x90c] sm:$0xf]
  %v645 = vld [vmem:[%s2 + $0x910] sm:$0xf]
  %v646 = vld [vmem:[%s2 + $0x914] sm:$0xf]
  %v647 = vld [vmem:[%s2 + $0x918] sm:$0xf]
  %v648 = vld [vmem:[%s2 + $0x91c] sm:$0xf]
  %v649 = vld [vmem:[%s2 + $0x920] sm:$0xf]
  %v650 = vld [vmem:[%s2 + $0x924] sm:$0xf]
  %v651 = vld [vmem:[%s2 + $0x928] sm:$0xf]
  %v652 = vld [vmem:[%s2 + $0x92c] sm:$0xf]
  %v653 = vld [vmem:[%s2 + $0x930] sm:$0xf]
  %v654 = vld [vmem:[%s2 + $0x934] sm:$0xf]
  %v655 = vld [vmem:[%s2 + $0x938] sm:$0xf]
  %v656 = vld [vmem:[%s2 + $0x93c] sm:$0xf]
  %v657 = vld [vmem:[%s2 + $0x940] sm:$0xf]
  %v658 = vld [vmem:[%s2 + $0x944] sm:$0xf]
  %v659 = vld [vmem:[%s2 + $0x948] sm:$0xf]
  %v660 = vld [vmem:[%s2 + $0x94c] sm:$0xf]
  %v661 = vld [vmem:[%s2 + $0x950] sm:$0xf]
  %v662 = vld [vmem:[%s2 + $0x954] sm:$0xf]
  %v663 = vld [vmem:[%s2 + $0x958] sm:$0xf]
  %v664 = vld [vmem:[%s2 + $0x95c] sm:$0xf]
  %v665 = vld [vmem:[%s2 + $0x960] sm:$0xf]
  %v666 = vld [vmem:[%s2 + $0x964] sm:$0xf]
  %v667 = vld [vmem:[%s2 + $0x968] sm:$0xf]
  %v668 = vld [vmem:[%s2 + $0x96c] sm:$0xf]
  %v669 = vld [vmem:[%s2 + $0x970] sm:$0xf]
  %v670 = vld [vmem:[%s2 + $0x974] sm:$0xf]
  %v671 = vld [vmem:[%s2 + $0x978] sm:$0xf]
  %v672 = vld [vmem:[%s2 + $0x97c] sm:$0xf]
  %v673 = vld [vmem:[%s2 + $0x980] sm:$0xf]
  %v674 = vld [vmem:[%s2 + $0x984] sm:$0xf]
  %v675 = vld [vmem:[%s2 + $0x988] sm:$0xf]
  %v676 = vld [vmem:[%s2 + $0x98c] sm:$0xf]
  %v677 = vld [vmem:[%s2 + $0x990] sm:$0xf]
  %v678 = vld [vmem:[%s2 + $0x994] sm:$0xf]
  %v679 = vld [vmem:[%s2 + $0x998] sm:$0xf]
  %v680 = vld [vmem:[%s2 + $0x99c] sm:$0xf]
  %v681 = vld [vmem:[%s2 + $0x9a0] sm:$0xf]
  %v682 = vld [vmem:[%s2 + $0x9a4] sm:$0xf]
  %v683 = vld [vmem:[%s2 + $0x9a8] sm:$0xf]
  %v684 = vld [vmem:[%s2 + $0x9ac] sm:$0xf]
  %v685 = vld [vmem:[%s2 + $0x9b0] sm:$0xf]
  %v686 = vld [vmem:[%s2 + $0x9b4] sm:$0xf]
  %v687 = vld [vmem:[%s2 + $0x9b8] sm:$0xf]
  %v688 = vld [vmem:[%s2 + $0x9bc] sm:$0xf]
  %v689 = vld [vmem:[%s2 + $0x9c0] sm:$0xf]
  %v690 = vld [vmem:[%s2 + $0x9c4] sm:$0xf]
  %v691 = vld [vmem:[%s2 + $0x9c8] sm:$0xf]
  %v692 = vld [vmem:[%s2 + $0x9cc] sm:$0xf]
  %v693 = vld [vmem:[%s2 + $0x9d0] sm:$0xf]
  %v694 = vld [vmem:[%s2 + $0x9d4] sm:$0xf]
  %v695 = vld [vmem:[%s2 + $0x9d8] sm:$0xf]
  %v696 = vld [vmem:[%s2 + $0x9dc] sm:$0xf]
  %v697 = vld [vmem:[%s2 + $0x9e0] sm:$0xf]
  %v698 = vld [vmem:[%s2 + $0x9e4] sm:$0xf]
  %v699 = vld [vmem:[%s2 + $0x9e8] sm:$0xf]
  %v700 = vld [vmem:[%s2 + $0x9ec] sm:$0xf]
  %v701 = vld [vmem:[%s2 + $0x9f0] sm:$0xf]
  %v702 = vld [vmem:[%s2 + $0x9f4] sm:$0xf]
  %v703 = vld [vmem:[%s2 + $0x9f8] sm:$0xf]
  %v704 = vld [vmem:[%s2 + $0x9fc] sm:$0xf]
  %v705 = vld [vmem:[%s2 + $0xa00] sm:$0xf]
  %v706 = vld [vmem:[%s2 + $0xa04] sm:$0xf]
  %v707 = vld [vmem:[%s2 + $0xa08] sm:$0xf]
  %v708 = vld [vmem:[%s2 + $0xa0c] sm:$0xf]
  %v709 = vld [vmem:[%s2 + $0xa10] sm:$0xf]
  %v710 = vld [vmem:[%s2 + $0xa14] sm:$0xf]
  %v711 = vld [vmem:[%s2 + $0xa18] sm:$0xf]
  %v712 = vld [vmem:[%s2 + $0xa1c] sm:$0xf]
  %v713 = vld [vmem:[%s2 + $0xa20] sm:$0xf]
  %v714 = vld [vmem:[%s2 + $0xa24] sm:$0xf]
  %v715 = vld [vmem:[%s2 + $0xa28] sm:$0xf]
  %v716 = vld [vmem:[%s2 + $0xa2c] sm:$0xf]
  %v717 = vld [vmem:[%s2 + $0xa30] sm:$0xf]
  %v718 = vld [vmem:[%s2 + $0xa34] sm:$0xf]
  %v719 = vld [vmem:[%s2 + $0xa38] sm:$0xf]
  %v720 = vld [vmem:[%s2 + $0xa3c] sm:$0xf]
  %v721 = vld [vmem:[%s2 + $0xa40] sm:$0xf]
  %v722 = vld [vmem:[%s2 + $0xa44] sm:$0xf]
  %v723 = vld [vmem:[%s2 + $0xa48] sm:$0xf]
  %v724 = vld [vmem:[%s2 + $0xa4c] sm:$0xf]
  %v725 = vld [vmem:[%s2 + $0xa50] sm:$0xf]
  %v726 = vld [vmem:[%s2 + $0xa54] sm:$0xf]
  %v727 = vld [vmem:[%s2 + $0xa58] sm:$0xf]
  %v728 = vld [vmem:[%s2 + $0xa5c] sm:$0xf]
  %v729 = vld [vmem:[%s2 + $0xa60] sm:$0xf]
  %v730 = vld [vmem:[%s2 + $0xa64] sm:$0xf]
  %v731 = vld [vmem:[%s2 + $0xa68] sm:$0xf]
  %v732 = vld [vmem:[%s2 + $0xa6c] sm:$0xf]
  %v733 = vld [vmem:[%s2 + $0xa70] sm:$0xf]
  %v734 = vld [vmem:[%s2 + $0xa74] sm:$0xf]
  %v735 = vld [vmem:[%s2 + $0xa78] sm:$0xf]
  %v736 = vld [vmem:[%s2 + $0xa7c] sm:$0xf]
  %v737 = vld [vmem:[%s2 + $0xa80] sm:$0xf]
  %v738 = vld [vmem:[%s2 + $0xa84] sm:$0xf]
  %v739 = vld [vmem:[%s2 + $0xa88] sm:$0xf]
  %v740 = vld [vmem:[%s2 + $0xa8c] sm:$0xf]
  %v741 = vld [vmem:[%s2 + $0xa90] sm:$0xf]
  %v742 = vld [vmem:[%s2 + $0xa94] sm:$0xf]
  %v743 = vld [vmem:[%s2 + $0xa98] sm:$0xf]
  %v744 = vld [vmem:[%s2 + $0xa9c] sm:$0xf]
  %v745 = vld [vmem:[%s2 + $0xaa0] sm:$0xf]
  %v746 = vld [vmem:[%s2 + $0xaa4] sm:$0xf]
  %v747 = vld [vmem:[%s2 + $0xaa8] sm:$0xf]
  %v748 = vld [vmem:[%s2 + $0xaac] sm:$0xf]
  %v749 = vld [vmem:[%s2 + $0xab0] sm:$0xf]
  %v750 = vld [vmem:[%s2 + $0xab4] sm:$0xf]
  %v751 = vld [vmem:[%s2 + $0xab8] sm:$0xf]
  %v752 = vld [vmem:[%s2 + $0xabc] sm:$0xf]
  %v753 = vld [vmem:[%s2 + $0xac0] sm:$0xf]
  %v754 = vld [vmem:[%s2 + $0xac4] sm:$0xf]
  %v755 = vld [vmem:[%s2 + $0xac8] sm:$0xf]
  %v756 = vld [vmem:[%s2 + $0xacc] sm:$0xf]
  %v757 = vld [vmem:[%s2 + $0xad0] sm:$0xf]
  %v758 = vld [vmem:[%s2 + $0xad4] sm:$0xf]
  %v759 = vld [vmem:[%s2 + $0xad8] sm:$0xf]
  %v760 = vld [vmem:[%s2 + $0xadc] sm:$0xf]
  %v761 = vld [vmem:[%s2 + $0xae0] sm:$0xf]
  %v762 = vld [vmem:[%s2 + $0xae4] sm:$0xf]
  %v763 = vld [vmem:[%s2 + $0xae8] sm:$0xf]
  %v764 = vld [vmem:[%s2 + $0xaec] sm:$0xf]
  %v765 = vld [vmem:[%s2 + $0xaf0] sm:$0xf]
  %v766 = vld [vmem:[%s2 + $0xaf4] sm:$0xf]
  %v767 = vld [vmem:[%s2 + $0xaf8] sm:$0xf]
  %v768 = vld [vmem:[%s2 + $0xafc] sm:$0xf]
  %v769 = vld [vmem:[%s2 + $0xb00] sm:$0xf]
  %v770 = vld [vmem:[%s2 + $0xb04] sm:$0xf]
  %v771 = vld [vmem:[%s2 + $0xb08] sm:$0xf]
  %v772 = vld [vmem:[%s2 + $0xb0c] sm:$0xf]
  %v773 = vld [vmem:[%s2 + $0xb10] sm:$0xf]
  %v774 = vld [vmem:[%s2 + $0xb14] sm:$0xf]
  %v775 = vld [vmem:[%s2 + $0xb18] sm:$0xf]
  %v776 = vld [vmem:[%s2 + $0xb1c] sm:$0xf]
  %v777 = vld [vmem:[%s2 + $0xb20] sm:$0xf]
  %v778 = vld [vmem:[%s2 + $0xb24] sm:$0xf]
  %v779 = vld [vmem:[%s2 + $0xb28] sm:$0xf]
  %v780 = vld [vmem:[%s2 + $0xb2c] sm:$0xf]
  %v781 = vld [vmem:[%s2 + $0xb30] sm:$0xf]
  %v782 = vld [vmem:[%s2 + $0xb34] sm:$0xf]
  %v783 = vld [vmem:[%s2 + $0xb38] sm:$0xf]
  %v784 = vld [vmem:[%s2 + $0xb3c] sm:$0xf]
  %v785 = vld [vmem:[%s2 + $0xb40] sm:$0xf]
  %v786 = vld [vmem:[%s2 + $0xb44] sm:$0xf]
  %v787 = vld [vmem:[%s2 + $0xb48] sm:$0xf]
  %v788 = vld [vmem:[%s2 + $0xb4c] sm:$0xf]
  %v789 = vld [vmem:[%s2 + $0xb50] sm:$0xf]
  %v790 = vld [vmem:[%s2 + $0xb54] sm:$0xf]
  %v791 = vld [vmem:[%s2 + $0xb58] sm:$0xf]
  %v792 = vld [vmem:[%s2 + $0xb5c] sm:$0xf]
  %v793 = vld [vmem:[%s2 + $0xb60] sm:$0xf]
  %v794 = vld [vmem:[%s2 + $0xb64] sm:$0xf]
  %v795 = vld [vmem:[%s2 + $0xb68] sm:$0xf]
  %v796 = vld [vmem:[%s2 + $0xb6c] sm:$0xf]
  %v797 = vld [vmem:[%s2 + $0xb70] sm:$0xf]
  %v798 = vld [vmem:[%s2 + $0xb74] sm:$0xf]
  %v799 = vld [vmem:[%s2 + $0xb78] sm:$0xf]
  %v800 = vld [vmem:[%s2 + $0xb7c] sm:$0xf]
  %v801 = vld [vmem:[%s2 + $0xb80] sm:$0xf]
  %v802 = vld [vmem:[%s2 + $0xb84] sm:$0xf]
  %v803 = vld [vmem:[%s2 + $0xb88] sm:$0xf]
  %v804 = vld [vmem:[%s2 + $0xb8c] sm:$0xf]
  %v805 = vld [vmem:[%s2 + $0xb90] sm:$0xf]
  %v806 = vld [vmem:[%s2 + $0xb94] sm:$0xf]
  %v807 = vld [vmem:[%s2 + $0xb98] sm:$0xf]
  %v808 = vld [vmem:[%s2 + $0xb9c] sm:$0xf]
  %v809 = vld [vmem:[%s2 + $0xba0] sm:$0xf]
  %v810 = vld [vmem:[%s2 + $0xba4] sm:$0xf]
  %v811 = vld [vmem:[%s2 + $0xba8] sm:$0xf]
  %v812 = vld [vmem:[%s2 + $0xbac] sm:$0xf]
  %v813 = vld [vmem:[%s2 + $0xbb0] sm:$0xf]
  %v814 = vld [vmem:[%s2 + $0xbb4] sm:$0xf]
  %v815 = vld [vmem:[%s2 + $0xbb8] sm:$0xf]
  %v816 = vld [vmem:[%s2 + $0xbbc] sm:$0xf]
  %v817 = vld [vmem:[%s2 + $0xbc0] sm:$0xf]
  %v818 = vld [vmem:[%s2 + $0xbc4] sm:$0xf]
  %v819 = vld [vmem:[%s2 + $0xbc8] sm:$0xf]
  %v820 = vld [vmem:[%s2 + $0xbcc] sm:$0xf]
  %v821 = vld [vmem:[%s2 + $0xbd0] sm:$0xf]
  %v822 = vld [vmem:[%s2 + $0xbd4] sm:$0xf]
  %v823 = vld [vmem:[%s2 + $0xbd8] sm:$0xf]
  %v824 = vld [vmem:[%s2 + $0xbdc] sm:$0xf]
  %v825 = vld [vmem:[%s2 + $0xbe0] sm:$0xf]
  %v826 = vld [vmem:[%s2 + $0xbe4] sm:$0xf]
  %v827 = vld [vmem:[%s2 + $0xbe8] sm:$0xf]
  %v828 = vld [vmem:[%s2 + $0xbec] sm:$0xf]
  %v829 = vld [vmem:[%s2 + $0xbf0] sm:$0xf]
  %v830 = vld [vmem:[%s2 + $0xbf4] sm:$0xf]
  %v831 = vld [vmem:[%s2 + $0xbf8] sm:$0xf]
  %v832 = vld [vmem:[%s2 + $0xbfc] sm:$0xf]
  %v833 = vld [vmem:[%s2 + $0xc00] sm:$0xf]
  %v834 = vld [vmem:[%s2 + $0xc04] sm:$0xf]
  %v835 = vld [vmem:[%s2 + $0xc08] sm:$0xf]
  %v836 = vld [vmem:[%s2 + $0xc0c] sm:$0xf]
  %v837 = vld [vmem:[%s2 + $0xc10] sm:$0xf]
  %v838 = vld [vmem:[%s2 + $0xc14] sm:$0xf]
  %v839 = vld [vmem:[%s2 + $0xc18] sm:$0xf]
  %v840 = vld [vmem:[%s2 + $0xc1c] sm:$0xf]
  %v841 = vld [vmem:[%s2 + $0xc20] sm:$0xf]
  %v842 = vld [vmem:[%s2 + $0xc24] sm:$0xf]
  %v843 = vld [vmem:[%s2 + $0xc28] sm:$0xf]
  %v844 = vld [vmem:[%s2 + $0xc2c] sm:$0xf]
  %v845 = vld [vmem:[%s2 + $0xc30] sm:$0xf]
  %v846 = vld [vmem:[%s2 + $0xc34] sm:$0xf]
  %v847 = vld [vmem:[%s2 + $0xc38] sm:$0xf]
  %v848 = vld [vmem:[%s2 + $0xc3c] sm:$0xf]
  %v849 = vld [vmem:[%s2 + $0xc40] sm:$0xf]
  %v850 = vld [vmem:[%s2 + $0xc44] sm:$0xf]
  %v851 = vld [vmem:[%s2 + $0xc48] sm:$0xf]
  %v852 = vld [vmem:[%s2 + $0xc4c] sm:$0xf]
  %v853 = vld [vmem:[%s2 + $0xc50] sm:$0xf]
  %v854 = vld [vmem:[%s2 + $0xc54] sm:$0xf]
  %v855 = vld [vmem:[%s2 + $0xc58] sm:$0xf]
  %v856 = vld [vmem:[%s2 + $0xc5c] sm:$0xf]
  %v857 = vld [vmem:[%s2 + $0xc60] sm:$0xf]
  %v858 = vld [vmem:[%s2 + $0xc64] sm:$0xf]
  %v859 = vld [vmem:[%s2 + $0xc68] sm:$0xf]
  %v860 = vld [vmem:[%s2 + $0xc6c] sm:$0xf]
  %v861 = vld [vmem:[%s2 + $0xc70] sm:$0xf]
  %v862 = vld [vmem:[%s2 + $0xc74] sm:$0xf]
  %v863 = vld [vmem:[%s2 + $0xc78] sm:$0xf]
  %v864 = vld [vmem:[%s2 + $0xc7c] sm:$0xf]
  %v865 = vld [vmem:[%s2 + $0xc80] sm:$0xf]
  %v866 = vld [vmem:[%s2 + $0xc84] sm:$0xf]
  %v867 = vld [vmem:[%s2 + $0xc88] sm:$0xf]
  %v868 = vld [vmem:[%s2 + $0xc8c] sm:$0xf]
  %v869 = vld [vmem:[%s2 + $0xc90] sm:$0xf]
  %v870 = vld [vmem:[%s2 + $0xc94] sm:$0xf]
  %v871 = vld [vmem:[%s2 + $0xc98] sm:$0xf]
  %v872 = vld [vmem:[%s2 + $0xc9c] sm:$0xf]
  %v873 = vld [vmem:[%s2 + $0xca0] sm:$0xf]
  %v874 = vld [vmem:[%s2 + $0xca4] sm:$0xf]
  %v875 = vld [vmem:[%s2 + $0xca8] sm:$0xf]
  %v876 = vld [vmem:[%s2 + $0xcac] sm:$0xf]
  %v877 = vld [vmem:[%s2 + $0xcb0] sm:$0xf]
  %v878 = vld [vmem:[%s2 + $0xcb4] sm:$0xf]
  %v879 = vld [vmem:[%s2 + $0xcb8] sm:$0xf]
  %v880 = vld [vmem:[%s2 + $0xcbc] sm:$0xf]
  %v881 = vld [vmem:[%s2 + $0xcc0] sm:$0xf]
  %v882 = vld [vmem:[%s2 + $0xcc4] sm:$0xf]
  %v883 = vld [vmem:[%s2 + $0xcc8] sm:$0xf]
  %v884 = vld [vmem:[%s2 + $0xccc] sm:$0xf]
  %v885 = vld [vmem:[%s2 + $0xcd0] sm:$0xf]
  %v886 = vld [vmem:[%s2 + $0xcd4] sm:$0xf]
  %v887 = vld [vmem:[%s2 + $0xcd8] sm:$0xf]
  %v888 = vld [vmem:[%s2 + $0xcdc] sm:$0xf]
  %v889 = vld [vmem:[%s2 + $0xce0] sm:$0xf]
  %v890 = vld [vmem:[%s2 + $0xce4] sm:$0xf]
  %v891 = vld [vmem:[%s2 + $0xce8] sm:$0xf]
  %v892 = vld [vmem:[%s2 + $0xcec] sm:$0xf]
  %v893 = vld [vmem:[%s2 + $0xcf0] sm:$0xf]
  %v894 = vld [vmem:[%s2 + $0xcf4] sm:$0xf]
  %v895 = vld [vmem:[%s2 + $0xcf8] sm:$0xf]
  %v896 = vld [vmem:[%s2 + $0xcfc] sm:$0xf]
  %v897 = vld [vmem:[%s2 + $0xd00] sm:$0xf]
  %v898 = vld [vmem:[%s2 + $0xd04] sm:$0xf]
  %v899 = vld [vmem:[%s2 + $0xd08] sm:$0xf]
  %v900 = vld [vmem:[%s2 + $0xd0c] sm:$0xf]
  %v901 = vld [vmem:[%s2 + $0xd10] sm:$0xf]
  %v902 = vld [vmem:[%s2 + $0xd14] sm:$0xf]
  %v903 = vld [vmem:[%s2 + $0xd18] sm:$0xf]
  %v904 = vld [vmem:[%s2 + $0xd1c] sm:$0xf]
  %v905 = vld [vmem:[%s2 + $0xd20] sm:$0xf]
  %v906 = vld [vmem:[%s2 + $0xd24] sm:$0xf]
  %v907 = vld [vmem:[%s2 + $0xd28] sm:$0xf]
  %v908 = vld [vmem:[%s2 + $0xd2c] sm:$0xf]
  %v909 = vld [vmem:[%s2 + $0xd30] sm:$0xf]
  %v910 = vld [vmem:[%s2 + $0xd34] sm:$0xf]
  %v911 = vld [vmem:[%s2 + $0xd38] sm:$0xf]
  %v912 = vld [vmem:[%s2 + $0xd3c] sm:$0xf]
  %v913 = vld [vmem:[%s2 + $0xd40] sm:$0xf]
  %v914 = vld [vmem:[%s2 + $0xd44] sm:$0xf]
  %v915 = vld [vmem:[%s2 + $0xd48] sm:$0xf]
  %v916 = vld [vmem:[%s2 + $0xd4c] sm:$0xf]
  %v917 = vld [vmem:[%s2 + $0xd50] sm:$0xf]
  %v918 = vld [vmem:[%s2 + $0xd54] sm:$0xf]
  %v919 = vld [vmem:[%s2 + $0xd58] sm:$0xf]
  %v920 = vld [vmem:[%s2 + $0xd5c] sm:$0xf]
  %v921 = vld [vmem:[%s2 + $0xd60] sm:$0xf]
  %v922 = vld [vmem:[%s2 + $0xd64] sm:$0xf]
  %v923 = vld [vmem:[%s2 + $0xd68] sm:$0xf]
  %v924 = vld [vmem:[%s2 + $0xd6c] sm:$0xf]
  %v925 = vld [vmem:[%s2 + $0xd70] sm:$0xf]
  %v926 = vld [vmem:[%s2 + $0xd74] sm:$0xf]
  %v927 = vld [vmem:[%s2 + $0xd78] sm:$0xf]
  %v928 = vld [vmem:[%s2 + $0xd7c] sm:$0xf]
  %v929 = vld [vmem:[%s2 + $0xd80] sm:$0xf]
  %v930 = vld [vmem:[%s2 + $0xd84] sm:$0xf]
  %v931 = vld [vmem:[%s2 + $0xd88] sm:$0xf]
  %v932 = vld [vmem:[%s2 + $0xd8c] sm:$0xf]
  %v933 = vld [vmem:[%s2 + $0xd90] sm:$0xf]
  %v934 = vld [vmem:[%s2 + $0xd94] sm:$0xf]
  %v935 = vld [vmem:[%s2 + $0xd98] sm:$0xf]
  %v936 = vld [vmem:[%s2 + $0xd9c] sm:$0xf]
  %v937 = vld [vmem:[%s2 + $0xda0] sm:$0xf]
  %v938 = vld [vmem:[%s2 + $0xda4] sm:$0xf]
  %v939 = vld [vmem:[%s2 + $0xda8] sm:$0xf]
  %v940 = vld [vmem:[%s2 + $0xdac] sm:$0xf]
  %v941 = vld [vmem:[%s2 + $0xdb0] sm:$0xf]
  %v942 = vld [vmem:[%s2 + $0xdb4] sm:$0xf]
  %v943 = vld [vmem:[%s2 + $0xdb8] sm:$0xf]
  %v944 = vld [vmem:[%s2 + $0xdbc] sm:$0xf]
  %v945 = vld [vmem:[%s2 + $0xdc0] sm:$0xf]
  %v946 = vld [vmem:[%s2 + $0xdc4] sm:$0xf]
  %v947 = vld [vmem:[%s2 + $0xdc8] sm:$0xf]
  %v948 = vld [vmem:[%s2 + $0xdcc] sm:$0xf]
  %v949 = vld [vmem:[%s2 + $0xdd0] sm:$0xf]
  %v950 = vld [vmem:[%s2 + $0xdd4] sm:$0xf]
  %v951 = vld [vmem:[%s2 + $0xdd8] sm:$0xf]
  %v952 = vld [vmem:[%s2 + $0xddc] sm:$0xf]
  %v953 = vld [vmem:[%s2 + $0xde0] sm:$0xf]
  %v954 = vld [vmem:[%s2 + $0xde4] sm:$0xf]
  %v955 = vld [vmem:[%s2 + $0xde8] sm:$0xf]
  %v956 = vld [vmem:[%s2 + $0xdec] sm:$0xf]
  %v957 = vld [vmem:[%s2 + $0xdf0] sm:$0xf]
  %v958 = vld [vmem:[%s2 + $0xdf4] sm:$0xf]
  %v959 = vld [vmem:[%s2 + $0xdf8] sm:$0xf]
  %v960 = vld [vmem:[%s2 + $0xdfc] sm:$0xf]
  %v961 = vld [vmem:[%s2 + $0xe00] sm:$0xf]
  %v962 = vld [vmem:[%s2 + $0xe04] sm:$0xf]
  %v963 = vld [vmem:[%s2 + $0xe08] sm:$0xf]
  %v964 = vld [vmem:[%s2 + $0xe0c] sm:$0xf]
  %v965 = vld [vmem:[%s2 + $0xe10] sm:$0xf]
  %v966 = vld [vmem:[%s2 + $0xe14] sm:$0xf]
  %v967 = vld [vmem:[%s2 + $0xe18] sm:$0xf]
  %v968 = vld [vmem:[%s2 + $0xe1c] sm:$0xf]
  %v969 = vld [vmem:[%s2 + $0xe20] sm:$0xf]
  %v970 = vld [vmem:[%s2 + $0xe24] sm:$0xf]
  %v971 = vld [vmem:[%s2 + $0xe28] sm:$0xf]
  %v972 = vld [vmem:[%s2 + $0xe2c] sm:$0xf]
  %v973 = vld [vmem:[%s2 + $0xe30] sm:$0xf]
  %v974 = vld [vmem:[%s2 + $0xe34] sm:$0xf]
  %v975 = vld [vmem:[%s2 + $0xe38] sm:$0xf]
  %v976 = vld [vmem:[%s2 + $0xe3c] sm:$0xf]
  %v977 = vld [vmem:[%s2 + $0xe40] sm:$0xf]
  %v978 = vld [vmem:[%s2 + $0xe44] sm:$0xf]
  %v979 = vld [vmem:[%s2 + $0xe48] sm:$0xf]
  %v980 = vld [vmem:[%s2 + $0xe4c] sm:$0xf]
  %v981 = vld [vmem:[%s2 + $0xe50] sm:$0xf]
  %v982 = vld [vmem:[%s2 + $0xe54] sm:$0xf]
  %v983 = vld [vmem:[%s2 + $0xe58] sm:$0xf]
  %v984 = vld [vmem:[%s2 + $0xe5c] sm:$0xf]
  %v985 = vld [vmem:[%s2 + $0xe60] sm:$0xf]
  %v986 = vld [vmem:[%s2 + $0xe64] sm:$0xf]
  %v987 = vld [vmem:[%s2 + $0xe68] sm:$0xf]
  %v988 = vld [vmem:[%s2 + $0xe6c] sm:$0xf]
  %v989 = vld [vmem:[%s2 + $0xe70] sm:$0xf]
  %v990 = vld [vmem:[%s2 + $0xe74] sm:$0xf]
  %v991 = vld [vmem:[%s2 + $0xe78] sm:$0xf]
  %v992 = vld [vmem:[%s2 + $0xe7c] sm:$0xf]
  %v993 = vld [vmem:[%s2 + $0xe80] sm:$0xf]
  %v994 = vld [vmem:[%s2 + $0xe84] sm:$0xf]
  %v995 = vld [vmem:[%s2 + $0xe88] sm:$0xf]
  %v996 = vld [vmem:[%s2 + $0xe8c] sm:$0xf]
  %v997 = vld [vmem:[%s2 + $0xe90] sm:$0xf]
  %v998 = vld [vmem:[%s2 + $0xe94] sm:$0xf]
  %v999 = vld [vmem:[%s2 + $0xe98] sm:$0xf]
  %v1000 = vld [vmem:[%s2 + $0xe9c] sm:$0xf]
  %v1001 = vld [vmem:[%s2 + $0xea0] sm:$0xf]
  %v1002 = vld [vmem:[%s2 + $0xea4] sm:$0xf]
  %v1003 = vld [vmem:[%s2 + $0xea8] sm:$0xf]
  %v1004 = vld [vmem:[%s2 + $0xeac] sm:$0xf]
  %v1005 = vld [vmem:[%s2 + $0xeb0] sm:$0xf]
  %v1006 = vld [vmem:[%s2 + $0xeb4] sm:$0xf]
  %v1007 = vld [vmem:[%s2 + $0xeb8] sm:$0xf]
  %v1008 = vld [vmem:[%s2 + $0xebc] sm:$0xf]
  %v1009 = vld [vmem:[%s2 + $0xec0] sm:$0xf]
  %v1010 = vld [vmem:[%s2 + $0xec4] sm:$0xf]
  %v1011 = vld [vmem:[%s2 + $0xec8] sm:$0xf]
  %v1012 = vld [vmem:[%s2 + $0xecc] sm:$0xf]
  %v1013 = vld [vmem:[%s2 + $0xed0] sm:$0xf]
  %v1014 = vld [vmem:[%s2 + $0xed4] sm:$0xf]
  %v1015 = vld [vmem:[%s2 + $0xed8] sm:$0xf]
  %v1016 = vld [vmem:[%s2 + $0xedc] sm:$0xf]
  %v1017 = vld [vmem:[%s2 + $0xee0] sm:$0xf]
  %v1018 = vld [vmem:[%s2 + $0xee4] sm:$0xf]
  %v1019 = vld [vmem:[%s2 + $0xee8] sm:$0xf]
  %v1020 = vld [vmem:[%s2 + $0xeec] sm:$0xf]
  %v1021 = vld [vmem:[%s2 + $0xef0] sm:$0xf]
  %v1022 = vld [vmem:[%s2 + $0xef4] sm:$0xf]
  %v1023 = vld [vmem:[%s2 + $0xef8] sm:$0xf]
  %v1024 = vld [vmem:[%s2 + $0xefc] sm:$0xf]
  %v1025 = vld [vmem:[%s2 + $0xf00] sm:$0xf]
  %v1026 = vld [vmem:[%s2 + $0xf04] sm:$0xf]
  %v1027 = vld [vmem:[%s2 + $0xf08] sm:$0xf]
  %v1028 = vld [vmem:[%s2 + $0xf0c] sm:$0xf]
  %v1029 = vld [vmem:[%s2 + $0xf10] sm:$0xf]
  %v1030 = vld [vmem:[%s2 + $0xf14] sm:$0xf]
  %v1031 = vld [vmem:[%s2 + $0xf18] sm:$0xf]
  %v1032 = vld [vmem:[%s2 + $0xf1c] sm:$0xf]
  %v1033 = vld [vmem:[%s2 + $0xf20] sm:$0xf]
  %v1034 = vld [vmem:[%s2 + $0xf24] sm:$0xf]
  %v1035 = vld [vmem:[%s2 + $0xf28] sm:$0xf]
  %v1036 = vld [vmem:[%s2 + $0xf2c] sm:$0xf]
  %v1037 = vld [vmem:[%s2 + $0xf30] sm:$0xf]
  %v1038 = vld [vmem:[%s2 + $0xf34] sm:$0xf]
  %v1039 = vld [vmem:[%s2 + $0xf38] sm:$0xf]
  %v1040 = vld [vmem:[%s2 + $0xf3c] sm:$0xf]
  %v1041 = vld [vmem:[%s2 + $0xf40] sm:$0xf]
  %v1042 = vld [vmem:[%s2 + $0xf44] sm:$0xf]
  %v1043 = vld [vmem:[%s2 + $0xf48] sm:$0xf]
  %v1044 = vld [vmem:[%s2 + $0xf4c] sm:$0xf]
  %v1045 = vld [vmem:[%s2 + $0xf50] sm:$0xf]
  %v1046 = vld [vmem:[%s2 + $0xf54] sm:$0xf]
  %v1047 = vld [vmem:[%s2 + $0xf58] sm:$0xf]
  %v1048 = vld [vmem:[%s2 + $0xf5c] sm:$0xf]
  %v1049 = vld [vmem:[%s2 + $0xf60] sm:$0xf]
  %v1050 = vld [vmem:[%s2 + $0xf64] sm:$0xf]
  %v1051 = vld [vmem:[%s2 + $0xf68] sm:$0xf]
  %v1052 = vld [vmem:[%s2 + $0xf6c] sm:$0xf]
  %v1053 = vld [vmem:[%s2 + $0xf70] sm:$0xf]
  %v1054 = vld [vmem:[%s2 + $0xf74] sm:$0xf]
  %v1055 = vld [vmem:[%s2 + $0xf78] sm:$0xf]
  %v1056 = vld [vmem:[%s2 + $0xf7c] sm:$0xf]
  %v1057 = vld [vmem:[%s2 + $0xf80] sm:$0xf]
  %v1058 = vld [vmem:[%s2 + $0xf84] sm:$0xf]
  %v1059 = vld [vmem:[%s2 + $0xf88] sm:$0xf]
  %v1060 = vld [vmem:[%s2 + $0xf8c] sm:$0xf]
  %v1061 = vld [vmem:[%s2 + $0xf90] sm:$0xf]
  %v1062 = vld [vmem:[%s2 + $0xf94] sm:$0xf]
  %v1063 = vld [vmem:[%s2 + $0xf98] sm:$0xf]
  %v1064 = vld [vmem:[%s2 + $0xf9c] sm:$0xf]
  %v1065 = vld [vmem:[%s2 + $0xfa0] sm:$0xf]
  %v1066 = vld [vmem:[%s2 + $0xfa4] sm:$0xf]
  %v1067 = vld [vmem:[%s2 + $0xfa8] sm:$0xf]
  %v1068 = vld [vmem:[%s2 + $0xfac] sm:$0xf]
  %v1069 = vld [vmem:[%s2 + $0xfb0] sm:$0xf]
  %v1070 = vld [vmem:[%s2 + $0xfb4] sm:$0xf]
  %v1071 = vld [vmem:[%s2 + $0xfb8] sm:$0xf]
  %v1072 = vld [vmem:[%s2 + $0xfbc] sm:$0xf]
  %v1073 = vld [vmem:[%s2 + $0xfc0] sm:$0xf]
  %v1074 = vld [vmem:[%s2 + $0xfc4] sm:$0xf]
  %v1075 = vld [vmem:[%s2 + $0xfc8] sm:$0xf]
  %v1076 = vld [vmem:[%s2 + $0xfcc] sm:$0xf]
  %v1077 = vld [vmem:[%s2 + $0xfd0] sm:$0xf]
  %v1078 = vld [vmem:[%s2 + $0xfd4] sm:$0xf]
  %v1079 = vld [vmem:[%s2 + $0xfd8] sm:$0xf]
  %v1080 = vld [vmem:[%s2 + $0xfdc] sm:$0xf]
  %v1081 = vld [vmem:[%s2 + $0xfe0] sm:$0xf]
  %v1082 = vld [vmem:[%s2 + $0xfe4] sm:$0xf]
  %v1083 = vld [vmem:[%s2 + $0xfe8] sm:$0xf]
  %v1084 = vld [vmem:[%s2 + $0xfec] sm:$0xf]
  %v1085 = vld [vmem:[%s2 + $0xff0] sm:$0xf]
  %v1086 = vld [vmem:[%s2 + $0xff4] sm:$0xf]
  %v1087 = vld [vmem:[%s2 + $0xff8] sm:$0xf]
  %v1088 = vld [vmem:[%s2 + $0xffc] sm:$0xf]
  %v1089 = vld [vmem:[%s3] sm:$0x1]
  %v1091 = vlaneseq
  %v1092 = vshrl.u32 %v1091, 7
  %v1093 = vsub.s32 0, %v1092
  %v1094 = vrot.slane %v1089, %v1093
  %v1128 = vunpack.c.l.b16 %v33
  %v1129 = vunpack.c.h.b16 %v33
  %v1130 = vunpack.c.l.b16 %v34
  %v1131 = vunpack.c.h.b16 %v34
  %v1132 = vunpack.c.l.b16 %v35
  %v1133 = vunpack.c.h.b16 %v35
  %v1134 = vunpack.c.l.b16 %v36
  %v1135 = vunpack.c.h.b16 %v36
  %v1136 = vunpack.c.l.b16 %v37
  %v1137 = vunpack.c.h.b16 %v37
  %v1138 = vunpack.c.l.b16 %v38
  %v1139 = vunpack.c.h.b16 %v38
  %v1140 = vunpack.c.l.b16 %v39
  %v1141 = vunpack.c.h.b16 %v39
  %v1142 = vunpack.c.l.b16 %v40
  %v1143 = vunpack.c.h.b16 %v40
  %v1144 = vunpack.c.l.b16 %v41
  %v1145 = vunpack.c.h.b16 %v41
  %v1146 = vunpack.c.l.b16 %v42
  %v1147 = vunpack.c.h.b16 %v42
  %v1148 = vunpack.c.l.b16 %v43
  %v1149 = vunpack.c.h.b16 %v43
  %v1150 = vunpack.c.l.b16 %v44
  %v1151 = vunpack.c.h.b16 %v44
  %v1152 = vunpack.c.l.b16 %v45
  %v1153 = vunpack.c.h.b16 %v45
  %v1154 = vunpack.c.l.b16 %v46
  %v1155 = vunpack.c.h.b16 %v46
  %v1156 = vunpack.c.l.b16 %v47
  %v1157 = vunpack.c.h.b16 %v47
  %v1158 = vunpack.c.l.b16 %v48
  %v1159 = vunpack.c.h.b16 %v48
  %v1160 = vunpack.c.l.b16 %v49
  %v1161 = vunpack.c.h.b16 %v49
  %v1162 = vunpack.c.l.b16 %v50
  %v1163 = vunpack.c.h.b16 %v50
  %v1164 = vunpack.c.l.b16 %v51
  %v1165 = vunpack.c.h.b16 %v51
  %v1166 = vunpack.c.l.b16 %v52
  %v1167 = vunpack.c.h.b16 %v52
  %v1168 = vunpack.c.l.b16 %v53
  %v1169 = vunpack.c.h.b16 %v53
  %v1170 = vunpack.c.l.b16 %v54
  %v1171 = vunpack.c.h.b16 %v54
  %v1172 = vunpack.c.l.b16 %v55
  %v1173 = vunpack.c.h.b16 %v55
  %v1174 = vunpack.c.l.b16 %v56
  %v1175 = vunpack.c.h.b16 %v56
  %v1176 = vunpack.c.l.b16 %v57
  %v1177 = vunpack.c.h.b16 %v57
  %v1178 = vunpack.c.l.b16 %v58
  %v1179 = vunpack.c.h.b16 %v58
  %v1180 = vunpack.c.l.b16 %v59
  %v1181 = vunpack.c.h.b16 %v59
  %v1182 = vunpack.c.l.b16 %v60
  %v1183 = vunpack.c.h.b16 %v60
  %v1184 = vunpack.c.l.b16 %v61
  %v1185 = vunpack.c.h.b16 %v61
  %v1186 = vunpack.c.l.b16 %v62
  %v1187 = vunpack.c.h.b16 %v62
  %v1188 = vunpack.c.l.b16 %v63
  %v1189 = vunpack.c.h.b16 %v63
  %v1190 = vunpack.c.l.b16 %v64
  %v1191 = vunpack.c.h.b16 %v64
  %v1192 = vpack.c.b16 %v1128, %v1128
  %v1193 = vpack.c.b16 %v1129, %v1129
  %v1194 = vpack.c.b16 %v1130, %v1130
  %v1195 = vpack.c.b16 %v1131, %v1131
  %v1196 = vpack.c.b16 %v1132, %v1132
  %v1197 = vpack.c.b16 %v1133, %v1133
  %v1198 = vpack.c.b16 %v1134, %v1134
  %v1199 = vpack.c.b16 %v1135, %v1135
  %v1200 = vpack.c.b16 %v1136, %v1136
  %v1201 = vpack.c.b16 %v1137, %v1137
  %v1202 = vpack.c.b16 %v1138, %v1138
  %v1203 = vpack.c.b16 %v1139, %v1139
  %v1204 = vpack.c.b16 %v1140, %v1140
  %v1205 = vpack.c.b16 %v1141, %v1141
  %v1206 = vpack.c.b16 %v1142, %v1142
  %v1207 = vpack.c.b16 %v1143, %v1143
  %v1208 = vpack.c.b16 %v1144, %v1144
  %v1209 = vpack.c.b16 %v1145, %v1145
  %v1210 = vpack.c.b16 %v1146, %v1146
  %v1211 = vpack.c.b16 %v1147, %v1147
  %v1212 = vpack.c.b16 %v1148, %v1148
  %v1213 = vpack.c.b16 %v1149, %v1149
  %v1214 = vpack.c.b16 %v1150, %v1150
  %v1215 = vpack.c.b16 %v1151, %v1151
  %v1216 = vpack.c.b16 %v1152, %v1152
  %v1217 = vpack.c.b16 %v1153, %v1153
  %v1218 = vpack.c.b16 %v1154, %v1154
  %v1219 = vpack.c.b16 %v1155, %v1155
  %v1220 = vpack.c.b16 %v1156, %v1156
  %v1221 = vpack.c.b16 %v1157, %v1157
  %v1222 = vpack.c.b16 %v1158, %v1158
  %v1223 = vpack.c.b16 %v1159, %v1159
  %v1224 = vpack.c.b16 %v1160, %v1160
  %v1225 = vpack.c.b16 %v1161, %v1161
  %v1226 = vpack.c.b16 %v1162, %v1162
  %v1227 = vpack.c.b16 %v1163, %v1163
  %v1228 = vpack.c.b16 %v1164, %v1164
  %v1229 = vpack.c.b16 %v1165, %v1165
  %v1230 = vpack.c.b16 %v1166, %v1166
  %v1231 = vpack.c.b16 %v1167, %v1167
  %v1232 = vpack.c.b16 %v1168, %v1168
  %v1233 = vpack.c.b16 %v1169, %v1169
  %v1234 = vpack.c.b16 %v1170, %v1170
  %v1235 = vpack.c.b16 %v1171, %v1171
  %v1236 = vpack.c.b16 %v1172, %v1172
  %v1237 = vpack.c.b16 %v1173, %v1173
  %v1238 = vpack.c.b16 %v1174, %v1174
  %v1239 = vpack.c.b16 %v1175, %v1175
  %v1240 = vpack.c.b16 %v1176, %v1176
  %v1241 = vpack.c.b16 %v1177, %v1177
  %v1242 = vpack.c.b16 %v1178, %v1178
  %v1243 = vpack.c.b16 %v1179, %v1179
  %v1244 = vpack.c.b16 %v1180, %v1180
  %v1245 = vpack.c.b16 %v1181, %v1181
  %v1246 = vpack.c.b16 %v1182, %v1182
  %v1247 = vpack.c.b16 %v1183, %v1183
  %v1248 = vpack.c.b16 %v1184, %v1184
  %v1249 = vpack.c.b16 %v1185, %v1185
  %v1250 = vpack.c.b16 %v1186, %v1186
  %v1251 = vpack.c.b16 %v1187, %v1187
  %v1252 = vpack.c.b16 %v1188, %v1188
  %v1253 = vpack.c.b16 %v1189, %v1189
  %v1254 = vpack.c.b16 %v1190, %v1190
  %v1255 = vpack.c.b16 %v1191, %v1191
  %v2344 = vunpack.c.l.b16 %v65
  %v2345 = vunpack.c.l.b16 %v66
  %v2346 = vunpack.c.l.b16 %v67
  %v2347 = vunpack.c.l.b16 %v68
  %v2348 = vunpack.c.l.b16 %v69
  %v2349 = vunpack.c.l.b16 %v70
  %v2350 = vunpack.c.l.b16 %v71
  %v2351 = vunpack.c.l.b16 %v72
  %v2352 = vunpack.c.l.b16 %v73
  %v2353 = vunpack.c.l.b16 %v74
  %v2354 = vunpack.c.l.b16 %v75
  %v2355 = vunpack.c.l.b16 %v76
  %v2356 = vunpack.c.l.b16 %v77
  %v2357 = vunpack.c.l.b16 %v78
  %v2358 = vunpack.c.l.b16 %v79
  %v2359 = vunpack.c.l.b16 %v80
  %v2360 = vunpack.c.l.b16 %v81
  %v2361 = vunpack.c.l.b16 %v82
  %v2362 = vunpack.c.l.b16 %v83
  %v2363 = vunpack.c.l.b16 %v84
  %v2364 = vunpack.c.l.b16 %v85
  %v2365 = vunpack.c.l.b16 %v86
  %v2366 = vunpack.c.l.b16 %v87
  %v2367 = vunpack.c.l.b16 %v88
  %v2368 = vunpack.c.l.b16 %v89
  %v2369 = vunpack.c.l.b16 %v90
  %v2370 = vunpack.c.l.b16 %v91
  %v2371 = vunpack.c.l.b16 %v92
  %v2372 = vunpack.c.l.b16 %v93
  %v2373 = vunpack.c.l.b16 %v94
  %v2374 = vunpack.c.l.b16 %v95
  %v2375 = vunpack.c.l.b16 %v96
  %v2376 = vunpack.c.l.b16 %v97
  %v2377 = vunpack.c.l.b16 %v98
  %v2378 = vunpack.c.l.b16 %v99
  %v2379 = vunpack.c.l.b16 %v100
  %v2380 = vunpack.c.l.b16 %v101
  %v2381 = vunpack.c.l.b16 %v102
  %v2382 = vunpack.c.l.b16 %v103
  %v2383 = vunpack.c.l.b16 %v104
  %v2384 = vunpack.c.l.b16 %v105
  %v2385 = vunpack.c.l.b16 %v106
  %v2386 = vunpack.c.l.b16 %v107
  %v2387 = vunpack.c.l.b16 %v108
  %v2388 = vunpack.c.l.b16 %v109
  %v2389 = vunpack.c.l.b16 %v110
  %v2390 = vunpack.c.l.b16 %v111
  %v2391 = vunpack.c.l.b16 %v112
  %v2392 = vunpack.c.l.b16 %v113
  %v2393 = vunpack.c.l.b16 %v114
  %v2394 = vunpack.c.l.b16 %v115
  %v2395 = vunpack.c.l.b16 %v116
  %v2396 = vunpack.c.l.b16 %v117
  %v2397 = vunpack.c.l.b16 %v118
  %v2398 = vunpack.c.l.b16 %v119
  %v2399 = vunpack.c.l.b16 %v120
  %v2400 = vunpack.c.l.b16 %v121
  %v2401 = vunpack.c.l.b16 %v122
  %v2402 = vunpack.c.l.b16 %v123
  %v2403 = vunpack.c.l.b16 %v124
  %v2404 = vunpack.c.l.b16 %v125
  %v2405 = vunpack.c.l.b16 %v126
  %v2406 = vunpack.c.l.b16 %v127
  %v2407 = vunpack.c.l.b16 %v128
  %v2408 = vunpack.c.l.b16 %v129
  %v2409 = vunpack.c.l.b16 %v130
  %v2410 = vunpack.c.l.b16 %v131
  %v2411 = vunpack.c.l.b16 %v132
  %v2412 = vunpack.c.l.b16 %v133
  %v2413 = vunpack.c.l.b16 %v134
  %v2414 = vunpack.c.l.b16 %v135
  %v2415 = vunpack.c.l.b16 %v136
  %v2416 = vunpack.c.l.b16 %v137
  %v2417 = vunpack.c.l.b16 %v138
  %v2418 = vunpack.c.l.b16 %v139
  %v2419 = vunpack.c.l.b16 %v140
  %v2420 = vunpack.c.l.b16 %v141
  %v2421 = vunpack.c.l.b16 %v142
  %v2422 = vunpack.c.l.b16 %v143
  %v2423 = vunpack.c.l.b16 %v144
  %v2424 = vunpack.c.l.b16 %v145
  %v2425 = vunpack.c.l.b16 %v146
  %v2426 = vunpack.c.l.b16 %v147
  %v2427 = vunpack.c.l.b16 %v148
  %v2428 = vunpack.c.l.b16 %v149
  %v2429 = vunpack.c.l.b16 %v150
  %v2430 = vunpack.c.l.b16 %v151
  %v2431 = vunpack.c.l.b16 %v152
  %v2432 = vunpack.c.l.b16 %v153
  %v2433 = vunpack.c.l.b16 %v154
  %v2434 = vunpack.c.l.b16 %v155
  %v2435 = vunpack.c.l.b16 %v156
  %v2436 = vunpack.c.l.b16 %v157
  %v2437 = vunpack.c.l.b16 %v158
  %v2438 = vunpack.c.l.b16 %v159
  %v2439 = vunpack.c.l.b16 %v160
  %v2440 = vunpack.c.l.b16 %v161
  %v2441 = vunpack.c.l.b16 %v162
  %v2442 = vunpack.c.l.b16 %v163
  %v2443 = vunpack.c.l.b16 %v164
  %v2444 = vunpack.c.l.b16 %v165
  %v2445 = vunpack.c.l.b16 %v166
  %v2446 = vunpack.c.l.b16 %v167
  %v2447 = vunpack.c.l.b16 %v168
  %v2448 = vunpack.c.l.b16 %v169
  %v2449 = vunpack.c.l.b16 %v170
  %v2450 = vunpack.c.l.b16 %v171
  %v2451 = vunpack.c.l.b16 %v172
  %v2452 = vunpack.c.l.b16 %v173
  %v2453 = vunpack.c.l.b16 %v174
  %v2454 = vunpack.c.l.b16 %v175
  %v2455 = vunpack.c.l.b16 %v176
  %v2456 = vunpack.c.l.b16 %v177
  %v2457 = vunpack.c.l.b16 %v178
  %v2458 = vunpack.c.l.b16 %v179
  %v2459 = vunpack.c.l.b16 %v180
  %v2460 = vunpack.c.l.b16 %v181
  %v2461 = vunpack.c.l.b16 %v182
  %v2462 = vunpack.c.l.b16 %v183
  %v2463 = vunpack.c.l.b16 %v184
  %v2464 = vunpack.c.l.b16 %v185
  %v2465 = vunpack.c.l.b16 %v186
  %v2466 = vunpack.c.l.b16 %v187
  %v2467 = vunpack.c.l.b16 %v188
  %v2468 = vunpack.c.l.b16 %v189
  %v2469 = vunpack.c.l.b16 %v190
  %v2470 = vunpack.c.l.b16 %v191
  %v2471 = vunpack.c.l.b16 %v192
  %v2472 = vunpack.c.l.b16 %v193
  %v2473 = vunpack.c.l.b16 %v194
  %v2474 = vunpack.c.l.b16 %v195
  %v2475 = vunpack.c.l.b16 %v196
  %v2476 = vunpack.c.l.b16 %v197
  %v2477 = vunpack.c.l.b16 %v198
  %v2478 = vunpack.c.l.b16 %v199
  %v2479 = vunpack.c.l.b16 %v200
  %v2480 = vunpack.c.l.b16 %v201
  %v2481 = vunpack.c.l.b16 %v202
  %v2482 = vunpack.c.l.b16 %v203
  %v2483 = vunpack.c.l.b16 %v204
  %v2484 = vunpack.c.l.b16 %v205
  %v2485 = vunpack.c.l.b16 %v206
  %v2486 = vunpack.c.l.b16 %v207
  %v2487 = vunpack.c.l.b16 %v208
  %v2488 = vunpack.c.l.b16 %v209
  %v2489 = vunpack.c.l.b16 %v210
  %v2490 = vunpack.c.l.b16 %v211
  %v2491 = vunpack.c.l.b16 %v212
  %v2492 = vunpack.c.l.b16 %v213
  %v2493 = vunpack.c.l.b16 %v214
  %v2494 = vunpack.c.l.b16 %v215
  %v2495 = vunpack.c.l.b16 %v216
  %v2496 = vunpack.c.l.b16 %v217
  %v2497 = vunpack.c.l.b16 %v218
  %v2498 = vunpack.c.l.b16 %v219
  %v2499 = vunpack.c.l.b16 %v220
  %v2500 = vunpack.c.l.b16 %v221
  %v2501 = vunpack.c.l.b16 %v222
  %v2502 = vunpack.c.l.b16 %v223
  %v2503 = vunpack.c.l.b16 %v224
  %v2504 = vunpack.c.l.b16 %v225
  %v2505 = vunpack.c.l.b16 %v226
  %v2506 = vunpack.c.l.b16 %v227
  %v2507 = vunpack.c.l.b16 %v228
  %v2508 = vunpack.c.l.b16 %v229
  %v2509 = vunpack.c.l.b16 %v230
  %v2510 = vunpack.c.l.b16 %v231
  %v2511 = vunpack.c.l.b16 %v232
  %v2512 = vunpack.c.l.b16 %v233
  %v2513 = vunpack.c.l.b16 %v234
  %v2514 = vunpack.c.l.b16 %v235
  %v2515 = vunpack.c.l.b16 %v236
  %v2516 = vunpack.c.l.b16 %v237
  %v2517 = vunpack.c.l.b16 %v238
  %v2518 = vunpack.c.l.b16 %v239
  %v2519 = vunpack.c.l.b16 %v240
  %v2520 = vunpack.c.l.b16 %v241
  %v2521 = vunpack.c.l.b16 %v242
  %v2522 = vunpack.c.l.b16 %v243
  %v2523 = vunpack.c.l.b16 %v244
  %v2524 = vunpack.c.l.b16 %v245
  %v2525 = vunpack.c.l.b16 %v246
  %v2526 = vunpack.c.l.b16 %v247
  %v2527 = vunpack.c.l.b16 %v248
  %v2528 = vunpack.c.l.b16 %v249
  %v2529 = vunpack.c.l.b16 %v250
  %v2530 = vunpack.c.l.b16 %v251
  %v2531 = vunpack.c.l.b16 %v252
  %v2532 = vunpack.c.l.b16 %v253
  %v2533 = vunpack.c.l.b16 %v254
  %v2534 = vunpack.c.l.b16 %v255
  %v2535 = vunpack.c.l.b16 %v256
  %v2536 = vunpack.c.l.b16 %v257
  %v2537 = vunpack.c.l.b16 %v258
  %v2538 = vunpack.c.l.b16 %v259
  %v2539 = vunpack.c.l.b16 %v260
  %v2540 = vunpack.c.l.b16 %v261
  %v2541 = vunpack.c.l.b16 %v262
  %v2542 = vunpack.c.l.b16 %v263
  %v2543 = vunpack.c.l.b16 %v264
  %v2544 = vunpack.c.l.b16 %v265
  %v2545 = vunpack.c.l.b16 %v266
  %v2546 = vunpack.c.l.b16 %v267
  %v2547 = vunpack.c.l.b16 %v268
  %v2548 = vunpack.c.l.b16 %v269
  %v2549 = vunpack.c.l.b16 %v270
  %v2550 = vunpack.c.l.b16 %v271
  %v2551 = vunpack.c.l.b16 %v272
  %v2552 = vunpack.c.l.b16 %v273
  %v2553 = vunpack.c.l.b16 %v274
  %v2554 = vunpack.c.l.b16 %v275
  %v2555 = vunpack.c.l.b16 %v276
  %v2556 = vunpack.c.l.b16 %v277
  %v2557 = vunpack.c.l.b16 %v278
  %v2558 = vunpack.c.l.b16 %v279
  %v2559 = vunpack.c.l.b16 %v280
  %v2560 = vunpack.c.l.b16 %v281
  %v2561 = vunpack.c.l.b16 %v282
  %v2562 = vunpack.c.l.b16 %v283
  %v2563 = vunpack.c.l.b16 %v284
  %v2564 = vunpack.c.l.b16 %v285
  %v2565 = vunpack.c.l.b16 %v286
  %v2566 = vunpack.c.l.b16 %v287
  %v2567 = vunpack.c.l.b16 %v288
  %v2568 = vunpack.c.l.b16 %v289
  %v2569 = vunpack.c.l.b16 %v290
  %v2570 = vunpack.c.l.b16 %v291
  %v2571 = vunpack.c.l.b16 %v292
  %v2572 = vunpack.c.l.b16 %v293
  %v2573 = vunpack.c.l.b16 %v294
  %v2574 = vunpack.c.l.b16 %v295
  %v2575 = vunpack.c.l.b16 %v296
  %v2576 = vunpack.c.l.b16 %v297
  %v2577 = vunpack.c.l.b16 %v298
  %v2578 = vunpack.c.l.b16 %v299
  %v2579 = vunpack.c.l.b16 %v300
  %v2580 = vunpack.c.l.b16 %v301
  %v2581 = vunpack.c.l.b16 %v302
  %v2582 = vunpack.c.l.b16 %v303
  %v2583 = vunpack.c.l.b16 %v304
  %v2584 = vunpack.c.l.b16 %v305
  %v2585 = vunpack.c.l.b16 %v306
  %v2586 = vunpack.c.l.b16 %v307
  %v2587 = vunpack.c.l.b16 %v308
  %v2588 = vunpack.c.l.b16 %v309
  %v2589 = vunpack.c.l.b16 %v310
  %v2590 = vunpack.c.l.b16 %v311
  %v2591 = vunpack.c.l.b16 %v312
  %v2592 = vunpack.c.l.b16 %v313
  %v2593 = vunpack.c.l.b16 %v314
  %v2594 = vunpack.c.l.b16 %v315
  %v2595 = vunpack.c.l.b16 %v316
  %v2596 = vunpack.c.l.b16 %v317
  %v2597 = vunpack.c.l.b16 %v318
  %v2598 = vunpack.c.l.b16 %v319
  %v2599 = vunpack.c.l.b16 %v320
  %v2600 = vunpack.c.l.b16 %v321
  %v2601 = vunpack.c.l.b16 %v322
  %v2602 = vunpack.c.l.b16 %v323
  %v2603 = vunpack.c.l.b16 %v324
  %v2604 = vunpack.c.l.b16 %v325
  %v2605 = vunpack.c.l.b16 %v326
  %v2606 = vunpack.c.l.b16 %v327
  %v2607 = vunpack.c.l.b16 %v328
  %v2608 = vunpack.c.l.b16 %v329
  %v2609 = vunpack.c.l.b16 %v330
  %v2610 = vunpack.c.l.b16 %v331
  %v2611 = vunpack.c.l.b16 %v332
  %v2612 = vunpack.c.l.b16 %v333
  %v2613 = vunpack.c.l.b16 %v334
  %v2614 = vunpack.c.l.b16 %v335
  %v2615 = vunpack.c.l.b16 %v336
  %v2616 = vunpack.c.l.b16 %v337
  %v2617 = vunpack.c.l.b16 %v338
  %v2618 = vunpack.c.l.b16 %v339
  %v2619 = vunpack.c.l.b16 %v340
  %v2620 = vunpack.c.l.b16 %v341
  %v2621 = vunpack.c.l.b16 %v342
  %v2622 = vunpack.c.l.b16 %v343
  %v2623 = vunpack.c.l.b16 %v344
  %v2624 = vunpack.c.l.b16 %v345
  %v2625 = vunpack.c.l.b16 %v346
  %v2626 = vunpack.c.l.b16 %v347
  %v2627 = vunpack.c.l.b16 %v348
  %v2628 = vunpack.c.l.b16 %v349
  %v2629 = vunpack.c.l.b16 %v350
  %v2630 = vunpack.c.l.b16 %v351
  %v2631 = vunpack.c.l.b16 %v352
  %v2632 = vunpack.c.l.b16 %v353
  %v2633 = vunpack.c.l.b16 %v354
  %v2634 = vunpack.c.l.b16 %v355
  %v2635 = vunpack.c.l.b16 %v356
  %v2636 = vunpack.c.l.b16 %v357
  %v2637 = vunpack.c.l.b16 %v358
  %v2638 = vunpack.c.l.b16 %v359
  %v2639 = vunpack.c.l.b16 %v360
  %v2640 = vunpack.c.l.b16 %v361
  %v2641 = vunpack.c.l.b16 %v362
  %v2642 = vunpack.c.l.b16 %v363
  %v2643 = vunpack.c.l.b16 %v364
  %v2644 = vunpack.c.l.b16 %v365
  %v2645 = vunpack.c.l.b16 %v366
  %v2646 = vunpack.c.l.b16 %v367
  %v2647 = vunpack.c.l.b16 %v368
  %v2648 = vunpack.c.l.b16 %v369
  %v2649 = vunpack.c.l.b16 %v370
  %v2650 = vunpack.c.l.b16 %v371
  %v2651 = vunpack.c.l.b16 %v372
  %v2652 = vunpack.c.l.b16 %v373
  %v2653 = vunpack.c.l.b16 %v374
  %v2654 = vunpack.c.l.b16 %v375
  %v2655 = vunpack.c.l.b16 %v376
  %v2656 = vunpack.c.l.b16 %v377
  %v2657 = vunpack.c.l.b16 %v378
  %v2658 = vunpack.c.l.b16 %v379
  %v2659 = vunpack.c.l.b16 %v380
  %v2660 = vunpack.c.l.b16 %v381
  %v2661 = vunpack.c.l.b16 %v382
  %v2662 = vunpack.c.l.b16 %v383
  %v2663 = vunpack.c.l.b16 %v384
  %v2664 = vunpack.c.l.b16 %v385
  %v2665 = vunpack.c.l.b16 %v386
  %v2666 = vunpack.c.l.b16 %v387
  %v2667 = vunpack.c.l.b16 %v388
  %v2668 = vunpack.c.l.b16 %v389
  %v2669 = vunpack.c.l.b16 %v390
  %v2670 = vunpack.c.l.b16 %v391
  %v2671 = vunpack.c.l.b16 %v392
  %v2672 = vunpack.c.l.b16 %v393
  %v2673 = vunpack.c.l.b16 %v394
  %v2674 = vunpack.c.l.b16 %v395
  %v2675 = vunpack.c.l.b16 %v396
  %v2676 = vunpack.c.l.b16 %v397
  %v2677 = vunpack.c.l.b16 %v398
  %v2678 = vunpack.c.l.b16 %v399
  %v2679 = vunpack.c.l.b16 %v400
  %v2680 = vunpack.c.l.b16 %v401
  %v2681 = vunpack.c.l.b16 %v402
  %v2682 = vunpack.c.l.b16 %v403
  %v2683 = vunpack.c.l.b16 %v404
  %v2684 = vunpack.c.l.b16 %v405
  %v2685 = vunpack.c.l.b16 %v406
  %v2686 = vunpack.c.l.b16 %v407
  %v2687 = vunpack.c.l.b16 %v408
  %v2688 = vunpack.c.l.b16 %v409
  %v2689 = vunpack.c.l.b16 %v410
  %v2690 = vunpack.c.l.b16 %v411
  %v2691 = vunpack.c.l.b16 %v412
  %v2692 = vunpack.c.l.b16 %v413
  %v2693 = vunpack.c.l.b16 %v414
  %v2694 = vunpack.c.l.b16 %v415
  %v2695 = vunpack.c.l.b16 %v416
  %v2696 = vunpack.c.l.b16 %v417
  %v2697 = vunpack.c.l.b16 %v418
  %v2698 = vunpack.c.l.b16 %v419
  %v2699 = vunpack.c.l.b16 %v420
  %v2700 = vunpack.c.l.b16 %v421
  %v2701 = vunpack.c.l.b16 %v422
  %v2702 = vunpack.c.l.b16 %v423
  %v2703 = vunpack.c.l.b16 %v424
  %v2704 = vunpack.c.l.b16 %v425
  %v2705 = vunpack.c.l.b16 %v426
  %v2706 = vunpack.c.l.b16 %v427
  %v2707 = vunpack.c.l.b16 %v428
  %v2708 = vunpack.c.l.b16 %v429
  %v2709 = vunpack.c.l.b16 %v430
  %v2710 = vunpack.c.l.b16 %v431
  %v2711 = vunpack.c.l.b16 %v432
  %v2712 = vunpack.c.l.b16 %v433
  %v2713 = vunpack.c.l.b16 %v434
  %v2714 = vunpack.c.l.b16 %v435
  %v2715 = vunpack.c.l.b16 %v436
  %v2716 = vunpack.c.l.b16 %v437
  %v2717 = vunpack.c.l.b16 %v438
  %v2718 = vunpack.c.l.b16 %v439
  %v2719 = vunpack.c.l.b16 %v440
  %v2720 = vunpack.c.l.b16 %v441
  %v2721 = vunpack.c.l.b16 %v442
  %v2722 = vunpack.c.l.b16 %v443
  %v2723 = vunpack.c.l.b16 %v444
  %v2724 = vunpack.c.l.b16 %v445
  %v2725 = vunpack.c.l.b16 %v446
  %v2726 = vunpack.c.l.b16 %v447
  %v2727 = vunpack.c.l.b16 %v448
  %v2728 = vunpack.c.l.b16 %v449
  %v2729 = vunpack.c.l.b16 %v450
  %v2730 = vunpack.c.l.b16 %v451
  %v2731 = vunpack.c.l.b16 %v452
  %v2732 = vunpack.c.l.b16 %v453
  %v2733 = vunpack.c.l.b16 %v454
  %v2734 = vunpack.c.l.b16 %v455
  %v2735 = vunpack.c.l.b16 %v456
  %v2736 = vunpack.c.l.b16 %v457
  %v2737 = vunpack.c.l.b16 %v458
  %v2738 = vunpack.c.l.b16 %v459
  %v2739 = vunpack.c.l.b16 %v460
  %v2740 = vunpack.c.l.b16 %v461
  %v2741 = vunpack.c.l.b16 %v462
  %v2742 = vunpack.c.l.b16 %v463
  %v2743 = vunpack.c.l.b16 %v464
  %v2744 = vunpack.c.l.b16 %v465
  %v2745 = vunpack.c.l.b16 %v466
  %v2746 = vunpack.c.l.b16 %v467
  %v2747 = vunpack.c.l.b16 %v468
  %v2748 = vunpack.c.l.b16 %v469
  %v2749 = vunpack.c.l.b16 %v470
  %v2750 = vunpack.c.l.b16 %v471
  %v2751 = vunpack.c.l.b16 %v472
  %v2752 = vunpack.c.l.b16 %v473
  %v2753 = vunpack.c.l.b16 %v474
  %v2754 = vunpack.c.l.b16 %v475
  %v2755 = vunpack.c.l.b16 %v476
  %v2756 = vunpack.c.l.b16 %v477
  %v2757 = vunpack.c.l.b16 %v478
  %v2758 = vunpack.c.l.b16 %v479
  %v2759 = vunpack.c.l.b16 %v480
  %v2760 = vunpack.c.l.b16 %v481
  %v2761 = vunpack.c.l.b16 %v482
  %v2762 = vunpack.c.l.b16 %v483
  %v2763 = vunpack.c.l.b16 %v484
  %v2764 = vunpack.c.l.b16 %v485
  %v2765 = vunpack.c.l.b16 %v486
  %v2766 = vunpack.c.l.b16 %v487
  %v2767 = vunpack.c.l.b16 %v488
  %v2768 = vunpack.c.l.b16 %v489
  %v2769 = vunpack.c.l.b16 %v490
  %v2770 = vunpack.c.l.b16 %v491
  %v2771 = vunpack.c.l.b16 %v492
  %v2772 = vunpack.c.l.b16 %v493
  %v2773 = vunpack.c.l.b16 %v494
  %v2774 = vunpack.c.l.b16 %v495
  %v2775 = vunpack.c.l.b16 %v496
  %v2776 = vunpack.c.l.b16 %v497
  %v2777 = vunpack.c.l.b16 %v498
  %v2778 = vunpack.c.l.b16 %v499
  %v2779 = vunpack.c.l.b16 %v500
  %v2780 = vunpack.c.l.b16 %v501
  %v2781 = vunpack.c.l.b16 %v502
  %v2782 = vunpack.c.l.b16 %v503
  %v2783 = vunpack.c.l.b16 %v504
  %v2784 = vunpack.c.l.b16 %v505
  %v2785 = vunpack.c.l.b16 %v506
  %v2786 = vunpack.c.l.b16 %v507
  %v2787 = vunpack.c.l.b16 %v508
  %v2788 = vunpack.c.l.b16 %v509
  %v2789 = vunpack.c.l.b16 %v510
  %v2790 = vunpack.c.l.b16 %v511
  %v2791 = vunpack.c.l.b16 %v512
  %v2792 = vunpack.c.l.b16 %v513
  %v2793 = vunpack.c.l.b16 %v514
  %v2794 = vunpack.c.l.b16 %v515
  %v2795 = vunpack.c.l.b16 %v516
  %v2796 = vunpack.c.l.b16 %v517
  %v2797 = vunpack.c.l.b16 %v518
  %v2798 = vunpack.c.l.b16 %v519
  %v2799 = vunpack.c.l.b16 %v520
  %v2800 = vunpack.c.l.b16 %v521
  %v2801 = vunpack.c.l.b16 %v522
  %v2802 = vunpack.c.l.b16 %v523
  %v2803 = vunpack.c.l.b16 %v524
  %v2804 = vunpack.c.l.b16 %v525
  %v2805 = vunpack.c.l.b16 %v526
  %v2806 = vunpack.c.l.b16 %v527
  %v2807 = vunpack.c.l.b16 %v528
  %v2808 = vunpack.c.l.b16 %v529
  %v2809 = vunpack.c.l.b16 %v530
  %v2810 = vunpack.c.l.b16 %v531
  %v2811 = vunpack.c.l.b16 %v532
  %v2812 = vunpack.c.l.b16 %v533
  %v2813 = vunpack.c.l.b16 %v534
  %v2814 = vunpack.c.l.b16 %v535
  %v2815 = vunpack.c.l.b16 %v536
  %v2816 = vunpack.c.l.b16 %v537
  %v2817 = vunpack.c.l.b16 %v538
  %v2818 = vunpack.c.l.b16 %v539
  %v2819 = vunpack.c.l.b16 %v540
  %v2820 = vunpack.c.l.b16 %v541
  %v2821 = vunpack.c.l.b16 %v542
  %v2822 = vunpack.c.l.b16 %v543
  %v2823 = vunpack.c.l.b16 %v544
  %v2824 = vunpack.c.l.b16 %v545
  %v2825 = vunpack.c.l.b16 %v546
  %v2826 = vunpack.c.l.b16 %v547
  %v2827 = vunpack.c.l.b16 %v548
  %v2828 = vunpack.c.l.b16 %v549
  %v2829 = vunpack.c.l.b16 %v550
  %v2830 = vunpack.c.l.b16 %v551
  %v2831 = vunpack.c.l.b16 %v552
  %v2832 = vunpack.c.l.b16 %v553
  %v2833 = vunpack.c.l.b16 %v554
  %v2834 = vunpack.c.l.b16 %v555
  %v2835 = vunpack.c.l.b16 %v556
  %v2836 = vunpack.c.l.b16 %v557
  %v2837 = vunpack.c.l.b16 %v558
  %v2838 = vunpack.c.l.b16 %v559
  %v2839 = vunpack.c.l.b16 %v560
  %v2840 = vunpack.c.l.b16 %v561
  %v2841 = vunpack.c.l.b16 %v562
  %v2842 = vunpack.c.l.b16 %v563
  %v2843 = vunpack.c.l.b16 %v564
  %v2844 = vunpack.c.l.b16 %v565
  %v2845 = vunpack.c.l.b16 %v566
  %v2846 = vunpack.c.l.b16 %v567
  %v2847 = vunpack.c.l.b16 %v568
  %v2848 = vunpack.c.l.b16 %v569
  %v2849 = vunpack.c.l.b16 %v570
  %v2850 = vunpack.c.l.b16 %v571
  %v2851 = vunpack.c.l.b16 %v572
  %v2852 = vunpack.c.l.b16 %v573
  %v2853 = vunpack.c.l.b16 %v574
  %v2854 = vunpack.c.l.b16 %v575
  %v2855 = vunpack.c.l.b16 %v576
  %v2856 = vunpack.c.l.b16 %v577
  %v2857 = vunpack.c.l.b16 %v578
  %v2858 = vunpack.c.l.b16 %v579
  %v2859 = vunpack.c.l.b16 %v580
  %v2860 = vunpack.c.l.b16 %v581
  %v2861 = vunpack.c.l.b16 %v582
  %v2862 = vunpack.c.l.b16 %v583
  %v2863 = vunpack.c.l.b16 %v584
  %v2864 = vunpack.c.l.b16 %v585
  %v2865 = vunpack.c.l.b16 %v586
  %v2866 = vunpack.c.l.b16 %v587
  %v2867 = vunpack.c.l.b16 %v588
  %v2868 = vunpack.c.l.b16 %v589
  %v2869 = vunpack.c.l.b16 %v590
  %v2870 = vunpack.c.l.b16 %v591
  %v2871 = vunpack.c.l.b16 %v592
  %v2872 = vunpack.c.l.b16 %v593
  %v2873 = vunpack.c.l.b16 %v594
  %v2874 = vunpack.c.l.b16 %v595
  %v2875 = vunpack.c.l.b16 %v596
  %v2876 = vunpack.c.l.b16 %v597
  %v2877 = vunpack.c.l.b16 %v598
  %v2878 = vunpack.c.l.b16 %v599
  %v2879 = vunpack.c.l.b16 %v600
  %v2880 = vunpack.c.l.b16 %v601
  %v2881 = vunpack.c.l.b16 %v602
  %v2882 = vunpack.c.l.b16 %v603
  %v2883 = vunpack.c.l.b16 %v604
  %v2884 = vunpack.c.l.b16 %v605
  %v2885 = vunpack.c.l.b16 %v606
  %v2886 = vunpack.c.l.b16 %v607
  %v2887 = vunpack.c.l.b16 %v608
  %v2888 = vunpack.c.l.b16 %v609
  %v2889 = vunpack.c.l.b16 %v610
  %v2890 = vunpack.c.l.b16 %v611
  %v2891 = vunpack.c.l.b16 %v612
  %v2892 = vunpack.c.l.b16 %v613
  %v2893 = vunpack.c.l.b16 %v614
  %v2894 = vunpack.c.l.b16 %v615
  %v2895 = vunpack.c.l.b16 %v616
  %v2896 = vunpack.c.l.b16 %v617
  %v2897 = vunpack.c.l.b16 %v618
  %v2898 = vunpack.c.l.b16 %v619
  %v2899 = vunpack.c.l.b16 %v620
  %v2900 = vunpack.c.l.b16 %v621
  %v2901 = vunpack.c.l.b16 %v622
  %v2902 = vunpack.c.l.b16 %v623
  %v2903 = vunpack.c.l.b16 %v624
  %v2904 = vunpack.c.l.b16 %v625
  %v2905 = vunpack.c.l.b16 %v626
  %v2906 = vunpack.c.l.b16 %v627
  %v2907 = vunpack.c.l.b16 %v628
  %v2908 = vunpack.c.l.b16 %v629
  %v2909 = vunpack.c.l.b16 %v630
  %v2910 = vunpack.c.l.b16 %v631
  %v2911 = vunpack.c.l.b16 %v632
  %v2912 = vunpack.c.l.b16 %v633
  %v2913 = vunpack.c.l.b16 %v634
  %v2914 = vunpack.c.l.b16 %v635
  %v2915 = vunpack.c.l.b16 %v636
  %v2916 = vunpack.c.l.b16 %v637
  %v2917 = vunpack.c.l.b16 %v638
  %v2918 = vunpack.c.l.b16 %v639
  %v2919 = vunpack.c.l.b16 %v640
  %v2920 = vunpack.c.l.b16 %v641
  %v2921 = vunpack.c.l.b16 %v642
  %v2922 = vunpack.c.l.b16 %v643
  %v2923 = vunpack.c.l.b16 %v644
  %v2924 = vunpack.c.l.b16 %v645
  %v2925 = vunpack.c.l.b16 %v646
  %v2926 = vunpack.c.l.b16 %v647
  %v2927 = vunpack.c.l.b16 %v648
  %v2928 = vunpack.c.l.b16 %v649
  %v2929 = vunpack.c.l.b16 %v650
  %v2930 = vunpack.c.l.b16 %v651
  %v2931 = vunpack.c.l.b16 %v652
  %v2932 = vunpack.c.l.b16 %v653
  %v2933 = vunpack.c.l.b16 %v654
  %v2934 = vunpack.c.l.b16 %v655
  %v2935 = vunpack.c.l.b16 %v656
  %v2936 = vunpack.c.l.b16 %v657
  %v2937 = vunpack.c.l.b16 %v658
  %v2938 = vunpack.c.l.b16 %v659
  %v2939 = vunpack.c.l.b16 %v660
  %v2940 = vunpack.c.l.b16 %v661
  %v2941 = vunpack.c.l.b16 %v662
  %v2942 = vunpack.c.l.b16 %v663
  %v2943 = vunpack.c.l.b16 %v664
  %v2944 = vunpack.c.l.b16 %v665
  %v2945 = vunpack.c.l.b16 %v666
  %v2946 = vunpack.c.l.b16 %v667
  %v2947 = vunpack.c.l.b16 %v668
  %v2948 = vunpack.c.l.b16 %v669
  %v2949 = vunpack.c.l.b16 %v670
  %v2950 = vunpack.c.l.b16 %v671
  %v2951 = vunpack.c.l.b16 %v672
  %v2952 = vunpack.c.l.b16 %v673
  %v2953 = vunpack.c.l.b16 %v674
  %v2954 = vunpack.c.l.b16 %v675
  %v2955 = vunpack.c.l.b16 %v676
  %v2956 = vunpack.c.l.b16 %v677
  %v2957 = vunpack.c.l.b16 %v678
  %v2958 = vunpack.c.l.b16 %v679
  %v2959 = vunpack.c.l.b16 %v680
  %v2960 = vunpack.c.l.b16 %v681
  %v2961 = vunpack.c.l.b16 %v682
  %v2962 = vunpack.c.l.b16 %v683
  %v2963 = vunpack.c.l.b16 %v684
  %v2964 = vunpack.c.l.b16 %v685
  %v2965 = vunpack.c.l.b16 %v686
  %v2966 = vunpack.c.l.b16 %v687
  %v2967 = vunpack.c.l.b16 %v688
  %v2968 = vunpack.c.l.b16 %v689
  %v2969 = vunpack.c.l.b16 %v690
  %v2970 = vunpack.c.l.b16 %v691
  %v2971 = vunpack.c.l.b16 %v692
  %v2972 = vunpack.c.l.b16 %v693
  %v2973 = vunpack.c.l.b16 %v694
  %v2974 = vunpack.c.l.b16 %v695
  %v2975 = vunpack.c.l.b16 %v696
  %v2976 = vunpack.c.l.b16 %v697
  %v2977 = vunpack.c.l.b16 %v698
  %v2978 = vunpack.c.l.b16 %v699
  %v2979 = vunpack.c.l.b16 %v700
  %v2980 = vunpack.c.l.b16 %v701
  %v2981 = vunpack.c.l.b16 %v702
  %v2982 = vunpack.c.l.b16 %v703
  %v2983 = vunpack.c.l.b16 %v704
  %v2984 = vunpack.c.l.b16 %v705
  %v2985 = vunpack.c.l.b16 %v706
  %v2986 = vunpack.c.l.b16 %v707
  %v2987 = vunpack.c.l.b16 %v708
  %v2988 = vunpack.c.l.b16 %v709
  %v2989 = vunpack.c.l.b16 %v710
  %v2990 = vunpack.c.l.b16 %v711
  %v2991 = vunpack.c.l.b16 %v712
  %v2992 = vunpack.c.l.b16 %v713
  %v2993 = vunpack.c.l.b16 %v714
  %v2994 = vunpack.c.l.b16 %v715
  %v2995 = vunpack.c.l.b16 %v716
  %v2996 = vunpack.c.l.b16 %v717
  %v2997 = vunpack.c.l.b16 %v718
  %v2998 = vunpack.c.l.b16 %v719
  %v2999 = vunpack.c.l.b16 %v720
  %v3000 = vunpack.c.l.b16 %v721
  %v3001 = vunpack.c.l.b16 %v722
  %v3002 = vunpack.c.l.b16 %v723
  %v3003 = vunpack.c.l.b16 %v724
  %v3004 = vunpack.c.l.b16 %v725
  %v3005 = vunpack.c.l.b16 %v726
  %v3006 = vunpack.c.l.b16 %v727
  %v3007 = vunpack.c.l.b16 %v728
  %v3008 = vunpack.c.l.b16 %v729
  %v3009 = vunpack.c.l.b16 %v730
  %v3010 = vunpack.c.l.b16 %v731
  %v3011 = vunpack.c.l.b16 %v732
  %v3012 = vunpack.c.l.b16 %v733
  %v3013 = vunpack.c.l.b16 %v734
  %v3014 = vunpack.c.l.b16 %v735
  %v3015 = vunpack.c.l.b16 %v736
  %v3016 = vunpack.c.l.b16 %v737
  %v3017 = vunpack.c.l.b16 %v738
  %v3018 = vunpack.c.l.b16 %v739
  %v3019 = vunpack.c.l.b16 %v740
  %v3020 = vunpack.c.l.b16 %v741
  %v3021 = vunpack.c.l.b16 %v742
  %v3022 = vunpack.c.l.b16 %v743
  %v3023 = vunpack.c.l.b16 %v744
  %v3024 = vunpack.c.l.b16 %v745
  %v3025 = vunpack.c.l.b16 %v746
  %v3026 = vunpack.c.l.b16 %v747
  %v3027 = vunpack.c.l.b16 %v748
  %v3028 = vunpack.c.l.b16 %v749
  %v3029 = vunpack.c.l.b16 %v750
  %v3030 = vunpack.c.l.b16 %v751
  %v3031 = vunpack.c.l.b16 %v752
  %v3032 = vunpack.c.l.b16 %v753
  %v3033 = vunpack.c.l.b16 %v754
  %v3034 = vunpack.c.l.b16 %v755
  %v3035 = vunpack.c.l.b16 %v756
  %v3036 = vunpack.c.l.b16 %v757
  %v3037 = vunpack.c.l.b16 %v758
  %v3038 = vunpack.c.l.b16 %v759
  %v3039 = vunpack.c.l.b16 %v760
  %v3040 = vunpack.c.l.b16 %v761
  %v3041 = vunpack.c.l.b16 %v762
  %v3042 = vunpack.c.l.b16 %v763
  %v3043 = vunpack.c.l.b16 %v764
  %v3044 = vunpack.c.l.b16 %v765
  %v3045 = vunpack.c.l.b16 %v766
  %v3046 = vunpack.c.l.b16 %v767
  %v3047 = vunpack.c.l.b16 %v768
  %v3048 = vunpack.c.l.b16 %v769
  %v3049 = vunpack.c.l.b16 %v770
  %v3050 = vunpack.c.l.b16 %v771
  %v3051 = vunpack.c.l.b16 %v772
  %v3052 = vunpack.c.l.b16 %v773
  %v3053 = vunpack.c.l.b16 %v774
  %v3054 = vunpack.c.l.b16 %v775
  %v3055 = vunpack.c.l.b16 %v776
  %v3056 = vunpack.c.l.b16 %v777
  %v3057 = vunpack.c.l.b16 %v778
  %v3058 = vunpack.c.l.b16 %v779
  %v3059 = vunpack.c.l.b16 %v780
  %v3060 = vunpack.c.l.b16 %v781
  %v3061 = vunpack.c.l.b16 %v782
  %v3062 = vunpack.c.l.b16 %v783
  %v3063 = vunpack.c.l.b16 %v784
  %v3064 = vunpack.c.l.b16 %v785
  %v3065 = vunpack.c.l.b16 %v786
  %v3066 = vunpack.c.l.b16 %v787
  %v3067 = vunpack.c.l.b16 %v788
  %v3068 = vunpack.c.l.b16 %v789
  %v3069 = vunpack.c.l.b16 %v790
  %v3070 = vunpack.c.l.b16 %v791
  %v3071 = vunpack.c.l.b16 %v792
  %v3072 = vunpack.c.l.b16 %v793
  %v3073 = vunpack.c.l.b16 %v794
  %v3074 = vunpack.c.l.b16 %v795
  %v3075 = vunpack.c.l.b16 %v796
  %v3076 = vunpack.c.l.b16 %v797
  %v3077 = vunpack.c.l.b16 %v798
  %v3078 = vunpack.c.l.b16 %v799
  %v3079 = vunpack.c.l.b16 %v800
  %v3080 = vunpack.c.l.b16 %v801
  %v3081 = vunpack.c.l.b16 %v802
  %v3082 = vunpack.c.l.b16 %v803
  %v3083 = vunpack.c.l.b16 %v804
  %v3084 = vunpack.c.l.b16 %v805
  %v3085 = vunpack.c.l.b16 %v806
  %v3086 = vunpack.c.l.b16 %v807
  %v3087 = vunpack.c.l.b16 %v808
  %v3088 = vunpack.c.l.b16 %v809
  %v3089 = vunpack.c.l.b16 %v810
  %v3090 = vunpack.c.l.b16 %v811
  %v3091 = vunpack.c.l.b16 %v812
  %v3092 = vunpack.c.l.b16 %v813
  %v3093 = vunpack.c.l.b16 %v814
  %v3094 = vunpack.c.l.b16 %v815
  %v3095 = vunpack.c.l.b16 %v816
  %v3096 = vunpack.c.l.b16 %v817
  %v3097 = vunpack.c.l.b16 %v818
  %v3098 = vunpack.c.l.b16 %v819
  %v3099 = vunpack.c.l.b16 %v820
  %v3100 = vunpack.c.l.b16 %v821
  %v3101 = vunpack.c.l.b16 %v822
  %v3102 = vunpack.c.l.b16 %v823
  %v3103 = vunpack.c.l.b16 %v824
  %v3104 = vunpack.c.l.b16 %v825
  %v3105 = vunpack.c.l.b16 %v826
  %v3106 = vunpack.c.l.b16 %v827
  %v3107 = vunpack.c.l.b16 %v828
  %v3108 = vunpack.c.l.b16 %v829
  %v3109 = vunpack.c.l.b16 %v830
  %v3110 = vunpack.c.l.b16 %v831
  %v3111 = vunpack.c.l.b16 %v832
  %v3112 = vunpack.c.l.b16 %v833
  %v3113 = vunpack.c.l.b16 %v834
  %v3114 = vunpack.c.l.b16 %v835
  %v3115 = vunpack.c.l.b16 %v836
  %v3116 = vunpack.c.l.b16 %v837
  %v3117 = vunpack.c.l.b16 %v838
  %v3118 = vunpack.c.l.b16 %v839
  %v3119 = vunpack.c.l.b16 %v840
  %v3120 = vunpack.c.l.b16 %v841
  %v3121 = vunpack.c.l.b16 %v842
  %v3122 = vunpack.c.l.b16 %v843
  %v3123 = vunpack.c.l.b16 %v844
  %v3124 = vunpack.c.l.b16 %v845
  %v3125 = vunpack.c.l.b16 %v846
  %v3126 = vunpack.c.l.b16 %v847
  %v3127 = vunpack.c.l.b16 %v848
  %v3128 = vunpack.c.l.b16 %v849
  %v3129 = vunpack.c.l.b16 %v850
  %v3130 = vunpack.c.l.b16 %v851
  %v3131 = vunpack.c.l.b16 %v852
  %v3132 = vunpack.c.l.b16 %v853
  %v3133 = vunpack.c.l.b16 %v854
  %v3134 = vunpack.c.l.b16 %v855
  %v3135 = vunpack.c.l.b16 %v856
  %v3136 = vunpack.c.l.b16 %v857
  %v3137 = vunpack.c.l.b16 %v858
  %v3138 = vunpack.c.l.b16 %v859
  %v3139 = vunpack.c.l.b16 %v860
  %v3140 = vunpack.c.l.b16 %v861
  %v3141 = vunpack.c.l.b16 %v862
  %v3142 = vunpack.c.l.b16 %v863
  %v3143 = vunpack.c.l.b16 %v864
  %v3144 = vunpack.c.l.b16 %v865
  %v3145 = vunpack.c.l.b16 %v866
  %v3146 = vunpack.c.l.b16 %v867
  %v3147 = vunpack.c.l.b16 %v868
  %v3148 = vunpack.c.l.b16 %v869
  %v3149 = vunpack.c.l.b16 %v870
  %v3150 = vunpack.c.l.b16 %v871
  %v3151 = vunpack.c.l.b16 %v872
  %v3152 = vunpack.c.l.b16 %v873
  %v3153 = vunpack.c.l.b16 %v874
  %v3154 = vunpack.c.l.b16 %v875
  %v3155 = vunpack.c.l.b16 %v876
  %v3156 = vunpack.c.l.b16 %v877
  %v3157 = vunpack.c.l.b16 %v878
  %v3158 = vunpack.c.l.b16 %v879
  %v3159 = vunpack.c.l.b16 %v880
  %v3160 = vunpack.c.l.b16 %v881
  %v3161 = vunpack.c.l.b16 %v882
  %v3162 = vunpack.c.l.b16 %v883
  %v3163 = vunpack.c.l.b16 %v884
  %v3164 = vunpack.c.l.b16 %v885
  %v3165 = vunpack.c.l.b16 %v886
  %v3166 = vunpack.c.l.b16 %v887
  %v3167 = vunpack.c.l.b16 %v888
  %v3168 = vunpack.c.l.b16 %v889
  %v3169 = vunpack.c.l.b16 %v890
  %v3170 = vunpack.c.l.b16 %v891
  %v3171 = vunpack.c.l.b16 %v892
  %v3172 = vunpack.c.l.b16 %v893
  %v3173 = vunpack.c.l.b16 %v894
  %v3174 = vunpack.c.l.b16 %v895
  %v3175 = vunpack.c.l.b16 %v896
  %v3176 = vunpack.c.l.b16 %v897
  %v3177 = vunpack.c.l.b16 %v898
  %v3178 = vunpack.c.l.b16 %v899
  %v3179 = vunpack.c.l.b16 %v900
  %v3180 = vunpack.c.l.b16 %v901
  %v3181 = vunpack.c.l.b16 %v902
  %v3182 = vunpack.c.l.b16 %v903
  %v3183 = vunpack.c.l.b16 %v904
  %v3184 = vunpack.c.l.b16 %v905
  %v3185 = vunpack.c.l.b16 %v906
  %v3186 = vunpack.c.l.b16 %v907
  %v3187 = vunpack.c.l.b16 %v908
  %v3188 = vunpack.c.l.b16 %v909
  %v3189 = vunpack.c.l.b16 %v910
  %v3190 = vunpack.c.l.b16 %v911
  %v3191 = vunpack.c.l.b16 %v912
  %v3192 = vunpack.c.l.b16 %v913
  %v3193 = vunpack.c.l.b16 %v914
  %v3194 = vunpack.c.l.b16 %v915
  %v3195 = vunpack.c.l.b16 %v916
  %v3196 = vunpack.c.l.b16 %v917
  %v3197 = vunpack.c.l.b16 %v918
  %v3198 = vunpack.c.l.b16 %v919
  %v3199 = vunpack.c.l.b16 %v920
  %v3200 = vunpack.c.l.b16 %v921
  %v3201 = vunpack.c.l.b16 %v922
  %v3202 = vunpack.c.l.b16 %v923
  %v3203 = vunpack.c.l.b16 %v924
  %v3204 = vunpack.c.l.b16 %v925
  %v3205 = vunpack.c.l.b16 %v926
  %v3206 = vunpack.c.l.b16 %v927
  %v3207 = vunpack.c.l.b16 %v928
  %v3208 = vunpack.c.l.b16 %v929
  %v3209 = vunpack.c.l.b16 %v930
  %v3210 = vunpack.c.l.b16 %v931
  %v3211 = vunpack.c.l.b16 %v932
  %v3212 = vunpack.c.l.b16 %v933
  %v3213 = vunpack.c.l.b16 %v934
  %v3214 = vunpack.c.l.b16 %v935
  %v3215 = vunpack.c.l.b16 %v936
  %v3216 = vunpack.c.l.b16 %v937
  %v3217 = vunpack.c.l.b16 %v938
  %v3218 = vunpack.c.l.b16 %v939
  %v3219 = vunpack.c.l.b16 %v940
  %v3220 = vunpack.c.l.b16 %v941
  %v3221 = vunpack.c.l.b16 %v942
  %v3222 = vunpack.c.l.b16 %v943
  %v3223 = vunpack.c.l.b16 %v944
  %v3224 = vunpack.c.l.b16 %v945
  %v3225 = vunpack.c.l.b16 %v946
  %v3226 = vunpack.c.l.b16 %v947
  %v3227 = vunpack.c.l.b16 %v948
  %v3228 = vunpack.c.l.b16 %v949
  %v3229 = vunpack.c.l.b16 %v950
  %v3230 = vunpack.c.l.b16 %v951
  %v3231 = vunpack.c.l.b16 %v952
  %v3232 = vunpack.c.l.b16 %v953
  %v3233 = vunpack.c.l.b16 %v954
  %v3234 = vunpack.c.l.b16 %v955
  %v3235 = vunpack.c.l.b16 %v956
  %v3236 = vunpack.c.l.b16 %v957
  %v3237 = vunpack.c.l.b16 %v958
  %v3238 = vunpack.c.l.b16 %v959
  %v3239 = vunpack.c.l.b16 %v960
  %v3240 = vunpack.c.l.b16 %v961
  %v3241 = vunpack.c.l.b16 %v962
  %v3242 = vunpack.c.l.b16 %v963
  %v3243 = vunpack.c.l.b16 %v964
  %v3244 = vunpack.c.l.b16 %v965
  %v3245 = vunpack.c.l.b16 %v966
  %v3246 = vunpack.c.l.b16 %v967
  %v3247 = vunpack.c.l.b16 %v968
  %v3248 = vunpack.c.l.b16 %v969
  %v3249 = vunpack.c.l.b16 %v970
  %v3250 = vunpack.c.l.b16 %v971
  %v3251 = vunpack.c.l.b16 %v972
  %v3252 = vunpack.c.l.b16 %v973
  %v3253 = vunpack.c.l.b16 %v974
  %v3254 = vunpack.c.l.b16 %v975
  %v3255 = vunpack.c.l.b16 %v976
  %v3256 = vunpack.c.l.b16 %v977
  %v3257 = vunpack.c.l.b16 %v978
  %v3258 = vunpack.c.l.b16 %v979
  %v3259 = vunpack.c.l.b16 %v980
  %v3260 = vunpack.c.l.b16 %v981
  %v3261 = vunpack.c.l.b16 %v982
  %v3262 = vunpack.c.l.b16 %v983
  %v3263 = vunpack.c.l.b16 %v984
  %v3264 = vunpack.c.l.b16 %v985
  %v3265 = vunpack.c.l.b16 %v986
  %v3266 = vunpack.c.l.b16 %v987
  %v3267 = vunpack.c.l.b16 %v988
  %v3268 = vunpack.c.l.b16 %v989
  %v3269 = vunpack.c.l.b16 %v990
  %v3270 = vunpack.c.l.b16 %v991
  %v3271 = vunpack.c.l.b16 %v992
  %v3272 = vunpack.c.l.b16 %v993
  %v3273 = vunpack.c.l.b16 %v994
  %v3274 = vunpack.c.l.b16 %v995
  %v3275 = vunpack.c.l.b16 %v996
  %v3276 = vunpack.c.l.b16 %v997
  %v3277 = vunpack.c.l.b16 %v998
  %v3278 = vunpack.c.l.b16 %v999
  %v3279 = vunpack.c.l.b16 %v1000
  %v3280 = vunpack.c.l.b16 %v1001
  %v3281 = vunpack.c.l.b16 %v1002
  %v3282 = vunpack.c.l.b16 %v1003
  %v3283 = vunpack.c.l.b16 %v1004
  %v3284 = vunpack.c.l.b16 %v1005
  %v3285 = vunpack.c.l.b16 %v1006
  %v3286 = vunpack.c.l.b16 %v1007
  %v3287 = vunpack.c.l.b16 %v1008
  %v3288 = vunpack.c.l.b16 %v1009
  %v3289 = vunpack.c.l.b16 %v1010
  %v3290 = vunpack.c.l.b16 %v1011
  %v3291 = vunpack.c.l.b16 %v1012
  %v3292 = vunpack.c.l.b16 %v1013
  %v3293 = vunpack.c.l.b16 %v1014
  %v3294 = vunpack.c.l.b16 %v1015
  %v3295 = vunpack.c.l.b16 %v1016
  %v3296 = vunpack.c.l.b16 %v1017
  %v3297 = vunpack.c.l.b16 %v1018
  %v3298 = vunpack.c.l.b16 %v1019
  %v3299 = vunpack.c.l.b16 %v1020
  %v3300 = vunpack.c.l.b16 %v1021
  %v3301 = vunpack.c.l.b16 %v1022
  %v3302 = vunpack.c.l.b16 %v1023
  %v3303 = vunpack.c.l.b16 %v1024
  %v3304 = vunpack.c.l.b16 %v1025
  %v3305 = vunpack.c.l.b16 %v1026
  %v3306 = vunpack.c.l.b16 %v1027
  %v3307 = vunpack.c.l.b16 %v1028
  %v3308 = vunpack.c.l.b16 %v1029
  %v3309 = vunpack.c.l.b16 %v1030
  %v3310 = vunpack.c.l.b16 %v1031
  %v3311 = vunpack.c.l.b16 %v1032
  %v3312 = vunpack.c.l.b16 %v1033
  %v3313 = vunpack.c.l.b16 %v1034
  %v3314 = vunpack.c.l.b16 %v1035
  %v3315 = vunpack.c.l.b16 %v1036
  %v3316 = vunpack.c.l.b16 %v1037
  %v3317 = vunpack.c.l.b16 %v1038
  %v3318 = vunpack.c.l.b16 %v1039
  %v3319 = vunpack.c.l.b16 %v1040
  %v3320 = vunpack.c.l.b16 %v1041
  %v3321 = vunpack.c.l.b16 %v1042
  %v3322 = vunpack.c.l.b16 %v1043
  %v3323 = vunpack.c.l.b16 %v1044
  %v3324 = vunpack.c.l.b16 %v1045
  %v3325 = vunpack.c.l.b16 %v1046
  %v3326 = vunpack.c.l.b16 %v1047
  %v3327 = vunpack.c.l.b16 %v1048
  %v3328 = vunpack.c.l.b16 %v1049
  %v3329 = vunpack.c.l.b16 %v1050
  %v3330 = vunpack.c.l.b16 %v1051
  %v3331 = vunpack.c.l.b16 %v1052
  %v3332 = vunpack.c.l.b16 %v1053
  %v3333 = vunpack.c.l.b16 %v1054
  %v3334 = vunpack.c.l.b16 %v1055
  %v3335 = vunpack.c.l.b16 %v1056
  %v3336 = vunpack.c.l.b16 %v1057
  %v3337 = vunpack.c.l.b16 %v1058
  %v3338 = vunpack.c.l.b16 %v1059
  %v3339 = vunpack.c.l.b16 %v1060
  %v3340 = vunpack.c.l.b16 %v1061
  %v3341 = vunpack.c.l.b16 %v1062
  %v3342 = vunpack.c.l.b16 %v1063
  %v3343 = vunpack.c.l.b16 %v1064
  %v3344 = vunpack.c.l.b16 %v1065
  %v3345 = vunpack.c.l.b16 %v1066
  %v3346 = vunpack.c.l.b16 %v1067
  %v3347 = vunpack.c.l.b16 %v1068
  %v3348 = vunpack.c.l.b16 %v1069
  %v3349 = vunpack.c.l.b16 %v1070
  %v3350 = vunpack.c.l.b16 %v1071
  %v3351 = vunpack.c.l.b16 %v1072
  %v3352 = vunpack.c.l.b16 %v1073
  %v3353 = vunpack.c.l.b16 %v1074
  %v3354 = vunpack.c.l.b16 %v1075
  %v3355 = vunpack.c.l.b16 %v1076
  %v3356 = vunpack.c.l.b16 %v1077
  %v3357 = vunpack.c.l.b16 %v1078
  %v3358 = vunpack.c.l.b16 %v1079
  %v3359 = vunpack.c.l.b16 %v1080
  %v3360 = vunpack.c.l.b16 %v1081
  %v3361 = vunpack.c.l.b16 %v1082
  %v3362 = vunpack.c.l.b16 %v1083
  %v3363 = vunpack.c.l.b16 %v1084
  %v3364 = vunpack.c.l.b16 %v1085
  %v3365 = vunpack.c.l.b16 %v1086
  %v3366 = vunpack.c.l.b16 %v1087
  %v3367 = vunpack.c.l.b16 %v1088
  %v3368 = vpack.c.b16 %v2345, %v2344
  %v3369 = vpack.c.b16 %v2347, %v2346
  %v3370 = vpack.c.b16 %v2349, %v2348
  %v3371 = vpack.c.b16 %v2351, %v2350
  %v3372 = vpack.c.b16 %v2353, %v2352
  %v3373 = vpack.c.b16 %v2355, %v2354
  %v3374 = vpack.c.b16 %v2357, %v2356
  %v3375 = vpack.c.b16 %v2359, %v2358
  %v3376 = vpack.c.b16 %v2361, %v2360
  %v3377 = vpack.c.b16 %v2363, %v2362
  %v3378 = vpack.c.b16 %v2365, %v2364
  %v3379 = vpack.c.b16 %v2367, %v2366
  %v3380 = vpack.c.b16 %v2369, %v2368
  %v3381 = vpack.c.b16 %v2371, %v2370
  %v3382 = vpack.c.b16 %v2373, %v2372
  %v3383 = vpack.c.b16 %v2375, %v2374
  %v3384 = vpack.c.b16 %v2377, %v2376
  %v3385 = vpack.c.b16 %v2379, %v2378
  %v3386 = vpack.c.b16 %v2381, %v2380
  %v3387 = vpack.c.b16 %v2383, %v2382
  %v3388 = vpack.c.b16 %v2385, %v2384
  %v3389 = vpack.c.b16 %v2387, %v2386
  %v3390 = vpack.c.b16 %v2389, %v2388
  %v3391 = vpack.c.b16 %v2391, %v2390
  %v3392 = vpack.c.b16 %v2393, %v2392
  %v3393 = vpack.c.b16 %v2395, %v2394
  %v3394 = vpack.c.b16 %v2397, %v2396
  %v3395 = vpack.c.b16 %v2399, %v2398
  %v3396 = vpack.c.b16 %v2401, %v2400
  %v3397 = vpack.c.b16 %v2403, %v2402
  %v3398 = vpack.c.b16 %v2405, %v2404
  %v3399 = vpack.c.b16 %v2407, %v2406
  %v3400 = vpack.c.b16 %v2409, %v2408
  %v3401 = vpack.c.b16 %v2411, %v2410
  %v3402 = vpack.c.b16 %v2413, %v2412
  %v3403 = vpack.c.b16 %v2415, %v2414
  %v3404 = vpack.c.b16 %v2417, %v2416
  %v3405 = vpack.c.b16 %v2419, %v2418
  %v3406 = vpack.c.b16 %v2421, %v2420
  %v3407 = vpack.c.b16 %v2423, %v2422
  %v3408 = vpack.c.b16 %v2425, %v2424
  %v3409 = vpack.c.b16 %v2427, %v2426
  %v3410 = vpack.c.b16 %v2429, %v2428
  %v3411 = vpack.c.b16 %v2431, %v2430
  %v3412 = vpack.c.b16 %v2433, %v2432
  %v3413 = vpack.c.b16 %v2435, %v2434
  %v3414 = vpack.c.b16 %v2437, %v2436
  %v3415 = vpack.c.b16 %v2439, %v2438
  %v3416 = vpack.c.b16 %v2441, %v2440
  %v3417 = vpack.c.b16 %v2443, %v2442
  %v3418 = vpack.c.b16 %v2445, %v2444
  %v3419 = vpack.c.b16 %v2447, %v2446
  %v3420 = vpack.c.b16 %v2449, %v2448
  %v3421 = vpack.c.b16 %v2451, %v2450
  %v3422 = vpack.c.b16 %v2453, %v2452
  %v3423 = vpack.c.b16 %v2455, %v2454
  %v3424 = vpack.c.b16 %v2457, %v2456
  %v3425 = vpack.c.b16 %v2459, %v2458
  %v3426 = vpack.c.b16 %v2461, %v2460
  %v3427 = vpack.c.b16 %v2463, %v2462
  %v3428 = vpack.c.b16 %v2465, %v2464
  %v3429 = vpack.c.b16 %v2467, %v2466
  %v3430 = vpack.c.b16 %v2469, %v2468
  %v3431 = vpack.c.b16 %v2471, %v2470
  %v3432 = vpack.c.b16 %v2473, %v2472
  %v3433 = vpack.c.b16 %v2475, %v2474
  %v3434 = vpack.c.b16 %v2477, %v2476
  %v3435 = vpack.c.b16 %v2479, %v2478
  %v3436 = vpack.c.b16 %v2481, %v2480
  %v3437 = vpack.c.b16 %v2483, %v2482
  %v3438 = vpack.c.b16 %v2485, %v2484
  %v3439 = vpack.c.b16 %v2487, %v2486
  %v3440 = vpack.c.b16 %v2489, %v2488
  %v3441 = vpack.c.b16 %v2491, %v2490
  %v3442 = vpack.c.b16 %v2493, %v2492
  %v3443 = vpack.c.b16 %v2495, %v2494
  %v3444 = vpack.c.b16 %v2497, %v2496
  %v3445 = vpack.c.b16 %v2499, %v2498
  %v3446 = vpack.c.b16 %v2501, %v2500
  %v3447 = vpack.c.b16 %v2503, %v2502
  %v3448 = vpack.c.b16 %v2505, %v2504
  %v3449 = vpack.c.b16 %v2507, %v2506
  %v3450 = vpack.c.b16 %v2509, %v2508
  %v3451 = vpack.c.b16 %v2511, %v2510
  %v3452 = vpack.c.b16 %v2513, %v2512
  %v3453 = vpack.c.b16 %v2515, %v2514
  %v3454 = vpack.c.b16 %v2517, %v2516
  %v3455 = vpack.c.b16 %v2519, %v2518
  %v3456 = vpack.c.b16 %v2521, %v2520
  %v3457 = vpack.c.b16 %v2523, %v2522
  %v3458 = vpack.c.b16 %v2525, %v2524
  %v3459 = vpack.c.b16 %v2527, %v2526
  %v3460 = vpack.c.b16 %v2529, %v2528
  %v3461 = vpack.c.b16 %v2531, %v2530
  %v3462 = vpack.c.b16 %v2533, %v2532
  %v3463 = vpack.c.b16 %v2535, %v2534
  %v3464 = vpack.c.b16 %v2537, %v2536
  %v3465 = vpack.c.b16 %v2539, %v2538
  %v3466 = vpack.c.b16 %v2541, %v2540
  %v3467 = vpack.c.b16 %v2543, %v2542
  %v3468 = vpack.c.b16 %v2545, %v2544
  %v3469 = vpack.c.b16 %v2547, %v2546
  %v3470 = vpack.c.b16 %v2549, %v2548
  %v3471 = vpack.c.b16 %v2551, %v2550
  %v3472 = vpack.c.b16 %v2553, %v2552
  %v3473 = vpack.c.b16 %v2555, %v2554
  %v3474 = vpack.c.b16 %v2557, %v2556
  %v3475 = vpack.c.b16 %v2559, %v2558
  %v3476 = vpack.c.b16 %v2561, %v2560
  %v3477 = vpack.c.b16 %v2563, %v2562
  %v3478 = vpack.c.b16 %v2565, %v2564
  %v3479 = vpack.c.b16 %v2567, %v2566
  %v3480 = vpack.c.b16 %v2569, %v2568
  %v3481 = vpack.c.b16 %v2571, %v2570
  %v3482 = vpack.c.b16 %v2573, %v2572
  %v3483 = vpack.c.b16 %v2575, %v2574
  %v3484 = vpack.c.b16 %v2577, %v2576
  %v3485 = vpack.c.b16 %v2579, %v2578
  %v3486 = vpack.c.b16 %v2581, %v2580
  %v3487 = vpack.c.b16 %v2583, %v2582
  %v3488 = vpack.c.b16 %v2585, %v2584
  %v3489 = vpack.c.b16 %v2587, %v2586
  %v3490 = vpack.c.b16 %v2589, %v2588
  %v3491 = vpack.c.b16 %v2591, %v2590
  %v3492 = vpack.c.b16 %v2593, %v2592
  %v3493 = vpack.c.b16 %v2595, %v2594
  %v3494 = vpack.c.b16 %v2597, %v2596
  %v3495 = vpack.c.b16 %v2599, %v2598
  %v3496 = vpack.c.b16 %v2601, %v2600
  %v3497 = vpack.c.b16 %v2603, %v2602
  %v3498 = vpack.c.b16 %v2605, %v2604
  %v3499 = vpack.c.b16 %v2607, %v2606
  %v3500 = vpack.c.b16 %v2609, %v2608
  %v3501 = vpack.c.b16 %v2611, %v2610
  %v3502 = vpack.c.b16 %v2613, %v2612
  %v3503 = vpack.c.b16 %v2615, %v2614
  %v3504 = vpack.c.b16 %v2617, %v2616
  %v3505 = vpack.c.b16 %v2619, %v2618
  %v3506 = vpack.c.b16 %v2621, %v2620
  %v3507 = vpack.c.b16 %v2623, %v2622
  %v3508 = vpack.c.b16 %v2625, %v2624
  %v3509 = vpack.c.b16 %v2627, %v2626
  %v3510 = vpack.c.b16 %v2629, %v2628
  %v3511 = vpack.c.b16 %v2631, %v2630
  %v3512 = vpack.c.b16 %v2633, %v2632
  %v3513 = vpack.c.b16 %v2635, %v2634
  %v3514 = vpack.c.b16 %v2637, %v2636
  %v3515 = vpack.c.b16 %v2639, %v2638
  %v3516 = vpack.c.b16 %v2641, %v2640
  %v3517 = vpack.c.b16 %v2643, %v2642
  %v3518 = vpack.c.b16 %v2645, %v2644
  %v3519 = vpack.c.b16 %v2647, %v2646
  %v3520 = vpack.c.b16 %v2649, %v2648
  %v3521 = vpack.c.b16 %v2651, %v2650
  %v3522 = vpack.c.b16 %v2653, %v2652
  %v3523 = vpack.c.b16 %v2655, %v2654
  %v3524 = vpack.c.b16 %v2657, %v2656
  %v3525 = vpack.c.b16 %v2659, %v2658
  %v3526 = vpack.c.b16 %v2661, %v2660
  %v3527 = vpack.c.b16 %v2663, %v2662
  %v3528 = vpack.c.b16 %v2665, %v2664
  %v3529 = vpack.c.b16 %v2667, %v2666
  %v3530 = vpack.c.b16 %v2669, %v2668
  %v3531 = vpack.c.b16 %v2671, %v2670
  %v3532 = vpack.c.b16 %v2673, %v2672
  %v3533 = vpack.c.b16 %v2675, %v2674
  %v3534 = vpack.c.b16 %v2677, %v2676
  %v3535 = vpack.c.b16 %v2679, %v2678
  %v3536 = vpack.c.b16 %v2681, %v2680
  %v3537 = vpack.c.b16 %v2683, %v2682
  %v3538 = vpack.c.b16 %v2685, %v2684
  %v3539 = vpack.c.b16 %v2687, %v2686
  %v3540 = vpack.c.b16 %v2689, %v2688
  %v3541 = vpack.c.b16 %v2691, %v2690
  %v3542 = vpack.c.b16 %v2693, %v2692
  %v3543 = vpack.c.b16 %v2695, %v2694
  %v3544 = vpack.c.b16 %v2697, %v2696
  %v3545 = vpack.c.b16 %v2699, %v2698
  %v3546 = vpack.c.b16 %v2701, %v2700
  %v3547 = vpack.c.b16 %v2703, %v2702
  %v3548 = vpack.c.b16 %v2705, %v2704
  %v3549 = vpack.c.b16 %v2707, %v2706
  %v3550 = vpack.c.b16 %v2709, %v2708
  %v3551 = vpack.c.b16 %v2711, %v2710
  %v3552 = vpack.c.b16 %v2713, %v2712
  %v3553 = vpack.c.b16 %v2715, %v2714
  %v3554 = vpack.c.b16 %v2717, %v2716
  %v3555 = vpack.c.b16 %v2719, %v2718
  %v3556 = vpack.c.b16 %v2721, %v2720
  %v3557 = vpack.c.b16 %v2723, %v2722
  %v3558 = vpack.c.b16 %v2725, %v2724
  %v3559 = vpack.c.b16 %v2727, %v2726
  %v3560 = vpack.c.b16 %v2729, %v2728
  %v3561 = vpack.c.b16 %v2731, %v2730
  %v3562 = vpack.c.b16 %v2733, %v2732
  %v3563 = vpack.c.b16 %v2735, %v2734
  %v3564 = vpack.c.b16 %v2737, %v2736
  %v3565 = vpack.c.b16 %v2739, %v2738
  %v3566 = vpack.c.b16 %v2741, %v2740
  %v3567 = vpack.c.b16 %v2743, %v2742
  %v3568 = vpack.c.b16 %v2745, %v2744
  %v3569 = vpack.c.b16 %v2747, %v2746
  %v3570 = vpack.c.b16 %v2749, %v2748
  %v3571 = vpack.c.b16 %v2751, %v2750
  %v3572 = vpack.c.b16 %v2753, %v2752
  %v3573 = vpack.c.b16 %v2755, %v2754
  %v3574 = vpack.c.b16 %v2757, %v2756
  %v3575 = vpack.c.b16 %v2759, %v2758
  %v3576 = vpack.c.b16 %v2761, %v2760
  %v3577 = vpack.c.b16 %v2763, %v2762
  %v3578 = vpack.c.b16 %v2765, %v2764
  %v3579 = vpack.c.b16 %v2767, %v2766
  %v3580 = vpack.c.b16 %v2769, %v2768
  %v3581 = vpack.c.b16 %v2771, %v2770
  %v3582 = vpack.c.b16 %v2773, %v2772
  %v3583 = vpack.c.b16 %v2775, %v2774
  %v3584 = vpack.c.b16 %v2777, %v2776
  %v3585 = vpack.c.b16 %v2779, %v2778
  %v3586 = vpack.c.b16 %v2781, %v2780
  %v3587 = vpack.c.b16 %v2783, %v2782
  %v3588 = vpack.c.b16 %v2785, %v2784
  %v3589 = vpack.c.b16 %v2787, %v2786
  %v3590 = vpack.c.b16 %v2789, %v2788
  %v3591 = vpack.c.b16 %v2791, %v2790
  %v3592 = vpack.c.b16 %v2793, %v2792
  %v3593 = vpack.c.b16 %v2795, %v2794
  %v3594 = vpack.c.b16 %v2797, %v2796
  %v3595 = vpack.c.b16 %v2799, %v2798
  %v3596 = vpack.c.b16 %v2801, %v2800
  %v3597 = vpack.c.b16 %v2803, %v2802
  %v3598 = vpack.c.b16 %v2805, %v2804
  %v3599 = vpack.c.b16 %v2807, %v2806
  %v3600 = vpack.c.b16 %v2809, %v2808
  %v3601 = vpack.c.b16 %v2811, %v2810
  %v3602 = vpack.c.b16 %v2813, %v2812
  %v3603 = vpack.c.b16 %v2815, %v2814
  %v3604 = vpack.c.b16 %v2817, %v2816
  %v3605 = vpack.c.b16 %v2819, %v2818
  %v3606 = vpack.c.b16 %v2821, %v2820
  %v3607 = vpack.c.b16 %v2823, %v2822
  %v3608 = vpack.c.b16 %v2825, %v2824
  %v3609 = vpack.c.b16 %v2827, %v2826
  %v3610 = vpack.c.b16 %v2829, %v2828
  %v3611 = vpack.c.b16 %v2831, %v2830
  %v3612 = vpack.c.b16 %v2833, %v2832
  %v3613 = vpack.c.b16 %v2835, %v2834
  %v3614 = vpack.c.b16 %v2837, %v2836
  %v3615 = vpack.c.b16 %v2839, %v2838
  %v3616 = vpack.c.b16 %v2841, %v2840
  %v3617 = vpack.c.b16 %v2843, %v2842
  %v3618 = vpack.c.b16 %v2845, %v2844
  %v3619 = vpack.c.b16 %v2847, %v2846
  %v3620 = vpack.c.b16 %v2849, %v2848
  %v3621 = vpack.c.b16 %v2851, %v2850
  %v3622 = vpack.c.b16 %v2853, %v2852
  %v3623 = vpack.c.b16 %v2855, %v2854
  %v3624 = vpack.c.b16 %v2857, %v2856
  %v3625 = vpack.c.b16 %v2859, %v2858
  %v3626 = vpack.c.b16 %v2861, %v2860
  %v3627 = vpack.c.b16 %v2863, %v2862
  %v3628 = vpack.c.b16 %v2865, %v2864
  %v3629 = vpack.c.b16 %v2867, %v2866
  %v3630 = vpack.c.b16 %v2869, %v2868
  %v3631 = vpack.c.b16 %v2871, %v2870
  %v3632 = vpack.c.b16 %v2873, %v2872
  %v3633 = vpack.c.b16 %v2875, %v2874
  %v3634 = vpack.c.b16 %v2877, %v2876
  %v3635 = vpack.c.b16 %v2879, %v2878
  %v3636 = vpack.c.b16 %v2881, %v2880
  %v3637 = vpack.c.b16 %v2883, %v2882
  %v3638 = vpack.c.b16 %v2885, %v2884
  %v3639 = vpack.c.b16 %v2887, %v2886
  %v3640 = vpack.c.b16 %v2889, %v2888
  %v3641 = vpack.c.b16 %v2891, %v2890
  %v3642 = vpack.c.b16 %v2893, %v2892
  %v3643 = vpack.c.b16 %v2895, %v2894
  %v3644 = vpack.c.b16 %v2897, %v2896
  %v3645 = vpack.c.b16 %v2899, %v2898
  %v3646 = vpack.c.b16 %v2901, %v2900
  %v3647 = vpack.c.b16 %v2903, %v2902
  %v3648 = vpack.c.b16 %v2905, %v2904
  %v3649 = vpack.c.b16 %v2907, %v2906
  %v3650 = vpack.c.b16 %v2909, %v2908
  %v3651 = vpack.c.b16 %v2911, %v2910
  %v3652 = vpack.c.b16 %v2913, %v2912
  %v3653 = vpack.c.b16 %v2915, %v2914
  %v3654 = vpack.c.b16 %v2917, %v2916
  %v3655 = vpack.c.b16 %v2919, %v2918
  %v3656 = vpack.c.b16 %v2921, %v2920
  %v3657 = vpack.c.b16 %v2923, %v2922
  %v3658 = vpack.c.b16 %v2925, %v2924
  %v3659 = vpack.c.b16 %v2927, %v2926
  %v3660 = vpack.c.b16 %v2929, %v2928
  %v3661 = vpack.c.b16 %v2931, %v2930
  %v3662 = vpack.c.b16 %v2933, %v2932
  %v3663 = vpack.c.b16 %v2935, %v2934
  %v3664 = vpack.c.b16 %v2937, %v2936
  %v3665 = vpack.c.b16 %v2939, %v2938
  %v3666 = vpack.c.b16 %v2941, %v2940
  %v3667 = vpack.c.b16 %v2943, %v2942
  %v3668 = vpack.c.b16 %v2945, %v2944
  %v3669 = vpack.c.b16 %v2947, %v2946
  %v3670 = vpack.c.b16 %v2949, %v2948
  %v3671 = vpack.c.b16 %v2951, %v2950
  %v3672 = vpack.c.b16 %v2953, %v2952
  %v3673 = vpack.c.b16 %v2955, %v2954
  %v3674 = vpack.c.b16 %v2957, %v2956
  %v3675 = vpack.c.b16 %v2959, %v2958
  %v3676 = vpack.c.b16 %v2961, %v2960
  %v3677 = vpack.c.b16 %v2963, %v2962
  %v3678 = vpack.c.b16 %v2965, %v2964
  %v3679 = vpack.c.b16 %v2967, %v2966
  %v3680 = vpack.c.b16 %v2969, %v2968
  %v3681 = vpack.c.b16 %v2971, %v2970
  %v3682 = vpack.c.b16 %v2973, %v2972
  %v3683 = vpack.c.b16 %v2975, %v2974
  %v3684 = vpack.c.b16 %v2977, %v2976
  %v3685 = vpack.c.b16 %v2979, %v2978
  %v3686 = vpack.c.b16 %v2981, %v2980
  %v3687 = vpack.c.b16 %v2983, %v2982
  %v3688 = vpack.c.b16 %v2985, %v2984
  %v3689 = vpack.c.b16 %v2987, %v2986
  %v3690 = vpack.c.b16 %v2989, %v2988
  %v3691 = vpack.c.b16 %v2991, %v2990
  %v3692 = vpack.c.b16 %v2993, %v2992
  %v3693 = vpack.c.b16 %v2995, %v2994
  %v3694 = vpack.c.b16 %v2997, %v2996
  %v3695 = vpack.c.b16 %v2999, %v2998
  %v3696 = vpack.c.b16 %v3001, %v3000
  %v3697 = vpack.c.b16 %v3003, %v3002
  %v3698 = vpack.c.b16 %v3005, %v3004
  %v3699 = vpack.c.b16 %v3007, %v3006
  %v3700 = vpack.c.b16 %v3009, %v3008
  %v3701 = vpack.c.b16 %v3011, %v3010
  %v3702 = vpack.c.b16 %v3013, %v3012
  %v3703 = vpack.c.b16 %v3015, %v3014
  %v3704 = vpack.c.b16 %v3017, %v3016
  %v3705 = vpack.c.b16 %v3019, %v3018
  %v3706 = vpack.c.b16 %v3021, %v3020
  %v3707 = vpack.c.b16 %v3023, %v3022
  %v3708 = vpack.c.b16 %v3025, %v3024
  %v3709 = vpack.c.b16 %v3027, %v3026
  %v3710 = vpack.c.b16 %v3029, %v3028
  %v3711 = vpack.c.b16 %v3031, %v3030
  %v3712 = vpack.c.b16 %v3033, %v3032
  %v3713 = vpack.c.b16 %v3035, %v3034
  %v3714 = vpack.c.b16 %v3037, %v3036
  %v3715 = vpack.c.b16 %v3039, %v3038
  %v3716 = vpack.c.b16 %v3041, %v3040
  %v3717 = vpack.c.b16 %v3043, %v3042
  %v3718 = vpack.c.b16 %v3045, %v3044
  %v3719 = vpack.c.b16 %v3047, %v3046
  %v3720 = vpack.c.b16 %v3049, %v3048
  %v3721 = vpack.c.b16 %v3051, %v3050
  %v3722 = vpack.c.b16 %v3053, %v3052
  %v3723 = vpack.c.b16 %v3055, %v3054
  %v3724 = vpack.c.b16 %v3057, %v3056
  %v3725 = vpack.c.b16 %v3059, %v3058
  %v3726 = vpack.c.b16 %v3061, %v3060
  %v3727 = vpack.c.b16 %v3063, %v3062
  %v3728 = vpack.c.b16 %v3065, %v3064
  %v3729 = vpack.c.b16 %v3067, %v3066
  %v3730 = vpack.c.b16 %v3069, %v3068
  %v3731 = vpack.c.b16 %v3071, %v3070
  %v3732 = vpack.c.b16 %v3073, %v3072
  %v3733 = vpack.c.b16 %v3075, %v3074
  %v3734 = vpack.c.b16 %v3077, %v3076
  %v3735 = vpack.c.b16 %v3079, %v3078
  %v3736 = vpack.c.b16 %v3081, %v3080
  %v3737 = vpack.c.b16 %v3083, %v3082
  %v3738 = vpack.c.b16 %v3085, %v3084
  %v3739 = vpack.c.b16 %v3087, %v3086
  %v3740 = vpack.c.b16 %v3089, %v3088
  %v3741 = vpack.c.b16 %v3091, %v3090
  %v3742 = vpack.c.b16 %v3093, %v3092
  %v3743 = vpack.c.b16 %v3095, %v3094
  %v3744 = vpack.c.b16 %v3097, %v3096
  %v3745 = vpack.c.b16 %v3099, %v3098
  %v3746 = vpack.c.b16 %v3101, %v3100
  %v3747 = vpack.c.b16 %v3103, %v3102
  %v3748 = vpack.c.b16 %v3105, %v3104
  %v3749 = vpack.c.b16 %v3107, %v3106
  %v3750 = vpack.c.b16 %v3109, %v3108
  %v3751 = vpack.c.b16 %v3111, %v3110
  %v3752 = vpack.c.b16 %v3113, %v3112
  %v3753 = vpack.c.b16 %v3115, %v3114
  %v3754 = vpack.c.b16 %v3117, %v3116
  %v3755 = vpack.c.b16 %v3119, %v3118
  %v3756 = vpack.c.b16 %v3121, %v3120
  %v3757 = vpack.c.b16 %v3123, %v3122
  %v3758 = vpack.c.b16 %v3125, %v3124
  %v3759 = vpack.c.b16 %v3127, %v3126
  %v3760 = vpack.c.b16 %v3129, %v3128
  %v3761 = vpack.c.b16 %v3131, %v3130
  %v3762 = vpack.c.b16 %v3133, %v3132
  %v3763 = vpack.c.b16 %v3135, %v3134
  %v3764 = vpack.c.b16 %v3137, %v3136
  %v3765 = vpack.c.b16 %v3139, %v3138
  %v3766 = vpack.c.b16 %v3141, %v3140
  %v3767 = vpack.c.b16 %v3143, %v3142
  %v3768 = vpack.c.b16 %v3145, %v3144
  %v3769 = vpack.c.b16 %v3147, %v3146
  %v3770 = vpack.c.b16 %v3149, %v3148
  %v3771 = vpack.c.b16 %v3151, %v3150
  %v3772 = vpack.c.b16 %v3153, %v3152
  %v3773 = vpack.c.b16 %v3155, %v3154
  %v3774 = vpack.c.b16 %v3157, %v3156
  %v3775 = vpack.c.b16 %v3159, %v3158
  %v3776 = vpack.c.b16 %v3161, %v3160
  %v3777 = vpack.c.b16 %v3163, %v3162
  %v3778 = vpack.c.b16 %v3165, %v3164
  %v3779 = vpack.c.b16 %v3167, %v3166
  %v3780 = vpack.c.b16 %v3169, %v3168
  %v3781 = vpack.c.b16 %v3171, %v3170
  %v3782 = vpack.c.b16 %v3173, %v3172
  %v3783 = vpack.c.b16 %v3175, %v3174
  %v3784 = vpack.c.b16 %v3177, %v3176
  %v3785 = vpack.c.b16 %v3179, %v3178
  %v3786 = vpack.c.b16 %v3181, %v3180
  %v3787 = vpack.c.b16 %v3183, %v3182
  %v3788 = vpack.c.b16 %v3185, %v3184
  %v3789 = vpack.c.b16 %v3187, %v3186
  %v3790 = vpack.c.b16 %v3189, %v3188
  %v3791 = vpack.c.b16 %v3191, %v3190
  %v3792 = vpack.c.b16 %v3193, %v3192
  %v3793 = vpack.c.b16 %v3195, %v3194
  %v3794 = vpack.c.b16 %v3197, %v3196
  %v3795 = vpack.c.b16 %v3199, %v3198
  %v3796 = vpack.c.b16 %v3201, %v3200
  %v3797 = vpack.c.b16 %v3203, %v3202
  %v3798 = vpack.c.b16 %v3205, %v3204
  %v3799 = vpack.c.b16 %v3207, %v3206
  %v3800 = vpack.c.b16 %v3209, %v3208
  %v3801 = vpack.c.b16 %v3211, %v3210
  %v3802 = vpack.c.b16 %v3213, %v3212
  %v3803 = vpack.c.b16 %v3215, %v3214
  %v3804 = vpack.c.b16 %v3217, %v3216
  %v3805 = vpack.c.b16 %v3219, %v3218
  %v3806 = vpack.c.b16 %v3221, %v3220
  %v3807 = vpack.c.b16 %v3223, %v3222
  %v3808 = vpack.c.b16 %v3225, %v3224
  %v3809 = vpack.c.b16 %v3227, %v3226
  %v3810 = vpack.c.b16 %v3229, %v3228
  %v3811 = vpack.c.b16 %v3231, %v3230
  %v3812 = vpack.c.b16 %v3233, %v3232
  %v3813 = vpack.c.b16 %v3235, %v3234
  %v3814 = vpack.c.b16 %v3237, %v3236
  %v3815 = vpack.c.b16 %v3239, %v3238
  %v3816 = vpack.c.b16 %v3241, %v3240
  %v3817 = vpack.c.b16 %v3243, %v3242
  %v3818 = vpack.c.b16 %v3245, %v3244
  %v3819 = vpack.c.b16 %v3247, %v3246
  %v3820 = vpack.c.b16 %v3249, %v3248
  %v3821 = vpack.c.b16 %v3251, %v3250
  %v3822 = vpack.c.b16 %v3253, %v3252
  %v3823 = vpack.c.b16 %v3255, %v3254
  %v3824 = vpack.c.b16 %v3257, %v3256
  %v3825 = vpack.c.b16 %v3259, %v3258
  %v3826 = vpack.c.b16 %v3261, %v3260
  %v3827 = vpack.c.b16 %v3263, %v3262
  %v3828 = vpack.c.b16 %v3265, %v3264
  %v3829 = vpack.c.b16 %v3267, %v3266
  %v3830 = vpack.c.b16 %v3269, %v3268
  %v3831 = vpack.c.b16 %v3271, %v3270
  %v3832 = vpack.c.b16 %v3273, %v3272
  %v3833 = vpack.c.b16 %v3275, %v3274
  %v3834 = vpack.c.b16 %v3277, %v3276
  %v3835 = vpack.c.b16 %v3279, %v3278
  %v3836 = vpack.c.b16 %v3281, %v3280
  %v3837 = vpack.c.b16 %v3283, %v3282
  %v3838 = vpack.c.b16 %v3285, %v3284
  %v3839 = vpack.c.b16 %v3287, %v3286
  %v3840 = vpack.c.b16 %v3289, %v3288
  %v3841 = vpack.c.b16 %v3291, %v3290
  %v3842 = vpack.c.b16 %v3293, %v3292
  %v3843 = vpack.c.b16 %v3295, %v3294
  %v3844 = vpack.c.b16 %v3297, %v3296
  %v3845 = vpack.c.b16 %v3299, %v3298
  %v3846 = vpack.c.b16 %v3301, %v3300
  %v3847 = vpack.c.b16 %v3303, %v3302
  %v3848 = vpack.c.b16 %v3305, %v3304
  %v3849 = vpack.c.b16 %v3307, %v3306
  %v3850 = vpack.c.b16 %v3309, %v3308
  %v3851 = vpack.c.b16 %v3311, %v3310
  %v3852 = vpack.c.b16 %v3313, %v3312
  %v3853 = vpack.c.b16 %v3315, %v3314
  %v3854 = vpack.c.b16 %v3317, %v3316
  %v3855 = vpack.c.b16 %v3319, %v3318
  %v3856 = vpack.c.b16 %v3321, %v3320
  %v3857 = vpack.c.b16 %v3323, %v3322
  %v3858 = vpack.c.b16 %v3325, %v3324
  %v3859 = vpack.c.b16 %v3327, %v3326
  %v3860 = vpack.c.b16 %v3329, %v3328
  %v3861 = vpack.c.b16 %v3331, %v3330
  %v3862 = vpack.c.b16 %v3333, %v3332
  %v3863 = vpack.c.b16 %v3335, %v3334
  %v3864 = vpack.c.b16 %v3337, %v3336
  %v3865 = vpack.c.b16 %v3339, %v3338
  %v3866 = vpack.c.b16 %v3341, %v3340
  %v3867 = vpack.c.b16 %v3343, %v3342
  %v3868 = vpack.c.b16 %v3345, %v3344
  %v3869 = vpack.c.b16 %v3347, %v3346
  %v3870 = vpack.c.b16 %v3349, %v3348
  %v3871 = vpack.c.b16 %v3351, %v3350
  %v3872 = vpack.c.b16 %v3353, %v3352
  %v3873 = vpack.c.b16 %v3355, %v3354
  %v3874 = vpack.c.b16 %v3357, %v3356
  %v3875 = vpack.c.b16 %v3359, %v3358
  %v3876 = vpack.c.b16 %v3361, %v3360
  %v3877 = vpack.c.b16 %v3363, %v3362
  %v3878 = vpack.c.b16 %v3365, %v3364
  %v3879 = vpack.c.b16 %v3367, %v3366
  %4392 = vmatprep.subr.bf16.mxu0 0
  %4393 = vmatpush1.bf16.msra.mxu0 %v3368
  %4394 = vmatprep.subr.bf16.mxu0 0
  %4395 = vmatpush1.bf16.msra.mxu0 %v3369
  %4396 = vmatprep.subr.bf16.mxu0 0
  %4397 = vmatpush1.bf16.msra.mxu0 %v3370
  %4398 = vmatprep.subr.bf16.mxu0 0
  %4399 = vmatpush1.bf16.msra.mxu0 %v3371
  %4400 = vmatprep.subr.bf16.mxu0 0
  %4401 = vmatpush1.bf16.msra.mxu0 %v3372
  %4402 = vmatprep.subr.bf16.mxu0 0
  %4403 = vmatpush1.bf16.msra.mxu0 %v3373
  %4404 = vmatprep.subr.bf16.mxu0 0
  %4405 = vmatpush1.bf16.msra.mxu0 %v3374
  %4406 = vmatprep.subr.bf16.mxu0 0
  %4407 = vmatpush1.bf16.msra.mxu0 %v3375
  %4408 = vmatprep.subr.bf16.mxu0 0
  %4409 = vmatpush1.bf16.msra.mxu0 %v3376
  %4410 = vmatprep.subr.bf16.mxu0 0
  %4411 = vmatpush1.bf16.msra.mxu0 %v3377
  %4412 = vmatprep.subr.bf16.mxu0 0
  %4413 = vmatpush1.bf16.msra.mxu0 %v3378
  %4414 = vmatprep.subr.bf16.mxu0 0
  %4415 = vmatpush1.bf16.msra.mxu0 %v3379
  %4416 = vmatprep.subr.bf16.mxu0 0
  %4417 = vmatpush1.bf16.msra.mxu0 %v3380
  %4418 = vmatprep.subr.bf16.mxu0 0
  %4419 = vmatpush1.bf16.msra.mxu0 %v3381
  %4420 = vmatprep.subr.bf16.mxu0 0
  %4421 = vmatpush1.bf16.msra.mxu0 %v3382
  %4422 = vmatprep.subr.bf16.mxu0 0
  %4423 = vmatpush1.bf16.msra.mxu0 %v3383
  %4424 = vmatprep.mubr.bf16.mxu0 %v1193
  %4425 = vmatmul.mubr.bf16.gmra.mrb[0].mxu0 %v1192
  %v4426 = vpop.f32.mrb[0].mxu0
  %v4427 = vadd.f32 %v1094, %v4426
  %v4428 = vpop.f32.mrb[0].mxu0
  %v4429 = vpop.f32.mrb[0].mxu0
  %v4430 = vpop.f32.mrb[0].mxu0
  %4431 = vdwg.mxu0
  %4432 = vmatprep.subr.bf16.mxu0 0
  %4433 = vmatpush1.bf16.msra.mxu0 %v3384
  %4434 = vmatprep.subr.bf16.mxu0 0
  %4435 = vmatpush1.bf16.msra.mxu0 %v3385
  %4436 = vmatprep.subr.bf16.mxu0 0
  %4437 = vmatpush1.bf16.msra.mxu0 %v3386
  %4438 = vmatprep.subr.bf16.mxu0 0
  %4439 = vmatpush1.bf16.msra.mxu0 %v3387
  %4440 = vmatprep.subr.bf16.mxu0 0
  %4441 = vmatpush1.bf16.msra.mxu0 %v3388
  %4442 = vmatprep.subr.bf16.mxu0 0
  %4443 = vmatpush1.bf16.msra.mxu0 %v3389
  %4444 = vmatprep.subr.bf16.mxu0 0
  %4445 = vmatpush1.bf16.msra.mxu0 %v3390
  %4446 = vmatprep.subr.bf16.mxu0 0
  %4447 = vmatpush1.bf16.msra.mxu0 %v3391
  %4448 = vmatprep.subr.bf16.mxu0 0
  %4449 = vmatpush1.bf16.msra.mxu0 %v3392
  %4450 = vmatprep.subr.bf16.mxu0 0
  %4451 = vmatpush1.bf16.msra.mxu0 %v3393
  %4452 = vmatprep.subr.bf16.mxu0 0
  %4453 = vmatpush1.bf16.msra.mxu0 %v3394
  %4454 = vmatprep.subr.bf16.mxu0 0
  %4455 = vmatpush1.bf16.msra.mxu0 %v3395
  %4456 = vmatprep.subr.bf16.mxu0 0
  %4457 = vmatpush1.bf16.msra.mxu0 %v3396
  %4458 = vmatprep.subr.bf16.mxu0 0
  %4459 = vmatpush1.bf16.msra.mxu0 %v3397
  %4460 = vmatprep.subr.bf16.mxu0 0
  %4461 = vmatpush1.bf16.msra.mxu0 %v3398
  %4462 = vmatprep.subr.bf16.mxu0 0
  %4463 = vmatpush1.bf16.msra.mxu0 %v3399
  %4464 = vmatprep.mubr.bf16.mxu0 %v1195
  %4465 = vmatmul.mubr.bf16.gmra.mrb[0].mxu0 %v1194
  %v4466 = vpop.f32.mrb[0].mxu0
  %v4467 = vadd.f32 %v4427, %v4466
  %v4468 = vpop.f32.mrb[0].mxu0
  %v4469 = vpop.f32.mrb[0].mxu0
  %v4470 = vpop.f32.mrb[0].mxu0
  %4471 = vdwg.mxu0
  %4472 = vmatprep.subr.bf16.mxu0 0
  %4473 = vmatpush1.bf16.msra.mxu0 %v3400
  %4474 = vmatprep.subr.bf16.mxu0 0
  %4475 = vmatpush1.bf16.msra.mxu0 %v3401
  %4476 = vmatprep.subr.bf16.mxu0 0
  %4477 = vmatpush1.bf16.msra.mxu0 %v3402
  %4478 = vmatprep.subr.bf16.mxu0 0
  %4479 = vmatpush1.bf16.msra.mxu0 %v3403
  %4480 = vmatprep.subr.bf16.mxu0 0
  %4481 = vmatpush1.bf16.msra.mxu0 %v3404
  %4482 = vmatprep.subr.bf16.mxu0 0
  %4483 = vmatpush1.bf16.msra.mxu0 %v3405
  %4484 = vmatprep.subr.bf16.mxu0 0
  %4485 = vmatpush1.bf16.msra.mxu0 %v3406
  %4486 = vmatprep.subr.bf16.mxu0 0
  %4487 = vmatpush1.bf16.msra.mxu0 %v3407
  %4488 = vmatprep.subr.bf16.mxu0 0
  %4489 = vmatpush1.bf16.msra.mxu0 %v3408
  %4490 = vmatprep.subr.bf16.mxu0 0
  %4491 = vmatpush1.bf16.msra.mxu0 %v3409
  %4492 = vmatprep.subr.bf16.mxu0 0
  %4493 = vmatpush1.bf16.msra.mxu0 %v3410
  %4494 = vmatprep.subr.bf16.mxu0 0
  %4495 = vmatpush1.bf16.msra.mxu0 %v3411
  %4496 = vmatprep.subr.bf16.mxu0 0
  %4497 = vmatpush1.bf16.msra.mxu0 %v3412
  %4498 = vmatprep.subr.bf16.mxu0 0
  %4499 = vmatpush1.bf16.msra.mxu0 %v3413
  %4500 = vmatprep.subr.bf16.mxu0 0
  %4501 = vmatpush1.bf16.msra.mxu0 %v3414
  %4502 = vmatprep.subr.bf16.mxu0 0
  %4503 = vmatpush1.bf16.msra.mxu0 %v3415
  %4504 = vmatprep.mubr.bf16.mxu0 %v1197
  %4505 = vmatmul.mubr.bf16.gmra.mrb[0].mxu0 %v1196
  %v4506 = vpop.f32.mrb[0].mxu0
  %v4507 = vadd.f32 %v4467, %v4506
  %v4508 = vpop.f32.mrb[0].mxu0
  %v4509 = vpop.f32.mrb[0].mxu0
  %v4510 = vpop.f32.mrb[0].mxu0
  %4511 = vdwg.mxu0
  %4512 = vmatprep.subr.bf16.mxu0 0
  %4513 = vmatpush1.bf16.msra.mxu0 %v3416
  %4514 = vmatprep.subr.bf16.mxu0 0
  %4515 = vmatpush1.bf16.msra.mxu0 %v3417
  %4516 = vmatprep.subr.bf16.mxu0 0
  %4517 = vmatpush1.bf16.msra.mxu0 %v3418
  %4518 = vmatprep.subr.bf16.mxu0 0
  %4519 = vmatpush1.bf16.msra.mxu0 %v3419
  %4520 = vmatprep.subr.bf16.mxu0 0
  %4521 = vmatpush1.bf16.msra.mxu0 %v3420
  %4522 = vmatprep.subr.bf16.mxu0 0
  %4523 = vmatpush1.bf16.msra.mxu0 %v3421
  %4524 = vmatprep.subr.bf16.mxu0 0
  %4525 = vmatpush1.bf16.msra.mxu0 %v3422
  %4526 = vmatprep.subr.bf16.mxu0 0
  %4527 = vmatpush1.bf16.msra.mxu0 %v3423
  %4528 = vmatprep.subr.bf16.mxu0 0
  %4529 = vmatpush1.bf16.msra.mxu0 %v3424
  %4530 = vmatprep.subr.bf16.mxu0 0
  %4531 = vmatpush1.bf16.msra.mxu0 %v3425
  %4532 = vmatprep.subr.bf16.mxu0 0
  %4533 = vmatpush1.bf16.msra.mxu0 %v3426
  %4534 = vmatprep.subr.bf16.mxu0 0
  %4535 = vmatpush1.bf16.msra.mxu0 %v3427
  %4536 = vmatprep.subr.bf16.mxu0 0
  %4537 = vmatpush1.bf16.msra.mxu0 %v3428
  %4538 = vmatprep.subr.bf16.mxu0 0
  %4539 = vmatpush1.bf16.msra.mxu0 %v3429
  %4540 = vmatprep.subr.bf16.mxu0 0
  %4541 = vmatpush1.bf16.msra.mxu0 %v3430
  %4542 = vmatprep.subr.bf16.mxu0 0
  %4543 = vmatpush1.bf16.msra.mxu0 %v3431
  %4544 = vmatprep.mubr.bf16.mxu0 %v1199
  %4545 = vmatmul.mubr.bf16.gmra.mrb[0].mxu0 %v1198
  %v4546 = vpop.f32.mrb[0].mxu0
  %v4547 = vadd.f32 %v4507, %v4546
  %v4548 = vpop.f32.mrb[0].mxu0
  %v4549 = vpop.f32.mrb[0].mxu0
  %v4550 = vpop.f32.mrb[0].mxu0
  %4551 = vdwg.mxu0
  %4552 = vmatprep.subr.bf16.mxu0 0
  %4553 = vmatpush1.bf16.msra.mxu0 %v3432
  %4554 = vmatprep.subr.bf16.mxu0 0
  %4555 = vmatpush1.bf16.msra.mxu0 %v3433
  %4556 = vmatprep.subr.bf16.mxu0 0
  %4557 = vmatpush1.bf16.msra.mxu0 %v3434
  %4558 = vmatprep.subr.bf16.mxu0 0
  %4559 = vmatpush1.bf16.msra.mxu0 %v3435
  %4560 = vmatprep.subr.bf16.mxu0 0
  %4561 = vmatpush1.bf16.msra.mxu0 %v3436
  %4562 = vmatprep.subr.bf16.mxu0 0
  %4563 = vmatpush1.bf16.msra.mxu0 %v3437
  %4564 = vmatprep.subr.bf16.mxu0 0
  %4565 = vmatpush1.bf16.msra.mxu0 %v3438
  %4566 = vmatprep.subr.bf16.mxu0 0
  %4567 = vmatpush1.bf16.msra.mxu0 %v3439
  %4568 = vmatprep.subr.bf16.mxu0 0
  %4569 = vmatpush1.bf16.msra.mxu0 %v3440
  %4570 = vmatprep.subr.bf16.mxu0 0
  %4571 = vmatpush1.bf16.msra.mxu0 %v3441
  %4572 = vmatprep.subr.bf16.mxu0 0
  %4573 = vmatpush1.bf16.msra.mxu0 %v3442
  %4574 = vmatprep.subr.bf16.mxu0 0
  %4575 = vmatpush1.bf16.msra.mxu0 %v3443
  %4576 = vmatprep.subr.bf16.mxu0 0
  %4577 = vmatpush1.bf16.msra.mxu0 %v3444
  %4578 = vmatprep.subr.bf16.mxu0 0
  %4579 = vmatpush1.bf16.msra.mxu0 %v3445
  %4580 = vmatprep.subr.bf16.mxu0 0
  %4581 = vmatpush1.bf16.msra.mxu0 %v3446
  %4582 = vmatprep.subr.bf16.mxu0 0
  %4583 = vmatpush1.bf16.msra.mxu0 %v3447
  %4584 = vmatprep.mubr.bf16.mxu0 %v1201
  %4585 = vmatmul.mubr.bf16.gmra.mrb[0].mxu0 %v1200
  %v4586 = vpop.f32.mrb[0].mxu0
  %v4587 = vadd.f32 %v4547, %v4586
  %v4588 = vpop.f32.mrb[0].mxu0
  %v4589 = vpop.f32.mrb[0].mxu0
  %v4590 = vpop.f32.mrb[0].mxu0
  %4591 = vdwg.mxu0
  %4592 = vmatprep.subr.bf16.mxu0 0
  %4593 = vmatpush1.bf16.msra.mxu0 %v3448
  %4594 = vmatprep.subr.bf16.mxu0 0
  %4595 = vmatpush1.bf16.msra.mxu0 %v3449
  %4596 = vmatprep.subr.bf16.mxu0 0
  %4597 = vmatpush1.bf16.msra.mxu0 %v3450
  %4598 = vmatprep.subr.bf16.mxu0 0
  %4599 = vmatpush1.bf16.msra.mxu0 %v3451
  %4600 = vmatprep.subr.bf16.mxu0 0
  %4601 = vmatpush1.bf16.msra.mxu0 %v3452
  %4602 = vmatprep.subr.bf16.mxu0 0
  %4603 = vmatpush1.bf16.msra.mxu0 %v3453
  %4604 = vmatprep.subr.bf16.mxu0 0
  %4605 = vmatpush1.bf16.msra.mxu0 %v3454
  %4606 = vmatprep.subr.bf16.mxu0 0
  %4607 = vmatpush1.bf16.msra.mxu0 %v3455
  %4608 = vmatprep.subr.bf16.mxu0 0
  %4609 = vmatpush1.bf16.msra.mxu0 %v3456
  %4610 = vmatprep.subr.bf16.mxu0 0
  %4611 = vmatpush1.bf16.msra.mxu0 %v3457
  %4612 = vmatprep.subr.bf16.mxu0 0
  %4613 = vmatpush1.bf16.msra.mxu0 %v3458
  %4614 = vmatprep.subr.bf16.mxu0 0
  %4615 = vmatpush1.bf16.msra.mxu0 %v3459
  %4616 = vmatprep.subr.bf16.mxu0 0
  %4617 = vmatpush1.bf16.msra.mxu0 %v3460
  %4618 = vmatprep.subr.bf16.mxu0 0
  %4619 = vmatpush1.bf16.msra.mxu0 %v3461
  %4620 = vmatprep.subr.bf16.mxu0 0
  %4621 = vmatpush1.bf16.msra.mxu0 %v3462
  %4622 = vmatprep.subr.bf16.mxu0 0
  %4623 = vmatpush1.bf16.msra.mxu0 %v3463
  %4624 = vmatprep.mubr.bf16.mxu0 %v1203
  %4625 = vmatmul.mubr.bf16.gmra.mrb[0].mxu0 %v1202
  %v4626 = vpop.f32.mrb[0].mxu0
  %v4627 = vadd.f32 %v4587, %v4626
  %v4628 = vpop.f32.mrb[0].mxu0
  %v4629 = vpop.f32.mrb[0].mxu0
  %v4630 = vpop.f32.mrb[0].mxu0
  %4631 = vdwg.mxu0
  %4632 = vmatprep.subr.bf16.mxu0 0
  %4633 = vmatpush1.bf16.msra.mxu0 %v3464
  %4634 = vmatprep.subr.bf16.mxu0 0
  %4635 = vmatpush1.bf16.msra.mxu0 %v3465
  %4636 = vmatprep.subr.bf16.mxu0 0
  %4637 = vmatpush1.bf16.msra.mxu0 %v3466
  %4638 = vmatprep.subr.bf16.mxu0 0
  %4639 = vmatpush1.bf16.msra.mxu0 %v3467
  %4640 = vmatprep.subr.bf16.mxu0 0
  %4641 = vmatpush1.bf16.msra.mxu0 %v3468
  %4642 = vmatprep.subr.bf16.mxu0 0
  %4643 = vmatpush1.bf16.msra.mxu0 %v3469
  %4644 = vmatprep.subr.bf16.mxu0 0
  %4645 = vmatpush1.bf16.msra.mxu0 %v3470
  %4646 = vmatprep.subr.bf16.mxu0 0
  %4647 = vmatpush1.bf16.msra.mxu0 %v3471
  %4648 = vmatprep.subr.bf16.mxu0 0
  %4649 = vmatpush1.bf16.msra.mxu0 %v3472
  %4650 = vmatprep.subr.bf16.mxu0 0
  %4651 = vmatpush1.bf16.msra.mxu0 %v3473
  %4652 = vmatprep.subr.bf16.mxu0 0
  %4653 = vmatpush1.bf16.msra.mxu0 %v3474
  %4654 = vmatprep.subr.bf16.mxu0 0
  %4655 = vmatpush1.bf16.msra.mxu0 %v3475
  %4656 = vmatprep.subr.bf16.mxu0 0
  %4657 = vmatpush1.bf16.msra.mxu0 %v3476
  %4658 = vmatprep.subr.bf16.mxu0 0
  %4659 = vmatpush1.bf16.msra.mxu0 %v3477
  %4660 = vmatprep.subr.bf16.mxu0 0
  %4661 = vmatpush1.bf16.msra.mxu0 %v3478
  %4662 = vmatprep.subr.bf16.mxu0 0
  %4663 = vmatpush1.bf16.msra.mxu0 %v3479
  %4664 = vmatprep.mubr.bf16.mxu0 %v1205
  %4665 = vmatmul.mubr.bf16.gmra.mrb[0].mxu0 %v1204
  %v4666 = vpop.f32.mrb[0].mxu0
  %v4667 = vadd.f32 %v4627, %v4666
  %v4668 = vpop.f32.mrb[0].mxu0
  %v4669 = vpop.f32.mrb[0].mxu0
  %v4670 = vpop.f32.mrb[0].mxu0
  %4671 = vdwg.mxu0
  %4672 = vmatprep.subr.bf16.mxu0 0
  %4673 = vmatpush1.bf16.msra.mxu0 %v3480
  %4674 = vmatprep.subr.bf16.mxu0 0
  %4675 = vmatpush1.bf16.msra.mxu0 %v3481
  %4676 = vmatprep.subr.bf16.mxu0 0
  %4677 = vmatpush1.bf16.msra.mxu0 %v3482
  %4678 = vmatprep.subr.bf16.mxu0 0
  %4679 = vmatpush1.bf16.msra.mxu0 %v3483
  %4680 = vmatprep.subr.bf16.mxu0 0
  %4681 = vmatpush1.bf16.msra.mxu0 %v3484
  %4682 = vmatprep.subr.bf16.mxu0 0
  %4683 = vmatpush1.bf16.msra.mxu0 %v3485
  %4684 = vmatprep.subr.bf16.mxu0 0
  %4685 = vmatpush1.bf16.msra.mxu0 %v3486
  %4686 = vmatprep.subr.bf16.mxu0 0
  %4687 = vmatpush1.bf16.msra.mxu0 %v3487
  %4688 = vmatprep.subr.bf16.mxu0 0
  %4689 = vmatpush1.bf16.msra.mxu0 %v3488
  %4690 = vmatprep.subr.bf16.mxu0 0
  %4691 = vmatpush1.bf16.msra.mxu0 %v3489
  %4692 = vmatprep.subr.bf16.mxu0 0
  %4693 = vmatpush1.bf16.msra.mxu0 %v3490
  %4694 = vmatprep.subr.bf16.mxu0 0
  %4695 = vmatpush1.bf16.msra.mxu0 %v3491
  %4696 = vmatprep.subr.bf16.mxu0 0
  %4697 = vmatpush1.bf16.msra.mxu0 %v3492
  %4698 = vmatprep.subr.bf16.mxu0 0
  %4699 = vmatpush1.bf16.msra.mxu0 %v3493
  %4700 = vmatprep.subr.bf16.mxu0 0
  %4701 = vmatpush1.bf16.msra.mxu0 %v3494
  %4702 = vmatprep.subr.bf16.mxu0 0
  %4703 = vmatpush1.bf16.msra.mxu0 %v3495
  %4704 = vmatprep.mubr.bf16.mxu0 %v1207
  %4705 = vmatmul.mubr.bf16.gmra.mrb[0].mxu0 %v1206
  %v4706 = vpop.f32.mrb[0].mxu0
  %v4707 = vadd.f32 %v4667, %v4706
  %v4708 = vpop.f32.mrb[0].mxu0
  %v4709 = vpop.f32.mrb[0].mxu0
  %v4710 = vpop.f32.mrb[0].mxu0
  %4711 = vdwg.mxu0
  %4712 = vmatprep.subr.bf16.mxu0 0
  %4713 = vmatpush1.bf16.msra.mxu0 %v3496
  %4714 = vmatprep.subr.bf16.mxu0 0
  %4715 = vmatpush1.bf16.msra.mxu0 %v3497
  %4716 = vmatprep.subr.bf16.mxu0 0
  %4717 = vmatpush1.bf16.msra.mxu0 %v3498
  %4718 = vmatprep.subr.bf16.mxu0 0
  %4719 = vmatpush1.bf16.msra.mxu0 %v3499
  %4720 = vmatprep.subr.bf16.mxu0 0
  %4721 = vmatpush1.bf16.msra.mxu0 %v3500
  %4722 = vmatprep.subr.bf16.mxu0 0
  %4723 = vmatpush1.bf16.msra.mxu0 %v3501
  %4724 = vmatprep.subr.bf16.mxu0 0
  %4725 = vmatpush1.bf16.msra.mxu0 %v3502
  %4726 = vmatprep.subr.bf16.mxu0 0
  %4727 = vmatpush1.bf16.msra.mxu0 %v3503
  %4728 = vmatprep.subr.bf16.mxu0 0
  %4729 = vmatpush1.bf16.msra.mxu0 %v3504
  %4730 = vmatprep.subr.bf16.mxu0 0
  %4731 = vmatpush1.bf16.msra.mxu0 %v3505
  %4732 = vmatprep.subr.bf16.mxu0 0
  %4733 = vmatpush1.bf16.msra.mxu0 %v3506
  %4734 = vmatprep.subr.bf16.mxu0 0
  %4735 = vmatpush1.bf16.msra.mxu0 %v3507
  %4736 = vmatprep.subr.bf16.mxu0 0
  %4737 = vmatpush1.bf16.msra.mxu0 %v3508
  %4738 = vmatprep.subr.bf16.mxu0 0
  %4739 = vmatpush1.bf16.msra.mxu0 %v3509
  %4740 = vmatprep.subr.bf16.mxu0 0
  %4741 = vmatpush1.bf16.msra.mxu0 %v3510
  %4742 = vmatprep.subr.bf16.mxu0 0
  %4743 = vmatpush1.bf16.msra.mxu0 %v3511
  %4744 = vmatprep.mubr.bf16.mxu0 %v1209
  %4745 = vmatmul.mubr.bf16.gmra.mrb[0].mxu0 %v1208
  %v4746 = vpop.f32.mrb[0].mxu0
  %v4747 = vadd.f32 %v4707, %v4746
  %v4748 = vpop.f32.mrb[0].mxu0
  %v4749 = vpop.f32.mrb[0].mxu0
  %v4750 = vpop.f32.mrb[0].mxu0
  %4751 = vdwg.mxu0
  %4752 = vmatprep.subr.bf16.mxu0 0
  %4753 = vmatpush1.bf16.msra.mxu0 %v3512
  %4754 = vmatprep.subr.bf16.mxu0 0
  %4755 = vmatpush1.bf16.msra.mxu0 %v3513
  %4756 = vmatprep.subr.bf16.mxu0 0
  %4757 = vmatpush1.bf16.msra.mxu0 %v3514
  %4758 = vmatprep.subr.bf16.mxu0 0
  %4759 = vmatpush1.bf16.msra.mxu0 %v3515
  %4760 = vmatprep.subr.bf16.mxu0 0
  %4761 = vmatpush1.bf16.msra.mxu0 %v3516
  %4762 = vmatprep.subr.bf16.mxu0 0
  %4763 = vmatpush1.bf16.msra.mxu0 %v3517
  %4764 = vmatprep.subr.bf16.mxu0 0
  %4765 = vmatpush1.bf16.msra.mxu0 %v3518
  %4766 = vmatprep.subr.bf16.mxu0 0
  %4767 = vmatpush1.bf16.msra.mxu0 %v3519
  %4768 = vmatprep.subr.bf16.mxu0 0
  %4769 = vmatpush1.bf16.msra.mxu0 %v3520
  %4770 = vmatprep.subr.bf16.mxu0 0
  %4771 = vmatpush1.bf16.msra.mxu0 %v3521
  %4772 = vmatprep.subr.bf16.mxu0 0
  %4773 = vmatpush1.bf16.msra.mxu0 %v3522
  %4774 = vmatprep.subr.bf16.mxu0 0
  %4775 = vmatpush1.bf16.msra.mxu0 %v3523
  %4776 = vmatprep.subr.bf16.mxu0 0
  %4777 = vmatpush1.bf16.msra.mxu0 %v3524
  %4778 = vmatprep.subr.bf16.mxu0 0
  %4779 = vmatpush1.bf16.msra.mxu0 %v3525
  %4780 = vmatprep.subr.bf16.mxu0 0
  %4781 = vmatpush1.bf16.msra.mxu0 %v3526
  %4782 = vmatprep.subr.bf16.mxu0 0
  %4783 = vmatpush1.bf16.msra.mxu0 %v3527
  %4784 = vmatprep.mubr.bf16.mxu0 %v1211
  %4785 = vmatmul.mubr.bf16.gmra.mrb[0].mxu0 %v1210
  %v4786 = vpop.f32.mrb[0].mxu0
  %v4787 = vadd.f32 %v4747, %v4786
  %v4788 = vpop.f32.mrb[0].mxu0
  %v4789 = vpop.f32.mrb[0].mxu0
  %v4790 = vpop.f32.mrb[0].mxu0
  %4791 = vdwg.mxu0
  %4792 = vmatprep.subr.bf16.mxu0 0
  %4793 = vmatpush1.bf16.msra.mxu0 %v3528
  %4794 = vmatprep.subr.bf16.mxu0 0
  %4795 = vmatpush1.bf16.msra.mxu0 %v3529
  %4796 = vmatprep.subr.bf16.mxu0 0
  %4797 = vmatpush1.bf16.msra.mxu0 %v3530
  %4798 = vmatprep.subr.bf16.mxu0 0
  %4799 = vmatpush1.bf16.msra.mxu0 %v3531
  %4800 = vmatprep.subr.bf16.mxu0 0
  %4801 = vmatpush1.bf16.msra.mxu0 %v3532
  %4802 = vmatprep.subr.bf16.mxu0 0
  %4803 = vmatpush1.bf16.msra.mxu0 %v3533
  %4804 = vmatprep.subr.bf16.mxu0 0
  %4805 = vmatpush1.bf16.msra.mxu0 %v3534
  %4806 = vmatprep.subr.bf16.mxu0 0
  %4807 = vmatpush1.bf16.msra.mxu0 %v3535
  %4808 = vmatprep.subr.bf16.mxu0 0
  %4809 = vmatpush1.bf16.msra.mxu0 %v3536
  %4810 = vmatprep.subr.bf16.mxu0 0
  %4811 = vmatpush1.bf16.msra.mxu0 %v3537
  %4812 = vmatprep.subr.bf16.mxu0 0
  %4813 = vmatpush1.bf16.msra.mxu0 %v3538
  %4814 = vmatprep.subr.bf16.mxu0 0
  %4815 = vmatpush1.bf16.msra.mxu0 %v3539
  %4816 = vmatprep.subr.bf16.mxu0 0
  %4817 = vmatpush1.bf16.msra.mxu0 %v3540
  %4818 = vmatprep.subr.bf16.mxu0 0
  %4819 = vmatpush1.bf16.msra.mxu0 %v3541
  %4820 = vmatprep.subr.bf16.mxu0 0
  %4821 = vmatpush1.bf16.msra.mxu0 %v3542
  %4822 = vmatprep.subr.bf16.mxu0 0
  %4823 = vmatpush1.bf16.msra.mxu0 %v3543
  %4824 = vmatprep.mubr.bf16.mxu0 %v1213
  %4825 = vmatmul.mubr.bf16.gmra.mrb[0].mxu0 %v1212
  %v4826 = vpop.f32.mrb[0].mxu0
  %v4827 = vadd.f32 %v4787, %v4826
  %v4828 = vpop.f32.mrb[0].mxu0
  %v4829 = vpop.f32.mrb[0].mxu0
  %v4830 = vpop.f32.mrb[0].mxu0
  %4831 = vdwg.mxu0
  %4832 = vmatprep.subr.bf16.mxu0 0
  %4833 = vmatpush1.bf16.msra.mxu0 %v3544
  %4834 = vmatprep.subr.bf16.mxu0 0
  %4835 = vmatpush1.bf16.msra.mxu0 %v3545
  %4836 = vmatprep.subr.bf16.mxu0 0
  %4837 = vmatpush1.bf16.msra.mxu0 %v3546
  %4838 = vmatprep.subr.bf16.mxu0 0
  %4839 = vmatpush1.bf16.msra.mxu0 %v3547
  %4840 = vmatprep.subr.bf16.mxu0 0
  %4841 = vmatpush1.bf16.msra.mxu0 %v3548
  %4842 = vmatprep.subr.bf16.mxu0 0
  %4843 = vmatpush1.bf16.msra.mxu0 %v3549
  %4844 = vmatprep.subr.bf16.mxu0 0
  %4845 = vmatpush1.bf16.msra.mxu0 %v3550
  %4846 = vmatprep.subr.bf16.mxu0 0
  %4847 = vmatpush1.bf16.msra.mxu0 %v3551
  %4848 = vmatprep.subr.bf16.mxu0 0
  %4849 = vmatpush1.bf16.msra.mxu0 %v3552
  %4850 = vmatprep.subr.bf16.mxu0 0
  %4851 = vmatpush1.bf16.msra.mxu0 %v3553
  %4852 = vmatprep.subr.bf16.mxu0 0
  %4853 = vmatpush1.bf16.msra.mxu0 %v3554
  %4854 = vmatprep.subr.bf16.mxu0 0
  %4855 = vmatpush1.bf16.msra.mxu0 %v3555
  %4856 = vmatprep.subr.bf16.mxu0 0
  %4857 = vmatpush1.bf16.msra.mxu0 %v3556
  %4858 = vmatprep.subr.bf16.mxu0 0
  %4859 = vmatpush1.bf16.msra.mxu0 %v3557
  %4860 = vmatprep.subr.bf16.mxu0 0
  %4861 = vmatpush1.bf16.msra.mxu0 %v3558
  %4862 = vmatprep.subr.bf16.mxu0 0
  %4863 = vmatpush1.bf16.msra.mxu0 %v3559
  %4864 = vmatprep.mubr.bf16.mxu0 %v1215
  %4865 = vmatmul.mubr.bf16.gmra.mrb[0].mxu0 %v1214
  %v4866 = vpop.f32.mrb[0].mxu0
  %v4867 = vadd.f32 %v4827, %v4866
  %v4868 = vpop.f32.mrb[0].mxu0
  %v4869 = vpop.f32.mrb[0].mxu0
  %v4870 = vpop.f32.mrb[0].mxu0
  %4871 = vdwg.mxu0
  %4872 = vmatprep.subr.bf16.mxu0 0
  %4873 = vmatpush1.bf16.msra.mxu0 %v3560
  %4874 = vmatprep.subr.bf16.mxu0 0
  %4875 = vmatpush1.bf16.msra.mxu0 %v3561
  %4876 = vmatprep.subr.bf16.mxu0 0
  %4877 = vmatpush1.bf16.msra.mxu0 %v3562
  %4878 = vmatprep.subr.bf16.mxu0 0
  %4879 = vmatpush1.bf16.msra.mxu0 %v3563
  %4880 = vmatprep.subr.bf16.mxu0 0
  %4881 = vmatpush1.bf16.msra.mxu0 %v3564
  %4882 = vmatprep.subr.bf16.mxu0 0
  %4883 = vmatpush1.bf16.msra.mxu0 %v3565
  %4884 = vmatprep.subr.bf16.mxu0 0
  %4885 = vmatpush1.bf16.msra.mxu0 %v3566
  %4886 = vmatprep.subr.bf16.mxu0 0
  %4887 = vmatpush1.bf16.msra.mxu0 %v3567
  %4888 = vmatprep.subr.bf16.mxu0 0
  %4889 = vmatpush1.bf16.msra.mxu0 %v3568
  %4890 = vmatprep.subr.bf16.mxu0 0
  %4891 = vmatpush1.bf16.msra.mxu0 %v3569
  %4892 = vmatprep.subr.bf16.mxu0 0
  %4893 = vmatpush1.bf16.msra.mxu0 %v3570
  %4894 = vmatprep.subr.bf16.mxu0 0
  %4895 = vmatpush1.bf16.msra.mxu0 %v3571
  %4896 = vmatprep.subr.bf16.mxu0 0
  %4897 = vmatpush1.bf16.msra.mxu0 %v3572
  %4898 = vmatprep.subr.bf16.mxu0 0
  %4899 = vmatpush1.bf16.msra.mxu0 %v3573
  %4900 = vmatprep.subr.bf16.mxu0 0
  %4901 = vmatpush1.bf16.msra.mxu0 %v3574
  %4902 = vmatprep.subr.bf16.mxu0 0
  %4903 = vmatpush1.bf16.msra.mxu0 %v3575
  %4904 = vmatprep.mubr.bf16.mxu0 %v1217
  %4905 = vmatmul.mubr.bf16.gmra.mrb[0].mxu0 %v1216
  %v4906 = vpop.f32.mrb[0].mxu0
  %v4907 = vadd.f32 %v4867, %v4906
  %v4908 = vpop.f32.mrb[0].mxu0
  %v4909 = vpop.f32.mrb[0].mxu0
  %v4910 = vpop.f32.mrb[0].mxu0
  %4911 = vdwg.mxu0
  %4912 = vmatprep.subr.bf16.mxu0 0
  %4913 = vmatpush1.bf16.msra.mxu0 %v3576
  %4914 = vmatprep.subr.bf16.mxu0 0
  %4915 = vmatpush1.bf16.msra.mxu0 %v3577
  %4916 = vmatprep.subr.bf16.mxu0 0
  %4917 = vmatpush1.bf16.msra.mxu0 %v3578
  %4918 = vmatprep.subr.bf16.mxu0 0
  %4919 = vmatpush1.bf16.msra.mxu0 %v3579
  %4920 = vmatprep.subr.bf16.mxu0 0
  %4921 = vmatpush1.bf16.msra.mxu0 %v3580
  %4922 = vmatprep.subr.bf16.mxu0 0
  %4923 = vmatpush1.bf16.msra.mxu0 %v3581
  %4924 = vmatprep.subr.bf16.mxu0 0
  %4925 = vmatpush1.bf16.msra.mxu0 %v3582
  %4926 = vmatprep.subr.bf16.mxu0 0
  %4927 = vmatpush1.bf16.msra.mxu0 %v3583
  %4928 = vmatprep.subr.bf16.mxu0 0
  %4929 = vmatpush1.bf16.msra.mxu0 %v3584
  %4930 = vmatprep.subr.bf16.mxu0 0
  %4931 = vmatpush1.bf16.msra.mxu0 %v3585
  %4932 = vmatprep.subr.bf16.mxu0 0
  %4933 = vmatpush1.bf16.msra.mxu0 %v3586
  %4934 = vmatprep.subr.bf16.mxu0 0
  %4935 = vmatpush1.bf16.msra.mxu0 %v3587
  %4936 = vmatprep.subr.bf16.mxu0 0
  %4937 = vmatpush1.bf16.msra.mxu0 %v3588
  %4938 = vmatprep.subr.bf16.mxu0 0
  %4939 = vmatpush1.bf16.msra.mxu0 %v3589
  %4940 = vmatprep.subr.bf16.mxu0 0
  %4941 = vmatpush1.bf16.msra.mxu0 %v3590
  %4942 = vmatprep.subr.bf16.mxu0 0
  %4943 = vmatpush1.bf16.msra.mxu0 %v3591
  %4944 = vmatprep.mubr.bf16.mxu0 %v1219
  %4945 = vmatmul.mubr.bf16.gmra.mrb[0].mxu0 %v1218
  %v4946 = vpop.f32.mrb[0].mxu0
  %v4947 = vadd.f32 %v4907, %v4946
  %v4948 = vpop.f32.mrb[0].mxu0
  %v4949 = vpop.f32.mrb[0].mxu0
  %v4950 = vpop.f32.mrb[0].mxu0
  %4951 = vdwg.mxu0
  %4952 = vmatprep.subr.bf16.mxu0 0
  %4953 = vmatpush1.bf16.msra.mxu0 %v3592
  %4954 = vmatprep.subr.bf16.mxu0 0
  %4955 = vmatpush1.bf16.msra.mxu0 %v3593
  %4956 = vmatprep.subr.bf16.mxu0 0
  %4957 = vmatpush1.bf16.msra.mxu0 %v3594
  %4958 = vmatprep.subr.bf16.mxu0 0
  %4959 = vmatpush1.bf16.msra.mxu0 %v3595
  %4960 = vmatprep.subr.bf16.mxu0 0
  %4961 = vmatpush1.bf16.msra.mxu0 %v3596
  %4962 = vmatprep.subr.bf16.mxu0 0
  %4963 = vmatpush1.bf16.msra.mxu0 %v3597
  %4964 = vmatprep.subr.bf16.mxu0 0
  %4965 = vmatpush1.bf16.msra.mxu0 %v3598
  %4966 = vmatprep.subr.bf16.mxu0 0
  %4967 = vmatpush1.bf16.msra.mxu0 %v3599
  %4968 = vmatprep.subr.bf16.mxu0 0
  %4969 = vmatpush1.bf16.msra.mxu0 %v3600
  %4970 = vmatprep.subr.bf16.mxu0 0
  %4971 = vmatpush1.bf16.msra.mxu0 %v3601
  %4972 = vmatprep.subr.bf16.mxu0 0
  %4973 = vmatpush1.bf16.msra.mxu0 %v3602
  %4974 = vmatprep.subr.bf16.mxu0 0
  %4975 = vmatpush1.bf16.msra.mxu0 %v3603
  %4976 = vmatprep.subr.bf16.mxu0 0
  %4977 = vmatpush1.bf16.msra.mxu0 %v3604
  %4978 = vmatprep.subr.bf16.mxu0 0
  %4979 = vmatpush1.bf16.msra.mxu0 %v3605
  %4980 = vmatprep.subr.bf16.mxu0 0
  %4981 = vmatpush1.bf16.msra.mxu0 %v3606
  %4982 = vmatprep.subr.bf16.mxu0 0
  %4983 = vmatpush1.bf16.msra.mxu0 %v3607
  %4984 = vmatprep.mubr.bf16.mxu0 %v1221
  %4985 = vmatmul.mubr.bf16.gmra.mrb[0].mxu0 %v1220
  %v4986 = vpop.f32.mrb[0].mxu0
  %v4987 = vadd.f32 %v4947, %v4986
  %v4988 = vpop.f32.mrb[0].mxu0
  %v4989 = vpop.f32.mrb[0].mxu0
  %v4990 = vpop.f32.mrb[0].mxu0
  %4991 = vdwg.mxu0
  %4992 = vmatprep.subr.bf16.mxu0 0
  %4993 = vmatpush1.bf16.msra.mxu0 %v3608
  %4994 = vmatprep.subr.bf16.mxu0 0
  %4995 = vmatpush1.bf16.msra.mxu0 %v3609
  %4996 = vmatprep.subr.bf16.mxu0 0
  %4997 = vmatpush1.bf16.msra.mxu0 %v3610
  %4998 = vmatprep.subr.bf16.mxu0 0
  %4999 = vmatpush1.bf16.msra.mxu0 %v3611
  %5000 = vmatprep.subr.bf16.mxu0 0
  %5001 = vmatpush1.bf16.msra.mxu0 %v3612
  %5002 = vmatprep.subr.bf16.mxu0 0
  %5003 = vmatpush1.bf16.msra.mxu0 %v3613
  %5004 = vmatprep.subr.bf16.mxu0 0
  %5005 = vmatpush1.bf16.msra.mxu0 %v3614
  %5006 = vmatprep.subr.bf16.mxu0 0
  %5007 = vmatpush1.bf16.msra.mxu0 %v3615
  %5008 = vmatprep.subr.bf16.mxu0 0
  %5009 = vmatpush1.bf16.msra.mxu0 %v3616
  %5010 = vmatprep.subr.bf16.mxu0 0
  %5011 = vmatpush1.bf16.msra.mxu0 %v3617
  %5012 = vmatprep.subr.bf16.mxu0 0
  %5013 = vmatpush1.bf16.msra.mxu0 %v3618
  %5014 = vmatprep.subr.bf16.mxu0 0
  %5015 = vmatpush1.bf16.msra.mxu0 %v3619
  %5016 = vmatprep.subr.bf16.mxu0 0
  %5017 = vmatpush1.bf16.msra.mxu0 %v3620
  %5018 = vmatprep.subr.bf16.mxu0 0
  %5019 = vmatpush1.bf16.msra.mxu0 %v3621
  %5020 = vmatprep.subr.bf16.mxu0 0
  %5021 = vmatpush1.bf16.msra.mxu0 %v3622
  %5022 = vmatprep.subr.bf16.mxu0 0
  %5023 = vmatpush1.bf16.msra.mxu0 %v3623
  %5024 = vmatprep.mubr.bf16.mxu0 %v1223
  %5025 = vmatmul.mubr.bf16.gmra.mrb[0].mxu0 %v1222
  %v5026 = vpop.f32.mrb[0].mxu0
  %v5027 = vadd.f32 %v4987, %v5026
  %v5028 = vpop.f32.mrb[0].mxu0
  %v5029 = vpop.f32.mrb[0].mxu0
  %v5030 = vpop.f32.mrb[0].mxu0
  %5031 = vdwg.mxu0
  %5032 = vmatprep.subr.bf16.mxu0 0
  %5033 = vmatpush1.bf16.msra.mxu0 %v3624
  %5034 = vmatprep.subr.bf16.mxu0 0
  %5035 = vmatpush1.bf16.msra.mxu0 %v3625
  %5036 = vmatprep.subr.bf16.mxu0 0
  %5037 = vmatpush1.bf16.msra.mxu0 %v3626
  %5038 = vmatprep.subr.bf16.mxu0 0
  %5039 = vmatpush1.bf16.msra.mxu0 %v3627
  %5040 = vmatprep.subr.bf16.mxu0 0
  %5041 = vmatpush1.bf16.msra.mxu0 %v3628
  %5042 = vmatprep.subr.bf16.mxu0 0
  %5043 = vmatpush1.bf16.msra.mxu0 %v3629
  %5044 = vmatprep.subr.bf16.mxu0 0
  %5045 = vmatpush1.bf16.msra.mxu0 %v3630
  %5046 = vmatprep.subr.bf16.mxu0 0
  %5047 = vmatpush1.bf16.msra.mxu0 %v3631
  %5048 = vmatprep.subr.bf16.mxu0 0
  %5049 = vmatpush1.bf16.msra.mxu0 %v3632
  %5050 = vmatprep.subr.bf16.mxu0 0
  %5051 = vmatpush1.bf16.msra.mxu0 %v3633
  %5052 = vmatprep.subr.bf16.mxu0 0
  %5053 = vmatpush1.bf16.msra.mxu0 %v3634
  %5054 = vmatprep.subr.bf16.mxu0 0
  %5055 = vmatpush1.bf16.msra.mxu0 %v3635
  %5056 = vmatprep.subr.bf16.mxu0 0
  %5057 = vmatpush1.bf16.msra.mxu0 %v3636
  %5058 = vmatprep.subr.bf16.mxu0 0
  %5059 = vmatpush1.bf16.msra.mxu0 %v3637
  %5060 = vmatprep.subr.bf16.mxu0 0
  %5061 = vmatpush1.bf16.msra.mxu0 %v3638
  %5062 = vmatprep.subr.bf16.mxu0 0
  %5063 = vmatpush1.bf16.msra.mxu0 %v3639
  %5064 = vmatprep.mubr.bf16.mxu0 %v1225
  %5065 = vmatmul.mubr.bf16.gmra.mrb[0].mxu0 %v1224
  %v5066 = vpop.f32.mrb[0].mxu0
  %v5067 = vadd.f32 %v5027, %v5066
  %v5068 = vpop.f32.mrb[0].mxu0
  %v5069 = vpop.f32.mrb[0].mxu0
  %v5070 = vpop.f32.mrb[0].mxu0
  %5071 = vdwg.mxu0
  %5072 = vmatprep.subr.bf16.mxu0 0
  %5073 = vmatpush1.bf16.msra.mxu0 %v3640
  %5074 = vmatprep.subr.bf16.mxu0 0
  %5075 = vmatpush1.bf16.msra.mxu0 %v3641
  %5076 = vmatprep.subr.bf16.mxu0 0
  %5077 = vmatpush1.bf16.msra.mxu0 %v3642
  %5078 = vmatprep.subr.bf16.mxu0 0
  %5079 = vmatpush1.bf16.msra.mxu0 %v3643
  %5080 = vmatprep.subr.bf16.mxu0 0
  %5081 = vmatpush1.bf16.msra.mxu0 %v3644
  %5082 = vmatprep.subr.bf16.mxu0 0
  %5083 = vmatpush1.bf16.msra.mxu0 %v3645
  %5084 = vmatprep.subr.bf16.mxu0 0
  %5085 = vmatpush1.bf16.msra.mxu0 %v3646
  %5086 = vmatprep.subr.bf16.mxu0 0
  %5087 = vmatpush1.bf16.msra.mxu0 %v3647
  %5088 = vmatprep.subr.bf16.mxu0 0
  %5089 = vmatpush1.bf16.msra.mxu0 %v3648
  %5090 = vmatprep.subr.bf16.mxu0 0
  %5091 = vmatpush1.bf16.msra.mxu0 %v3649
  %5092 = vmatprep.subr.bf16.mxu0 0
  %5093 = vmatpush1.bf16.msra.mxu0 %v3650
  %5094 = vmatprep.subr.bf16.mxu0 0
  %5095 = vmatpush1.bf16.msra.mxu0 %v3651
  %5096 = vmatprep.subr.bf16.mxu0 0
  %5097 = vmatpush1.bf16.msra.mxu0 %v3652
  %5098 = vmatprep.subr.bf16.mxu0 0
  %5099 = vmatpush1.bf16.msra.mxu0 %v3653
  %5100 = vmatprep.subr.bf16.mxu0 0
  %5101 = vmatpush1.bf16.msra.mxu0 %v3654
  %5102 = vmatprep.subr.bf16.mxu0 0
  %5103 = vmatpush1.bf16.msra.mxu0 %v3655
  %5104 = vmatprep.mubr.bf16.mxu0 %v1227
  %5105 = vmatmul.mubr.bf16.gmra.mrb[0].mxu0 %v1226
  %v5106 = vpop.f32.mrb[0].mxu0
  %v5107 = vadd.f32 %v5067, %v5106
  %v5108 = vpop.f32.mrb[0].mxu0
  %v5109 = vpop.f32.mrb[0].mxu0
  %v5110 = vpop.f32.mrb[0].mxu0
  %5111 = vdwg.mxu0
  %5112 = vmatprep.subr.bf16.mxu0 0
  %5113 = vmatpush1.bf16.msra.mxu0 %v3656
  %5114 = vmatprep.subr.bf16.mxu0 0
  %5115 = vmatpush1.bf16.msra.mxu0 %v3657
  %5116 = vmatprep.subr.bf16.mxu0 0
  %5117 = vmatpush1.bf16.msra.mxu0 %v3658
  %5118 = vmatprep.subr.bf16.mxu0 0
  %5119 = vmatpush1.bf16.msra.mxu0 %v3659
  %5120 = vmatprep.subr.bf16.mxu0 0
  %5121 = vmatpush1.bf16.msra.mxu0 %v3660
  %5122 = vmatprep.subr.bf16.mxu0 0
  %5123 = vmatpush1.bf16.msra.mxu0 %v3661
  %5124 = vmatprep.subr.bf16.mxu0 0
  %5125 = vmatpush1.bf16.msra.mxu0 %v3662
  %5126 = vmatprep.subr.bf16.mxu0 0
  %5127 = vmatpush1.bf16.msra.mxu0 %v3663
  %5128 = vmatprep.subr.bf16.mxu0 0
  %5129 = vmatpush1.bf16.msra.mxu0 %v3664
  %5130 = vmatprep.subr.bf16.mxu0 0
  %5131 = vmatpush1.bf16.msra.mxu0 %v3665
  %5132 = vmatprep.subr.bf16.mxu0 0
  %5133 = vmatpush1.bf16.msra.mxu0 %v3666
  %5134 = vmatprep.subr.bf16.mxu0 0
  %5135 = vmatpush1.bf16.msra.mxu0 %v3667
  %5136 = vmatprep.subr.bf16.mxu0 0
  %5137 = vmatpush1.bf16.msra.mxu0 %v3668
  %5138 = vmatprep.subr.bf16.mxu0 0
  %5139 = vmatpush1.bf16.msra.mxu0 %v3669
  %5140 = vmatprep.subr.bf16.mxu0 0
  %5141 = vmatpush1.bf16.msra.mxu0 %v3670
  %5142 = vmatprep.subr.bf16.mxu0 0
  %5143 = vmatpush1.bf16.msra.mxu0 %v3671
  %5144 = vmatprep.mubr.bf16.mxu0 %v1229
  %5145 = vmatmul.mubr.bf16.gmra.mrb[0].mxu0 %v1228
  %v5146 = vpop.f32.mrb[0].mxu0
  %v5147 = vadd.f32 %v5107, %v5146
  %v5148 = vpop.f32.mrb[0].mxu0
  %v5149 = vpop.f32.mrb[0].mxu0
  %v5150 = vpop.f32.mrb[0].mxu0
  %5151 = vdwg.mxu0
  %5152 = vmatprep.subr.bf16.mxu0 0
  %5153 = vmatpush1.bf16.msra.mxu0 %v3672
  %5154 = vmatprep.subr.bf16.mxu0 0
  %5155 = vmatpush1.bf16.msra.mxu0 %v3673
  %5156 = vmatprep.subr.bf16.mxu0 0
  %5157 = vmatpush1.bf16.msra.mxu0 %v3674
  %5158 = vmatprep.subr.bf16.mxu0 0
  %5159 = vmatpush1.bf16.msra.mxu0 %v3675
  %5160 = vmatprep.subr.bf16.mxu0 0
  %5161 = vmatpush1.bf16.msra.mxu0 %v3676
  %5162 = vmatprep.subr.bf16.mxu0 0
  %5163 = vmatpush1.bf16.msra.mxu0 %v3677
  %5164 = vmatprep.subr.bf16.mxu0 0
  %5165 = vmatpush1.bf16.msra.mxu0 %v3678
  %5166 = vmatprep.subr.bf16.mxu0 0
  %5167 = vmatpush1.bf16.msra.mxu0 %v3679
  %5168 = vmatprep.subr.bf16.mxu0 0
  %5169 = vmatpush1.bf16.msra.mxu0 %v3680
  %5170 = vmatprep.subr.bf16.mxu0 0
  %5171 = vmatpush1.bf16.msra.mxu0 %v3681
  %5172 = vmatprep.subr.bf16.mxu0 0
  %5173 = vmatpush1.bf16.msra.mxu0 %v3682
  %5174 = vmatprep.subr.bf16.mxu0 0
  %5175 = vmatpush1.bf16.msra.mxu0 %v3683
  %5176 = vmatprep.subr.bf16.mxu0 0
  %5177 = vmatpush1.bf16.msra.mxu0 %v3684
  %5178 = vmatprep.subr.bf16.mxu0 0
  %5179 = vmatpush1.bf16.msra.mxu0 %v3685
  %5180 = vmatprep.subr.bf16.mxu0 0
  %5181 = vmatpush1.bf16.msra.mxu0 %v3686
  %5182 = vmatprep.subr.bf16.mxu0 0
  %5183 = vmatpush1.bf16.msra.mxu0 %v3687
  %5184 = vmatprep.mubr.bf16.mxu0 %v1231
  %5185 = vmatmul.mubr.bf16.gmra.mrb[0].mxu0 %v1230
  %v5186 = vpop.f32.mrb[0].mxu0
  %v5187 = vadd.f32 %v5147, %v5186
  %v5188 = vpop.f32.mrb[0].mxu0
  %v5189 = vpop.f32.mrb[0].mxu0
  %v5190 = vpop.f32.mrb[0].mxu0
  %5191 = vdwg.mxu0
  %5192 = vmatprep.subr.bf16.mxu0 0
  %5193 = vmatpush1.bf16.msra.mxu0 %v3688
  %5194 = vmatprep.subr.bf16.mxu0 0
  %5195 = vmatpush1.bf16.msra.mxu0 %v3689
  %5196 = vmatprep.subr.bf16.mxu0 0
  %5197 = vmatpush1.bf16.msra.mxu0 %v3690
  %5198 = vmatprep.subr.bf16.mxu0 0
  %5199 = vmatpush1.bf16.msra.mxu0 %v3691
  %5200 = vmatprep.subr.bf16.mxu0 0
  %5201 = vmatpush1.bf16.msra.mxu0 %v3692
  %5202 = vmatprep.subr.bf16.mxu0 0
  %5203 = vmatpush1.bf16.msra.mxu0 %v3693
  %5204 = vmatprep.subr.bf16.mxu0 0
  %5205 = vmatpush1.bf16.msra.mxu0 %v3694
  %5206 = vmatprep.subr.bf16.mxu0 0
  %5207 = vmatpush1.bf16.msra.mxu0 %v3695
  %5208 = vmatprep.subr.bf16.mxu0 0
  %5209 = vmatpush1.bf16.msra.mxu0 %v3696
  %5210 = vmatprep.subr.bf16.mxu0 0
  %5211 = vmatpush1.bf16.msra.mxu0 %v3697
  %5212 = vmatprep.subr.bf16.mxu0 0
  %5213 = vmatpush1.bf16.msra.mxu0 %v3698
  %5214 = vmatprep.subr.bf16.mxu0 0
  %5215 = vmatpush1.bf16.msra.mxu0 %v3699
  %5216 = vmatprep.subr.bf16.mxu0 0
  %5217 = vmatpush1.bf16.msra.mxu0 %v3700
  %5218 = vmatprep.subr.bf16.mxu0 0
  %5219 = vmatpush1.bf16.msra.mxu0 %v3701
  %5220 = vmatprep.subr.bf16.mxu0 0
  %5221 = vmatpush1.bf16.msra.mxu0 %v3702
  %5222 = vmatprep.subr.bf16.mxu0 0
  %5223 = vmatpush1.bf16.msra.mxu0 %v3703
  %5224 = vmatprep.mubr.bf16.mxu0 %v1233
  %5225 = vmatmul.mubr.bf16.gmra.mrb[0].mxu0 %v1232
  %v5226 = vpop.f32.mrb[0].mxu0
  %v5227 = vadd.f32 %v5187, %v5226
  %v5228 = vpop.f32.mrb[0].mxu0
  %v5229 = vpop.f32.mrb[0].mxu0
  %v5230 = vpop.f32.mrb[0].mxu0
  %5231 = vdwg.mxu0
  %5232 = vmatprep.subr.bf16.mxu0 0
  %5233 = vmatpush1.bf16.msra.mxu0 %v3704
  %5234 = vmatprep.subr.bf16.mxu0 0
  %5235 = vmatpush1.bf16.msra.mxu0 %v3705
  %5236 = vmatprep.subr.bf16.mxu0 0
  %5237 = vmatpush1.bf16.msra.mxu0 %v3706
  %5238 = vmatprep.subr.bf16.mxu0 0
  %5239 = vmatpush1.bf16.msra.mxu0 %v3707
  %5240 = vmatprep.subr.bf16.mxu0 0
  %5241 = vmatpush1.bf16.msra.mxu0 %v3708
  %5242 = vmatprep.subr.bf16.mxu0 0
  %5243 = vmatpush1.bf16.msra.mxu0 %v3709
  %5244 = vmatprep.subr.bf16.mxu0 0
  %5245 = vmatpush1.bf16.msra.mxu0 %v3710
  %5246 = vmatprep.subr.bf16.mxu0 0
  %5247 = vmatpush1.bf16.msra.mxu0 %v3711
  %5248 = vmatprep.subr.bf16.mxu0 0
  %5249 = vmatpush1.bf16.msra.mxu0 %v3712
  %5250 = vmatprep.subr.bf16.mxu0 0
  %5251 = vmatpush1.bf16.msra.mxu0 %v3713
  %5252 = vmatprep.subr.bf16.mxu0 0
  %5253 = vmatpush1.bf16.msra.mxu0 %v3714
  %5254 = vmatprep.subr.bf16.mxu0 0
  %5255 = vmatpush1.bf16.msra.mxu0 %v3715
  %5256 = vmatprep.subr.bf16.mxu0 0
  %5257 = vmatpush1.bf16.msra.mxu0 %v3716
  %5258 = vmatprep.subr.bf16.mxu0 0
  %5259 = vmatpush1.bf16.msra.mxu0 %v3717
  %5260 = vmatprep.subr.bf16.mxu0 0
  %5261 = vmatpush1.bf16.msra.mxu0 %v3718
  %5262 = vmatprep.subr.bf16.mxu0 0
  %5263 = vmatpush1.bf16.msra.mxu0 %v3719
  %5264 = vmatprep.mubr.bf16.mxu0 %v1235
  %5265 = vmatmul.mubr.bf16.gmra.mrb[0].mxu0 %v1234
  %v5266 = vpop.f32.mrb[0].mxu0
  %v5267 = vadd.f32 %v5227, %v5266
  %v5268 = vpop.f32.mrb[0].mxu0
  %v5269 = vpop.f32.mrb[0].mxu0
  %v5270 = vpop.f32.mrb[0].mxu0
  %5271 = vdwg.mxu0
  %5272 = vmatprep.subr.bf16.mxu0 0
  %5273 = vmatpush1.bf16.msra.mxu0 %v3720
  %5274 = vmatprep.subr.bf16.mxu0 0
  %5275 = vmatpush1.bf16.msra.mxu0 %v3721
  %5276 = vmatprep.subr.bf16.mxu0 0
  %5277 = vmatpush1.bf16.msra.mxu0 %v3722
  %5278 = vmatprep.subr.bf16.mxu0 0
  %5279 = vmatpush1.bf16.msra.mxu0 %v3723
  %5280 = vmatprep.subr.bf16.mxu0 0
  %5281 = vmatpush1.bf16.msra.mxu0 %v3724
  %5282 = vmatprep.subr.bf16.mxu0 0
  %5283 = vmatpush1.bf16.msra.mxu0 %v3725
  %5284 = vmatprep.subr.bf16.mxu0 0
  %5285 = vmatpush1.bf16.msra.mxu0 %v3726
  %5286 = vmatprep.subr.bf16.mxu0 0
  %5287 = vmatpush1.bf16.msra.mxu0 %v3727
  %5288 = vmatprep.subr.bf16.mxu0 0
  %5289 = vmatpush1.bf16.msra.mxu0 %v3728
  %5290 = vmatprep.subr.bf16.mxu0 0
  %5291 = vmatpush1.bf16.msra.mxu0 %v3729
  %5292 = vmatprep.subr.bf16.mxu0 0
  %5293 = vmatpush1.bf16.msra.mxu0 %v3730
  %5294 = vmatprep.subr.bf16.mxu0 0
  %5295 = vmatpush1.bf16.msra.mxu0 %v3731
  %5296 = vmatprep.subr.bf16.mxu0 0
  %5297 = vmatpush1.bf16.msra.mxu0 %v3732
  %5298 = vmatprep.subr.bf16.mxu0 0
  %5299 = vmatpush1.bf16.msra.mxu0 %v3733
  %5300 = vmatprep.subr.bf16.mxu0 0
  %5301 = vmatpush1.bf16.msra.mxu0 %v3734
  %5302 = vmatprep.subr.bf16.mxu0 0
  %5303 = vmatpush1.bf16.msra.mxu0 %v3735
  %5304 = vmatprep.mubr.bf16.mxu0 %v1237
  %5305 = vmatmul.mubr.bf16.gmra.mrb[0].mxu0 %v1236
  %v5306 = vpop.f32.mrb[0].mxu0
  %v5307 = vadd.f32 %v5267, %v5306
  %v5308 = vpop.f32.mrb[0].mxu0
  %v5309 = vpop.f32.mrb[0].mxu0
  %v5310 = vpop.f32.mrb[0].mxu0
  %5311 = vdwg.mxu0
  %5312 = vmatprep.subr.bf16.mxu0 0
  %5313 = vmatpush1.bf16.msra.mxu0 %v3736
  %5314 = vmatprep.subr.bf16.mxu0 0
  %5315 = vmatpush1.bf16.msra.mxu0 %v3737
  %5316 = vmatprep.subr.bf16.mxu0 0
  %5317 = vmatpush1.bf16.msra.mxu0 %v3738
  %5318 = vmatprep.subr.bf16.mxu0 0
  %5319 = vmatpush1.bf16.msra.mxu0 %v3739
  %5320 = vmatprep.subr.bf16.mxu0 0
  %5321 = vmatpush1.bf16.msra.mxu0 %v3740
  %5322 = vmatprep.subr.bf16.mxu0 0
  %5323 = vmatpush1.bf16.msra.mxu0 %v3741
  %5324 = vmatprep.subr.bf16.mxu0 0
  %5325 = vmatpush1.bf16.msra.mxu0 %v3742
  %5326 = vmatprep.subr.bf16.mxu0 0
  %5327 = vmatpush1.bf16.msra.mxu0 %v3743
  %5328 = vmatprep.subr.bf16.mxu0 0
  %5329 = vmatpush1.bf16.msra.mxu0 %v3744
  %5330 = vmatprep.subr.bf16.mxu0 0
  %5331 = vmatpush1.bf16.msra.mxu0 %v3745
  %5332 = vmatprep.subr.bf16.mxu0 0
  %5333 = vmatpush1.bf16.msra.mxu0 %v3746
  %5334 = vmatprep.subr.bf16.mxu0 0
  %5335 = vmatpush1.bf16.msra.mxu0 %v3747
  %5336 = vmatprep.subr.bf16.mxu0 0
  %5337 = vmatpush1.bf16.msra.mxu0 %v3748
  %5338 = vmatprep.subr.bf16.mxu0 0
  %5339 = vmatpush1.bf16.msra.mxu0 %v3749
  %5340 = vmatprep.subr.bf16.mxu0 0
  %5341 = vmatpush1.bf16.msra.mxu0 %v3750
  %5342 = vmatprep.subr.bf16.mxu0 0
  %5343 = vmatpush1.bf16.msra.mxu0 %v3751
  %5344 = vmatprep.mubr.bf16.mxu0 %v1239
  %5345 = vmatmul.mubr.bf16.gmra.mrb[0].mxu0 %v1238
  %v5346 = vpop.f32.mrb[0].mxu0
  %v5347 = vadd.f32 %v5307, %v5346
  %v5348 = vpop.f32.mrb[0].mxu0
  %v5349 = vpop.f32.mrb[0].mxu0
  %v5350 = vpop.f32.mrb[0].mxu0
  %5351 = vdwg.mxu0
  %5352 = vmatprep.subr.bf16.mxu0 0
  %5353 = vmatpush1.bf16.msra.mxu0 %v3752
  %5354 = vmatprep.subr.bf16.mxu0 0
  %5355 = vmatpush1.bf16.msra.mxu0 %v3753
  %5356 = vmatprep.subr.bf16.mxu0 0
  %5357 = vmatpush1.bf16.msra.mxu0 %v3754
  %5358 = vmatprep.subr.bf16.mxu0 0
  %5359 = vmatpush1.bf16.msra.mxu0 %v3755
  %5360 = vmatprep.subr.bf16.mxu0 0
  %5361 = vmatpush1.bf16.msra.mxu0 %v3756
  %5362 = vmatprep.subr.bf16.mxu0 0
  %5363 = vmatpush1.bf16.msra.mxu0 %v3757
  %5364 = vmatprep.subr.bf16.mxu0 0
  %5365 = vmatpush1.bf16.msra.mxu0 %v3758
  %5366 = vmatprep.subr.bf16.mxu0 0
  %5367 = vmatpush1.bf16.msra.mxu0 %v3759
  %5368 = vmatprep.subr.bf16.mxu0 0
  %5369 = vmatpush1.bf16.msra.mxu0 %v3760
  %5370 = vmatprep.subr.bf16.mxu0 0
  %5371 = vmatpush1.bf16.msra.mxu0 %v3761
  %5372 = vmatprep.subr.bf16.mxu0 0
  %5373 = vmatpush1.bf16.msra.mxu0 %v3762
  %5374 = vmatprep.subr.bf16.mxu0 0
  %5375 = vmatpush1.bf16.msra.mxu0 %v3763
  %5376 = vmatprep.subr.bf16.mxu0 0
  %5377 = vmatpush1.bf16.msra.mxu0 %v3764
  %5378 = vmatprep.subr.bf16.mxu0 0
  %5379 = vmatpush1.bf16.msra.mxu0 %v3765
  %5380 = vmatprep.subr.bf16.mxu0 0
  %5381 = vmatpush1.bf16.msra.mxu0 %v3766
  %5382 = vmatprep.subr.bf16.mxu0 0
  %5383 = vmatpush1.bf16.msra.mxu0 %v3767
  %5384 = vmatprep.mubr.bf16.mxu0 %v1241
  %5385 = vmatmul.mubr.bf16.gmra.mrb[0].mxu0 %v1240
  %v5386 = vpop.f32.mrb[0].mxu0
  %v5387 = vadd.f32 %v5347, %v5386
  %v5388 = vpop.f32.mrb[0].mxu0
  %v5389 = vpop.f32.mrb[0].mxu0
  %v5390 = vpop.f32.mrb[0].mxu0
  %5391 = vdwg.mxu0
  %5392 = vmatprep.subr.bf16.mxu0 0
  %5393 = vmatpush1.bf16.msra.mxu0 %v3768
  %5394 = vmatprep.subr.bf16.mxu0 0
  %5395 = vmatpush1.bf16.msra.mxu0 %v3769
  %5396 = vmatprep.subr.bf16.mxu0 0
  %5397 = vmatpush1.bf16.msra.mxu0 %v3770
  %5398 = vmatprep.subr.bf16.mxu0 0
  %5399 = vmatpush1.bf16.msra.mxu0 %v3771
  %5400 = vmatprep.subr.bf16.mxu0 0
  %5401 = vmatpush1.bf16.msra.mxu0 %v3772
  %5402 = vmatprep.subr.bf16.mxu0 0
  %5403 = vmatpush1.bf16.msra.mxu0 %v3773
  %5404 = vmatprep.subr.bf16.mxu0 0
  %5405 = vmatpush1.bf16.msra.mxu0 %v3774
  %5406 = vmatprep.subr.bf16.mxu0 0
  %5407 = vmatpush1.bf16.msra.mxu0 %v3775
  %5408 = vmatprep.subr.bf16.mxu0 0
  %5409 = vmatpush1.bf16.msra.mxu0 %v3776
  %5410 = vmatprep.subr.bf16.mxu0 0
  %5411 = vmatpush1.bf16.msra.mxu0 %v3777
  %5412 = vmatprep.subr.bf16.mxu0 0
  %5413 = vmatpush1.bf16.msra.mxu0 %v3778
  %5414 = vmatprep.subr.bf16.mxu0 0
  %5415 = vmatpush1.bf16.msra.mxu0 %v3779
  %5416 = vmatprep.subr.bf16.mxu0 0
  %5417 = vmatpush1.bf16.msra.mxu0 %v3780
  %5418 = vmatprep.subr.bf16.mxu0 0
  %5419 = vmatpush1.bf16.msra.mxu0 %v3781
  %5420 = vmatprep.subr.bf16.mxu0 0
  %5421 = vmatpush1.bf16.msra.mxu0 %v3782
  %5422 = vmatprep.subr.bf16.mxu0 0
  %5423 = vmatpush1.bf16.msra.mxu0 %v3783
  %5424 = vmatprep.mubr.bf16.mxu0 %v1243
  %5425 = vmatmul.mubr.bf16.gmra.mrb[0].mxu0 %v1242
  %v5426 = vpop.f32.mrb[0].mxu0
  %v5427 = vadd.f32 %v5387, %v5426
  %v5428 = vpop.f32.mrb[0].mxu0
  %v5429 = vpop.f32.mrb[0].mxu0
  %v5430 = vpop.f32.mrb[0].mxu0
  %5431 = vdwg.mxu0
  %5432 = vmatprep.subr.bf16.mxu0 0
  %5433 = vmatpush1.bf16.msra.mxu0 %v3784
  %5434 = vmatprep.subr.bf16.mxu0 0
  %5435 = vmatpush1.bf16.msra.mxu0 %v3785
  %5436 = vmatprep.subr.bf16.mxu0 0
  %5437 = vmatpush1.bf16.msra.mxu0 %v3786
  %5438 = vmatprep.subr.bf16.mxu0 0
  %5439 = vmatpush1.bf16.msra.mxu0 %v3787
  %5440 = vmatprep.subr.bf16.mxu0 0
  %5441 = vmatpush1.bf16.msra.mxu0 %v3788
  %5442 = vmatprep.subr.bf16.mxu0 0
  %5443 = vmatpush1.bf16.msra.mxu0 %v3789
  %5444 = vmatprep.subr.bf16.mxu0 0
  %5445 = vmatpush1.bf16.msra.mxu0 %v3790
  %5446 = vmatprep.subr.bf16.mxu0 0
  %5447 = vmatpush1.bf16.msra.mxu0 %v3791
  %5448 = vmatprep.subr.bf16.mxu0 0
  %5449 = vmatpush1.bf16.msra.mxu0 %v3792
  %5450 = vmatprep.subr.bf16.mxu0 0
  %5451 = vmatpush1.bf16.msra.mxu0 %v3793
  %5452 = vmatprep.subr.bf16.mxu0 0
  %5453 = vmatpush1.bf16.msra.mxu0 %v3794
  %5454 = vmatprep.subr.bf16.mxu0 0
  %5455 = vmatpush1.bf16.msra.mxu0 %v3795
  %5456 = vmatprep.subr.bf16.mxu0 0
  %5457 = vmatpush1.bf16.msra.mxu0 %v3796
  %5458 = vmatprep.subr.bf16.mxu0 0
  %5459 = vmatpush1.bf16.msra.mxu0 %v3797
  %5460 = vmatprep.subr.bf16.mxu0 0
  %5461 = vmatpush1.bf16.msra.mxu0 %v3798
  %5462 = vmatprep.subr.bf16.mxu0 0
  %5463 = vmatpush1.bf16.msra.mxu0 %v3799
  %5464 = vmatprep.mubr.bf16.mxu0 %v1245
  %5465 = vmatmul.mubr.bf16.gmra.mrb[0].mxu0 %v1244
  %v5466 = vpop.f32.mrb[0].mxu0
  %v5467 = vadd.f32 %v5427, %v5466
  %v5468 = vpop.f32.mrb[0].mxu0
  %v5469 = vpop.f32.mrb[0].mxu0
  %v5470 = vpop.f32.mrb[0].mxu0
  %5471 = vdwg.mxu0
  %5472 = vmatprep.subr.bf16.mxu0 0
  %5473 = vmatpush1.bf16.msra.mxu0 %v3800
  %5474 = vmatprep.subr.bf16.mxu0 0
  %5475 = vmatpush1.bf16.msra.mxu0 %v3801
  %5476 = vmatprep.subr.bf16.mxu0 0
  %5477 = vmatpush1.bf16.msra.mxu0 %v3802
  %5478 = vmatprep.subr.bf16.mxu0 0
  %5479 = vmatpush1.bf16.msra.mxu0 %v3803
  %5480 = vmatprep.subr.bf16.mxu0 0
  %5481 = vmatpush1.bf16.msra.mxu0 %v3804
  %5482 = vmatprep.subr.bf16.mxu0 0
  %5483 = vmatpush1.bf16.msra.mxu0 %v3805
  %5484 = vmatprep.subr.bf16.mxu0 0
  %5485 = vmatpush1.bf16.msra.mxu0 %v3806
  %5486 = vmatprep.subr.bf16.mxu0 0
  %5487 = vmatpush1.bf16.msra.mxu0 %v3807
  %5488 = vmatprep.subr.bf16.mxu0 0
  %5489 = vmatpush1.bf16.msra.mxu0 %v3808
  %5490 = vmatprep.subr.bf16.mxu0 0
  %5491 = vmatpush1.bf16.msra.mxu0 %v3809
  %5492 = vmatprep.subr.bf16.mxu0 0
  %5493 = vmatpush1.bf16.msra.mxu0 %v3810
  %5494 = vmatprep.subr.bf16.mxu0 0
  %5495 = vmatpush1.bf16.msra.mxu0 %v3811
  %5496 = vmatprep.subr.bf16.mxu0 0
  %5497 = vmatpush1.bf16.msra.mxu0 %v3812
  %5498 = vmatprep.subr.bf16.mxu0 0
  %5499 = vmatpush1.bf16.msra.mxu0 %v3813
  %5500 = vmatprep.subr.bf16.mxu0 0
  %5501 = vmatpush1.bf16.msra.mxu0 %v3814
  %5502 = vmatprep.subr.bf16.mxu0 0
  %5503 = vmatpush1.bf16.msra.mxu0 %v3815
  %5504 = vmatprep.mubr.bf16.mxu0 %v1247
  %5505 = vmatmul.mubr.bf16.gmra.mrb[0].mxu0 %v1246
  %v5506 = vpop.f32.mrb[0].mxu0
  %v5507 = vadd.f32 %v5467, %v5506
  %v5508 = vpop.f32.mrb[0].mxu0
  %v5509 = vpop.f32.mrb[0].mxu0
  %v5510 = vpop.f32.mrb[0].mxu0
  %5511 = vdwg.mxu0
  %5512 = vmatprep.subr.bf16.mxu0 0
  %5513 = vmatpush1.bf16.msra.mxu0 %v3816
  %5514 = vmatprep.subr.bf16.mxu0 0
  %5515 = vmatpush1.bf16.msra.mxu0 %v3817
  %5516 = vmatprep.subr.bf16.mxu0 0
  %5517 = vmatpush1.bf16.msra.mxu0 %v3818
  %5518 = vmatprep.subr.bf16.mxu0 0
  %5519 = vmatpush1.bf16.msra.mxu0 %v3819
  %5520 = vmatprep.subr.bf16.mxu0 0
  %5521 = vmatpush1.bf16.msra.mxu0 %v3820
  %5522 = vmatprep.subr.bf16.mxu0 0
  %5523 = vmatpush1.bf16.msra.mxu0 %v3821
  %5524 = vmatprep.subr.bf16.mxu0 0
  %5525 = vmatpush1.bf16.msra.mxu0 %v3822
  %5526 = vmatprep.subr.bf16.mxu0 0
  %5527 = vmatpush1.bf16.msra.mxu0 %v3823
  %5528 = vmatprep.subr.bf16.mxu0 0
  %5529 = vmatpush1.bf16.msra.mxu0 %v3824
  %5530 = vmatprep.subr.bf16.mxu0 0
  %5531 = vmatpush1.bf16.msra.mxu0 %v3825
  %5532 = vmatprep.subr.bf16.mxu0 0
  %5533 = vmatpush1.bf16.msra.mxu0 %v3826
  %5534 = vmatprep.subr.bf16.mxu0 0
  %5535 = vmatpush1.bf16.msra.mxu0 %v3827
  %5536 = vmatprep.subr.bf16.mxu0 0
  %5537 = vmatpush1.bf16.msra.mxu0 %v3828
  %5538 = vmatprep.subr.bf16.mxu0 0
  %5539 = vmatpush1.bf16.msra.mxu0 %v3829
  %5540 = vmatprep.subr.bf16.mxu0 0
  %5541 = vmatpush1.bf16.msra.mxu0 %v3830
  %5542 = vmatprep.subr.bf16.mxu0 0
  %5543 = vmatpush1.bf16.msra.mxu0 %v3831
  %5544 = vmatprep.mubr.bf16.mxu0 %v1249
  %5545 = vmatmul.mubr.bf16.gmra.mrb[0].mxu0 %v1248
  %v5546 = vpop.f32.mrb[0].mxu0
  %v5547 = vadd.f32 %v5507, %v5546
  %v5548 = vpop.f32.mrb[0].mxu0
  %v5549 = vpop.f32.mrb[0].mxu0
  %v5550 = vpop.f32.mrb[0].mxu0
  %5551 = vdwg.mxu0
  %5552 = vmatprep.subr.bf16.mxu0 0
  %5553 = vmatpush1.bf16.msra.mxu0 %v3832
  %5554 = vmatprep.subr.bf16.mxu0 0
  %5555 = vmatpush1.bf16.msra.mxu0 %v3833
  %5556 = vmatprep.subr.bf16.mxu0 0
  %5557 = vmatpush1.bf16.msra.mxu0 %v3834
  %5558 = vmatprep.subr.bf16.mxu0 0
  %5559 = vmatpush1.bf16.msra.mxu0 %v3835
  %5560 = vmatprep.subr.bf16.mxu0 0
  %5561 = vmatpush1.bf16.msra.mxu0 %v3836
  %5562 = vmatprep.subr.bf16.mxu0 0
  %5563 = vmatpush1.bf16.msra.mxu0 %v3837
  %5564 = vmatprep.subr.bf16.mxu0 0
  %5565 = vmatpush1.bf16.msra.mxu0 %v3838
  %5566 = vmatprep.subr.bf16.mxu0 0
  %5567 = vmatpush1.bf16.msra.mxu0 %v3839
  %5568 = vmatprep.subr.bf16.mxu0 0
  %5569 = vmatpush1.bf16.msra.mxu0 %v3840
  %5570 = vmatprep.subr.bf16.mxu0 0
  %5571 = vmatpush1.bf16.msra.mxu0 %v3841
  %5572 = vmatprep.subr.bf16.mxu0 0
  %5573 = vmatpush1.bf16.msra.mxu0 %v3842
  %5574 = vmatprep.subr.bf16.mxu0 0
  %5575 = vmatpush1.bf16.msra.mxu0 %v3843
  %5576 = vmatprep.subr.bf16.mxu0 0
  %5577 = vmatpush1.bf16.msra.mxu0 %v3844
  %5578 = vmatprep.subr.bf16.mxu0 0
  %5579 = vmatpush1.bf16.msra.mxu0 %v3845
  %5580 = vmatprep.subr.bf16.mxu0 0
  %5581 = vmatpush1.bf16.msra.mxu0 %v3846
  %5582 = vmatprep.subr.bf16.mxu0 0
  %5583 = vmatpush1.bf16.msra.mxu0 %v3847
  %5584 = vmatprep.mubr.bf16.mxu0 %v1251
  %5585 = vmatmul.mubr.bf16.gmra.mrb[0].mxu0 %v1250
  %v5586 = vpop.f32.mrb[0].mxu0
  %v5587 = vadd.f32 %v5547, %v5586
  %v5588 = vpop.f32.mrb[0].mxu0
  %v5589 = vpop.f32.mrb[0].mxu0
  %v5590 = vpop.f32.mrb[0].mxu0
  %5591 = vdwg.mxu0
  %5592 = vmatprep.subr.bf16.mxu0 0
  %5593 = vmatpush1.bf16.msra.mxu0 %v3848
  %5594 = vmatprep.subr.bf16.mxu0 0
  %5595 = vmatpush1.bf16.msra.mxu0 %v3849
  %5596 = vmatprep.subr.bf16.mxu0 0
  %5597 = vmatpush1.bf16.msra.mxu0 %v3850
  %5598 = vmatprep.subr.bf16.mxu0 0
  %5599 = vmatpush1.bf16.msra.mxu0 %v3851
  %5600 = vmatprep.subr.bf16.mxu0 0
  %5601 = vmatpush1.bf16.msra.mxu0 %v3852
  %5602 = vmatprep.subr.bf16.mxu0 0
  %5603 = vmatpush1.bf16.msra.mxu0 %v3853
  %5604 = vmatprep.subr.bf16.mxu0 0
  %5605 = vmatpush1.bf16.msra.mxu0 %v3854
  %5606 = vmatprep.subr.bf16.mxu0 0
  %5607 = vmatpush1.bf16.msra.mxu0 %v3855
  %5608 = vmatprep.subr.bf16.mxu0 0
  %5609 = vmatpush1.bf16.msra.mxu0 %v3856
  %5610 = vmatprep.subr.bf16.mxu0 0
  %5611 = vmatpush1.bf16.msra.mxu0 %v3857
  %5612 = vmatprep.subr.bf16.mxu0 0
  %5613 = vmatpush1.bf16.msra.mxu0 %v3858
  %5614 = vmatprep.subr.bf16.mxu0 0
  %5615 = vmatpush1.bf16.msra.mxu0 %v3859
  %5616 = vmatprep.subr.bf16.mxu0 0
  %5617 = vmatpush1.bf16.msra.mxu0 %v3860
  %5618 = vmatprep.subr.bf16.mxu0 0
  %5619 = vmatpush1.bf16.msra.mxu0 %v3861
  %5620 = vmatprep.subr.bf16.mxu0 0
  %5621 = vmatpush1.bf16.msra.mxu0 %v3862
  %5622 = vmatprep.subr.bf16.mxu0 0
  %5623 = vmatpush1.bf16.msra.mxu0 %v3863
  %5624 = vmatprep.mubr.bf16.mxu0 %v1253
  %5625 = vmatmul.mubr.bf16.gmra.mrb[0].mxu0 %v1252
  %v5626 = vpop.f32.mrb[0].mxu0
  %v5627 = vadd.f32 %v5587, %v5626
  %v5628 = vpop.f32.mrb[0].mxu0
  %v5629 = vpop.f32.mrb[0].mxu0
  %v5630 = vpop.f32.mrb[0].mxu0
  %5631 = vdwg.mxu0
  %5632 = vmatprep.subr.bf16.mxu0 0
  %5633 = vmatpush1.bf16.msra.mxu0 %v3864
  %5634 = vmatprep.subr.bf16.mxu0 0
  %5635 = vmatpush1.bf16.msra.mxu0 %v3865
  %5636 = vmatprep.subr.bf16.mxu0 0
  %5637 = vmatpush1.bf16.msra.mxu0 %v3866
  %5638 = vmatprep.subr.bf16.mxu0 0
  %5639 = vmatpush1.bf16.msra.mxu0 %v3867
  %5640 = vmatprep.subr.bf16.mxu0 0
  %5641 = vmatpush1.bf16.msra.mxu0 %v3868
  %5642 = vmatprep.subr.bf16.mxu0 0
  %5643 = vmatpush1.bf16.msra.mxu0 %v3869
  %5644 = vmatprep.subr.bf16.mxu0 0
  %5645 = vmatpush1.bf16.msra.mxu0 %v3870
  %5646 = vmatprep.subr.bf16.mxu0 0
  %5647 = vmatpush1.bf16.msra.mxu0 %v3871
  %5648 = vmatprep.subr.bf16.mxu0 0
  %5649 = vmatpush1.bf16.msra.mxu0 %v3872
  %5650 = vmatprep.subr.bf16.mxu0 0
  %5651 = vmatpush1.bf16.msra.mxu0 %v3873
  %5652 = vmatprep.subr.bf16.mxu0 0
  %5653 = vmatpush1.bf16.msra.mxu0 %v3874
  %5654 = vmatprep.subr.bf16.mxu0 0
  %5655 = vmatpush1.bf16.msra.mxu0 %v3875
  %5656 = vmatprep.subr.bf16.mxu0 0
  %5657 = vmatpush1.bf16.msra.mxu0 %v3876
  %5658 = vmatprep.subr.bf16.mxu0 0
  %5659 = vmatpush1.bf16.msra.mxu0 %v3877
  %5660 = vmatprep.subr.bf16.mxu0 0
  %5661 = vmatpush1.bf16.msra.mxu0 %v3878
  %5662 = vmatprep.subr.bf16.mxu0 0
  %5663 = vmatpush1.bf16.msra.mxu0 %v3879
  %5664 = vmatprep.mubr.bf16.mxu0 %v1255
  %5665 = vmatmul.mubr.bf16.gmra.mrb[0].mxu0 %v1254
  %v5666 = vpop.f32.mrb[0].mxu0
  %v5667 = vadd.f32 %v5627, %v5666
  %v5668 = vpop.f32.mrb[0].mxu0
  %v5669 = vpop.f32.mrb[0].mxu0
  %v5670 = vpop.f32.mrb[0].mxu0
  %5671 = vdwg.mxu0
  %vm5672 = vcmp.gt.f32.partialorder %v5667, 0.0
  %v5673 = vmul.f32 %v5667, 0.01
  %v5674 = vsel %vm5672, %v5667, %v5673
  %v5675 = vld [vmem:[%s1] sm:$0xff]
  %v5676 = vld [vmem:[%s1 + $0x8] sm:$0xff]
  %v5677 = vld [vmem:[%s1 + $0x10] sm:$0xff]
  %v5678 = vld [vmem:[%s1 + $0x18] sm:$0xff]
  %v5679 = vld [vmem:[%s1 + $0x20] sm:$0xff]
  %v5680 = vld [vmem:[%s1 + $0x28] sm:$0xff]
  %v5681 = vld [vmem:[%s4] sm:$0xff]
  %v5682 = vld [vmem:[%s4 + $0x8] sm:$0xff]
  %v5683 = vld [vmem:[%s4 + $0x10] sm:$0xff]
  %v5684 = vld [vmem:[%s4 + $0x18] sm:$0xff]
  %v5685 = vld [vmem:[%s4 + $0x20] sm:$0xff]
  %v5686 = vld [vmem:[%s4 + $0x28] sm:$0xff]
  %v5687 = vld [vmem:[%s4 + $0x30] sm:$0xff]
  %v5688 = vld [vmem:[%s4 + $0x38] sm:$0xff]
  %v5689 = vld [vmem:[%s4 + $0x40] sm:$0xff]
  %v5690 = vld [vmem:[%s4 + $0x48] sm:$0xff]
  %v5691 = vld [vmem:[%s4 + $0x50] sm:$0xff]
  %v5692 = vld [vmem:[%s4 + $0x58] sm:$0xff]
  %v5693 = vld [vmem:[%s4 + $0x60] sm:$0xff]
  %v5694 = vld [vmem:[%s4 + $0x68] sm:$0xff]
  %v5695 = vld [vmem:[%s4 + $0x70] sm:$0xff]
  %v5696 = vld [vmem:[%s4 + $0x78] sm:$0xff]
  %v5697 = vld [vmem:[%s4 + $0x80] sm:$0xff]
  %v5698 = vld [vmem:[%s4 + $0x88] sm:$0xff]
  %v5699 = vld [vmem:[%s4 + $0x90] sm:$0xff]
  %v5700 = vld [vmem:[%s4 + $0x98] sm:$0xff]
  %v5701 = vld [vmem:[%s4 + $0xa0] sm:$0xff]
  %v5702 = vld [vmem:[%s4 + $0xa8] sm:$0xff]
  %v5703 = vld [vmem:[%s4 + $0xb0] sm:$0xff]
  %v5704 = vld [vmem:[%s4 + $0xb8] sm:$0xff]
  %v5705 = vld [vmem:[%s4 + $0xc0] sm:$0xff]
  %v5706 = vld [vmem:[%s4 + $0xc8] sm:$0xff]
  %v5707 = vld [vmem:[%s4 + $0xd0] sm:$0xff]
  %v5708 = vld [vmem:[%s4 + $0xd8] sm:$0xff]
  %v5709 = vld [vmem:[%s4 + $0xe0] sm:$0xff]
  %v5710 = vld [vmem:[%s4 + $0xe8] sm:$0xff]
  %v5711 = vld [vmem:[%s4 + $0xf0] sm:$0xff]
  %v5712 = vld [vmem:[%s4 + $0xf8] sm:$0xff]
  %v5713 = vld [vmem:[%s4 + $0x100] sm:$0xff]
  %v5714 = vld [vmem:[%s4 + $0x108] sm:$0xff]
  %v5715 = vld [vmem:[%s4 + $0x110] sm:$0xff]
  %v5716 = vld [vmem:[%s4 + $0x118] sm:$0xff]
  %v5717 = vld [vmem:[%s4 + $0x120] sm:$0xff]
  %v5718 = vld [vmem:[%s4 + $0x128] sm:$0xff]
  %v5719 = vld [vmem:[%s4 + $0x130] sm:$0xff]
  %v5720 = vld [vmem:[%s4 + $0x138] sm:$0xff]
  %v5721 = vld [vmem:[%s4 + $0x140] sm:$0xff]
  %v5722 = vld [vmem:[%s4 + $0x148] sm:$0xff]
  %v5723 = vld [vmem:[%s4 + $0x150] sm:$0xff]
  %v5724 = vld [vmem:[%s4 + $0x158] sm:$0xff]
  %v5725 = vld [vmem:[%s4 + $0x160] sm:$0xff]
  %v5726 = vld [vmem:[%s4 + $0x168] sm:$0xff]
  %v5727 = vld [vmem:[%s4 + $0x170] sm:$0xff]
  %v5728 = vld [vmem:[%s4 + $0x178] sm:$0xff]
  %v5729 = vld [vmem:[%s4 + $0x180] sm:$0xff]
  %v5730 = vld [vmem:[%s4 + $0x188] sm:$0xff]
  %v5731 = vld [vmem:[%s4 + $0x190] sm:$0xff]
  %v5732 = vld [vmem:[%s4 + $0x198] sm:$0xff]
  %v5733 = vld [vmem:[%s4 + $0x1a0] sm:$0xff]
  %v5734 = vld [vmem:[%s4 + $0x1a8] sm:$0xff]
  %v5735 = vld [vmem:[%s4 + $0x1b0] sm:$0xff]
  %v5736 = vld [vmem:[%s4 + $0x1b8] sm:$0xff]
  %v5737 = vld [vmem:[%s4 + $0x1c0] sm:$0xff]
  %v5738 = vld [vmem:[%s4 + $0x1c8] sm:$0xff]
  %v5739 = vld [vmem:[%s4 + $0x1d0] sm:$0xff]
  %v5740 = vld [vmem:[%s4 + $0x1d8] sm:$0xff]
  %v5741 = vld [vmem:[%s4 + $0x1e0] sm:$0xff]
  %v5742 = vld [vmem:[%s4 + $0x1e8] sm:$0xff]
  %v5743 = vld [vmem:[%s4 + $0x1f0] sm:$0xff]
  %v5744 = vld [vmem:[%s4 + $0x1f8] sm:$0xff]
  %v5745 = vld [vmem:[%s4 + $0x200] sm:$0xff]
  %v5746 = vld [vmem:[%s4 + $0x208] sm:$0xff]
  %v5747 = vld [vmem:[%s4 + $0x210] sm:$0xff]
  %v5748 = vld [vmem:[%s4 + $0x218] sm:$0xff]
  %v5749 = vld [vmem:[%s4 + $0x220] sm:$0xff]
  %v5750 = vld [vmem:[%s4 + $0x228] sm:$0xff]
  %v5751 = vld [vmem:[%s4 + $0x230] sm:$0xff]
  %v5752 = vld [vmem:[%s4 + $0x238] sm:$0xff]
  %v5753 = vld [vmem:[%s4 + $0x240] sm:$0xff]
  %v5754 = vld [vmem:[%s4 + $0x248] sm:$0xff]
  %v5755 = vld [vmem:[%s4 + $0x250] sm:$0xff]
  %v5756 = vld [vmem:[%s4 + $0x258] sm:$0xff]
  %v5757 = vld [vmem:[%s4 + $0x260] sm:$0xff]
  %v5758 = vld [vmem:[%s4 + $0x268] sm:$0xff]
  %v5759 = vld [vmem:[%s4 + $0x270] sm:$0xff]
  %v5760 = vld [vmem:[%s4 + $0x278] sm:$0xff]
  %v5761 = vld [vmem:[%s4 + $0x280] sm:$0xff]
  %v5762 = vld [vmem:[%s4 + $0x288] sm:$0xff]
  %v5763 = vld [vmem:[%s4 + $0x290] sm:$0xff]
  %v5764 = vld [vmem:[%s4 + $0x298] sm:$0xff]
  %v5765 = vld [vmem:[%s4 + $0x2a0] sm:$0xff]
  %v5766 = vld [vmem:[%s4 + $0x2a8] sm:$0xff]
  %v5767 = vld [vmem:[%s4 + $0x2b0] sm:$0xff]
  %v5768 = vld [vmem:[%s4 + $0x2b8] sm:$0xff]
  %v5769 = vld [vmem:[%s4 + $0x2c0] sm:$0xff]
  %v5770 = vld [vmem:[%s4 + $0x2c8] sm:$0xff]
  %v5771 = vld [vmem:[%s4 + $0x2d0] sm:$0xff]
  %v5772 = vld [vmem:[%s4 + $0x2d8] sm:$0xff]
  %v5773 = vld [vmem:[%s4 + $0x2e0] sm:$0xff]
  %v5774 = vld [vmem:[%s4 + $0x2e8] sm:$0xff]
  %v5775 = vld [vmem:[%s4 + $0x2f0] sm:$0xff]
  %v5776 = vld [vmem:[%s4 + $0x2f8] sm:$0xff]
  %v5777 = vld [vmem:[%s5] sm:$0x1]
  %v5779 = vlaneseq
  %v5780 = vshrl.u32 %v5779, 7
  %v5781 = vsub.s32 0, %v5780
  %v5782 = vrot.slane %v5777, %v5781
  %5784 = vmatprep.subr.mxu0 0.0
  %5785 = vmatpush1.msra.mxu0 %v5681
  %5786 = vmatprep.subr.mxu0 0.0
  %5787 = vmatpush1.msra.mxu0 %v5682
  %5788 = vmatprep.subr.mxu0 0.0
  %5789 = vmatpush1.msra.mxu0 %v5683
  %5790 = vmatprep.subr.mxu0 0.0
  %5791 = vmatpush1.msra.mxu0 %v5684
  %5792 = vmatprep.subr.mxu0 0.0
  %5793 = vmatpush1.msra.mxu0 %v5685
  %5794 = vmatprep.subr.mxu0 0.0
  %5795 = vmatpush1.msra.mxu0 %v5686
  %5796 = vmatprep.subr.mxu0 0.0
  %5797 = vmatpush1.msra.mxu0 %v5687
  %5798 = vmatprep.subr.mxu0 0.0
  %5799 = vmatpush1.msra.mxu0 %v5688
  %5800 = vmatprep.subr.mxu0 0.0
  %5801 = vmatpush1.msra.mxu0 %v5689
  %5802 = vmatprep.subr.mxu0 0.0
  %5803 = vmatpush1.msra.mxu0 %v5690
  %5804 = vmatprep.subr.mxu0 0.0
  %5805 = vmatpush1.msra.mxu0 %v5691
  %5806 = vmatprep.subr.mxu0 0.0
  %5807 = vmatpush1.msra.mxu0 %v5692
  %5808 = vmatprep.subr.mxu0 0.0
  %5809 = vmatpush1.msra.mxu0 %v5693
  %5810 = vmatprep.subr.mxu0 0.0
  %5811 = vmatpush1.msra.mxu0 %v5694
  %5812 = vmatprep.subr.mxu0 0.0
  %5813 = vmatpush1.msra.mxu0 %v5695
  %5814 = vmatprep.subr.mxu0 0.0
  %5815 = vmatpush1.msra.mxu0 %v5696
  %5816 = vmatprep.subr.mxu0 0.0
  %5817 = vmatpush1.msra.mxu0 %v5697
  %5818 = vmatprep.subr.mxu0 0.0
  %5819 = vmatpush1.msra.mxu0 %v5698
  %5820 = vmatprep.subr.mxu0 0.0
  %5821 = vmatpush1.msra.mxu0 %v5699
  %5822 = vmatprep.subr.mxu0 0.0
  %5823 = vmatpush1.msra.mxu0 %v5700
  %5824 = vmatprep.subr.mxu0 0.0
  %5825 = vmatpush1.msra.mxu0 %v5701
  %5826 = vmatprep.subr.mxu0 0.0
  %5827 = vmatpush1.msra.mxu0 %v5702
  %5828 = vmatprep.subr.mxu0 0.0
  %5829 = vmatpush1.msra.mxu0 %v5703
  %5830 = vmatprep.subr.mxu0 0.0
  %5831 = vmatpush1.msra.mxu0 %v5704
  %5832 = vmatprep.subr.mxu0 0.0
  %5833 = vmatpush1.msra.mxu0 %v5705
  %5834 = vmatprep.subr.mxu0 0.0
  %5835 = vmatpush1.msra.mxu0 %v5706
  %5836 = vmatprep.subr.mxu0 0.0
  %5837 = vmatpush1.msra.mxu0 %v5707
  %5838 = vmatprep.subr.mxu0 0.0
  %5839 = vmatpush1.msra.mxu0 %v5708
  %5840 = vmatprep.subr.mxu0 0.0
  %5841 = vmatpush1.msra.mxu0 %v5709
  %5842 = vmatprep.subr.mxu0 0.0
  %5843 = vmatpush1.msra.mxu0 %v5710
  %5844 = vmatprep.subr.mxu0 0.0
  %5845 = vmatpush1.msra.mxu0 %v5711
  %5846 = vmatprep.subr.mxu0 0.0
  %5847 = vmatpush1.msra.mxu0 %v5712
  %5848 = vmatprep.mubr.f32.mxu0 %v5676
  %5849 = vmatmul.mubr.f32.gmra.mrb[0].mxu0 %v5675
  %v5850 = vpop.f32.mrb[0].mxu0
  %v5851 = vadd.f32 %v5782, %v5850
  %v5852 = vpop.f32.mrb[0].mxu0
  %5853 = vdwg.mxu0
  %5854 = vmatprep.subr.mxu0 0.0
  %5855 = vmatpush1.msra.mxu0 %v5713
  %5856 = vmatprep.subr.mxu0 0.0
  %5857 = vmatpush1.msra.mxu0 %v5714
  %5858 = vmatprep.subr.mxu0 0.0
  %5859 = vmatpush1.msra.mxu0 %v5715
  %5860 = vmatprep.subr.mxu0 0.0
  %5861 = vmatpush1.msra.mxu0 %v5716
  %5862 = vmatprep.subr.mxu0 0.0
  %5863 = vmatpush1.msra.mxu0 %v5717
  %5864 = vmatprep.subr.mxu0 0.0
  %5865 = vmatpush1.msra.mxu0 %v5718
  %5866 = vmatprep.subr.mxu0 0.0
  %5867 = vmatpush1.msra.mxu0 %v5719
  %5868 = vmatprep.subr.mxu0 0.0
  %5869 = vmatpush1.msra.mxu0 %v5720
  %5870 = vmatprep.subr.mxu0 0.0
  %5871 = vmatpush1.msra.mxu0 %v5721
  %5872 = vmatprep.subr.mxu0 0.0
  %5873 = vmatpush1.msra.mxu0 %v5722
  %5874 = vmatprep.subr.mxu0 0.0
  %5875 = vmatpush1.msra.mxu0 %v5723
  %5876 = vmatprep.subr.mxu0 0.0
  %5877 = vmatpush1.msra.mxu0 %v5724
  %5878 = vmatprep.subr.mxu0 0.0
  %5879 = vmatpush1.msra.mxu0 %v5725
  %5880 = vmatprep.subr.mxu0 0.0
  %5881 = vmatpush1.msra.mxu0 %v5726
  %5882 = vmatprep.subr.mxu0 0.0
  %5883 = vmatpush1.msra.mxu0 %v5727
  %5884 = vmatprep.subr.mxu0 0.0
  %5885 = vmatpush1.msra.mxu0 %v5728
  %5886 = vmatprep.subr.mxu0 0.0
  %5887 = vmatpush1.msra.mxu0 %v5729
  %5888 = vmatprep.subr.mxu0 0.0
  %5889 = vmatpush1.msra.mxu0 %v5730
  %5890 = vmatprep.subr.mxu0 0.0
  %5891 = vmatpush1.msra.mxu0 %v5731
  %5892 = vmatprep.subr.mxu0 0.0
  %5893 = vmatpush1.msra.mxu0 %v5732
  %5894 = vmatprep.subr.mxu0 0.0
  %5895 = vmatpush1.msra.mxu0 %v5733
  %5896 = vmatprep.subr.mxu0 0.0
  %5897 = vmatpush1.msra.mxu0 %v5734
  %5898 = vmatprep.subr.mxu0 0.0
  %5899 = vmatpush1.msra.mxu0 %v5735
  %5900 = vmatprep.subr.mxu0 0.0
  %5901 = vmatpush1.msra.mxu0 %v5736
  %5902 = vmatprep.subr.mxu0 0.0
  %5903 = vmatpush1.msra.mxu0 %v5737
  %5904 = vmatprep.subr.mxu0 0.0
  %5905 = vmatpush1.msra.mxu0 %v5738
  %5906 = vmatprep.subr.mxu0 0.0
  %5907 = vmatpush1.msra.mxu0 %v5739
  %5908 = vmatprep.subr.mxu0 0.0
  %5909 = vmatpush1.msra.mxu0 %v5740
  %5910 = vmatprep.subr.mxu0 0.0
  %5911 = vmatpush1.msra.mxu0 %v5741
  %5912 = vmatprep.subr.mxu0 0.0
  %5913 = vmatpush1.msra.mxu0 %v5742
  %5914 = vmatprep.subr.mxu0 0.0
  %5915 = vmatpush1.msra.mxu0 %v5743
  %5916 = vmatprep.subr.mxu0 0.0
  %5917 = vmatpush1.msra.mxu0 %v5744
  %5918 = vmatprep.mubr.f32.mxu0 %v5678
  %5919 = vmatmul.mubr.f32.gmra.mrb[0].mxu0 %v5677
  %v5920 = vpop.f32.mrb[0].mxu0
  %v5921 = vadd.f32 %v5851, %v5920
  %v5922 = vpop.f32.mrb[0].mxu0
  %5923 = vdwg.mxu0
  %5924 = vmatprep.subr.mxu0 0.0
  %5925 = vmatpush1.msra.mxu0 %v5745
  %5926 = vmatprep.subr.mxu0 0.0
  %5927 = vmatpush1.msra.mxu0 %v5746
  %5928 = vmatprep.subr.mxu0 0.0
  %5929 = vmatpush1.msra.mxu0 %v5747
  %5930 = vmatprep.subr.mxu0 0.0
  %5931 = vmatpush1.msra.mxu0 %v5748
  %5932 = vmatprep.subr.mxu0 0.0
  %5933 = vmatpush1.msra.mxu0 %v5749
  %5934 = vmatprep.subr.mxu0 0.0
  %5935 = vmatpush1.msra.mxu0 %v5750
  %5936 = vmatprep.subr.mxu0 0.0
  %5937 = vmatpush1.msra.mxu0 %v5751
  %5938 = vmatprep.subr.mxu0 0.0
  %5939 = vmatpush1.msra.mxu0 %v5752
  %5940 = vmatprep.subr.mxu0 0.0
  %5941 = vmatpush1.msra.mxu0 %v5753
  %5942 = vmatprep.subr.mxu0 0.0
  %5943 = vmatpush1.msra.mxu0 %v5754
  %5944 = vmatprep.subr.mxu0 0.0
  %5945 = vmatpush1.msra.mxu0 %v5755
  %5946 = vmatprep.subr.mxu0 0.0
  %5947 = vmatpush1.msra.mxu0 %v5756
  %5948 = vmatprep.subr.mxu0 0.0
  %5949 = vmatpush1.msra.mxu0 %v5757
  %5950 = vmatprep.subr.mxu0 0.0
  %5951 = vmatpush1.msra.mxu0 %v5758
  %5952 = vmatprep.subr.mxu0 0.0
  %5953 = vmatpush1.msra.mxu0 %v5759
  %5954 = vmatprep.subr.mxu0 0.0
  %5955 = vmatpush1.msra.mxu0 %v5760
  %5956 = vmatprep.subr.mxu0 0.0
  %5957 = vmatpush1.msra.mxu0 %v5761
  %5958 = vmatprep.subr.mxu0 0.0
  %5959 = vmatpush1.msra.mxu0 %v5762
  %5960 = vmatprep.subr.mxu0 0.0
  %5961 = vmatpush1.msra.mxu0 %v5763
  %5962 = vmatprep.subr.mxu0 0.0
  %5963 = vmatpush1.msra.mxu0 %v5764
  %5964 = vmatprep.subr.mxu0 0.0
  %5965 = vmatpush1.msra.mxu0 %v5765
  %5966 = vmatprep.subr.mxu0 0.0
  %5967 = vmatpush1.msra.mxu0 %v5766
  %5968 = vmatprep.subr.mxu0 0.0
  %5969 = vmatpush1.msra.mxu0 %v5767
  %5970 = vmatprep.subr.mxu0 0.0
  %5971 = vmatpush1.msra.mxu0 %v5768
  %5972 = vmatprep.subr.mxu0 0.0
  %5973 = vmatpush1.msra.mxu0 %v5769
  %5974 = vmatprep.subr.mxu0 0.0
  %5975 = vmatpush1.msra.mxu0 %v5770
  %5976 = vmatprep.subr.mxu0 0.0
  %5977 = vmatpush1.msra.mxu0 %v5771
  %5978 = vmatprep.subr.mxu0 0.0
  %5979 = vmatpush1.msra.mxu0 %v5772
  %5980 = vmatprep.subr.mxu0 0.0
  %5981 = vmatpush1.msra.mxu0 %v5773
  %5982 = vmatprep.subr.mxu0 0.0
  %5983 = vmatpush1.msra.mxu0 %v5774
  %5984 = vmatprep.subr.mxu0 0.0
  %5985 = vmatpush1.msra.mxu0 %v5775
  %5986 = vmatprep.subr.mxu0 0.0
  %5987 = vmatpush1.msra.mxu0 %v5776
  %5988 = vmatprep.mubr.f32.mxu0 %v5680
  %5989 = vmatmul.mubr.f32.gmra.mrb[0].mxu0 %v5679
  %v5990 = vpop.f32.mrb[0].mxu0
  %v5991 = vadd.f32 %v5921, %v5990
  %v5992 = vpop.f32.mrb[0].mxu0
  %5993 = vdwg.mxu0
  %v5994 = vld [vmem:[%s6] sm:$0xff]
  %v5995 = vld [vmem:[%s6 + $0x8] sm:$0xff]
  %v5996 = vld [vmem:[%s6 + $0x10] sm:$0xff]
  %v5997 = vld [vmem:[%s6 + $0x18] sm:$0xff]
  %v5998 = vld [vmem:[%s7] sm:$0xff]
  %v5999 = vld [vmem:[%s7 + $0x8] sm:$0xff]
  %v6000 = vld [vmem:[%s7 + $0x10] sm:$0xff]
  %v6001 = vld [vmem:[%s7 + $0x18] sm:$0xff]
  %vm6002 = vcmask 261120
  %v6004 = vsel %vm6002, %v5674, 0
  %6006 = vmatprep.subr.mxu0 0.0
  %6007 = vmatpush1.msra.mxu0 %v5998
  %6008 = vmatprep.subr.mxu0 0.0
  %6009 = vmatpush1.msra.mxu0 %v5999
  %6010 = vmatprep.subr.mxu0 0.0
  %6011 = vmatpush1.msra.mxu0 %v6000
  %6012 = vmatprep.subr.mxu0 0.0
  %6013 = vmatpush1.msra.mxu0 %v6001
  %6014 = vmatprep.subr.mxu0 0.0
  %6015 = vmatpush1.msra.mxu0 0.0
  %6016 = vmatprep.subr.mxu0 0.0
  %6017 = vmatpush1.msra.mxu0 0.0
  %6018 = vmatprep.subr.mxu0 0.0
  %6019 = vmatpush1.msra.mxu0 0.0
  %6020 = vmatprep.subr.mxu0 0.0
  %6021 = vmatpush1.msra.mxu0 0.0
  %6022 = vmatprep.subr.mxu0 0.0
  %6023 = vmatpush1.msra.mxu0 0.0
  %6024 = vmatprep.subr.mxu0 0.0
  %6025 = vmatpush1.msra.mxu0 0.0
  %6026 = vmatprep.subr.mxu0 0.0
  %6027 = vmatpush1.msra.mxu0 0.0
  %6028 = vmatprep.subr.mxu0 0.0
  %6029 = vmatpush1.msra.mxu0 0.0
  %6030 = vmatprep.subr.mxu0 0.0
  %6031 = vmatpush1.msra.mxu0 0.0
  %6032 = vmatprep.subr.mxu0 0.0
  %6033 = vmatpush1.msra.mxu0 0.0
  %6034 = vmatprep.subr.mxu0 0.0
  %6035 = vmatpush1.msra.mxu0 0.0
  %6036 = vmatprep.subr.mxu0 0.0
  %6037 = vmatpush1.msra.mxu0 0.0
  %6038 = vmatprep.subr.mxu0 0.0
  %6039 = vmatpush1.msra.mxu0 0.0
  %6040 = vmatprep.subr.mxu0 0.0
  %6041 = vmatpush1.msra.mxu0 0.0
  %6042 = vmatprep.subr.mxu0 0.0
  %6043 = vmatpush1.msra.mxu0 0.0
  %6044 = vmatprep.subr.mxu0 0.0
  %6045 = vmatpush1.msra.mxu0 0.0
  %6046 = vmatprep.subr.mxu0 0.0
  %6047 = vmatpush1.msra.mxu0 0.0
  %6048 = vmatprep.subr.mxu0 0.0
  %6049 = vmatpush1.msra.mxu0 0.0
  %6050 = vmatprep.subr.mxu0 0.0
  %6051 = vmatpush1.msra.mxu0 0.0
  %6052 = vmatprep.subr.mxu0 0.0
  %6053 = vmatpush1.msra.mxu0 0.0
  %6054 = vmatprep.subr.mxu0 0.0
  %6055 = vmatpush1.msra.mxu0 0.0
  %6056 = vmatprep.subr.mxu0 0.0
  %6057 = vmatpush1.msra.mxu0 0.0
  %6058 = vmatprep.subr.mxu0 0.0
  %6059 = vmatpush1.msra.mxu0 0.0
  %6060 = vmatprep.subr.mxu0 0.0
  %6061 = vmatpush1.msra.mxu0 0.0
  %6062 = vmatprep.subr.mxu0 0.0
  %6063 = vmatpush1.msra.mxu0 0.0
  %6064 = vmatprep.subr.mxu0 0.0
  %6065 = vmatpush1.msra.mxu0 0.0
  %6066 = vmatprep.subr.mxu0 0.0
  %6067 = vmatpush1.msra.mxu0 0.0
  %6068 = vmatprep.subr.mxu0 0.0
  %6069 = vmatpush1.msra.mxu0 0.0
  %6070 = vmatprep.mubr.f32.mxu0 0.0
  %6071 = vmatmul.mubr.f32.gmra.mrb[0].mxu0 %v6004
  %v6072 = vpop.f32.mrb[0].mxu0
  %v6073 = vadd.f32 0.0, %v6072
  %v6074 = vpop.f32.mrb[0].mxu0
  %6075 = vdwg.mxu0
  %v6077 = vsel %vm6002, %v5991, 0
  %6079 = vmatprep.subr.mxu0 0.0
  %6080 = vmatpush1.msra.mxu0 %v5994
  %6081 = vmatprep.subr.mxu0 0.0
  %6082 = vmatpush1.msra.mxu0 %v5995
  %6083 = vmatprep.subr.mxu0 0.0
  %6084 = vmatpush1.msra.mxu0 %v5996
  %6085 = vmatprep.subr.mxu0 0.0
  %6086 = vmatpush1.msra.mxu0 %v5997
  %6087 = vmatprep.subr.mxu0 0.0
  %6088 = vmatpush1.msra.mxu0 0.0
  %6089 = vmatprep.subr.mxu0 0.0
  %6090 = vmatpush1.msra.mxu0 0.0
  %6091 = vmatprep.subr.mxu0 0.0
  %6092 = vmatpush1.msra.mxu0 0.0
  %6093 = vmatprep.subr.mxu0 0.0
  %6094 = vmatpush1.msra.mxu0 0.0
  %6095 = vmatprep.subr.mxu0 0.0
  %6096 = vmatpush1.msra.mxu0 0.0
  %6097 = vmatprep.subr.mxu0 0.0
  %6098 = vmatpush1.msra.mxu0 0.0
  %6099 = vmatprep.subr.mxu0 0.0
  %6100 = vmatpush1.msra.mxu0 0.0
  %6101 = vmatprep.subr.mxu0 0.0
  %6102 = vmatpush1.msra.mxu0 0.0
  %6103 = vmatprep.subr.mxu0 0.0
  %6104 = vmatpush1.msra.mxu0 0.0
  %6105 = vmatprep.subr.mxu0 0.0
  %6106 = vmatpush1.msra.mxu0 0.0
  %6107 = vmatprep.subr.mxu0 0.0
  %6108 = vmatpush1.msra.mxu0 0.0
  %6109 = vmatprep.subr.mxu0 0.0
  %6110 = vmatpush1.msra.mxu0 0.0
  %6111 = vmatprep.subr.mxu0 0.0
  %6112 = vmatpush1.msra.mxu0 0.0
  %6113 = vmatprep.subr.mxu0 0.0
  %6114 = vmatpush1.msra.mxu0 0.0
  %6115 = vmatprep.subr.mxu0 0.0
  %6116 = vmatpush1.msra.mxu0 0.0
  %6117 = vmatprep.subr.mxu0 0.0
  %6118 = vmatpush1.msra.mxu0 0.0
  %6119 = vmatprep.subr.mxu0 0.0
  %6120 = vmatpush1.msra.mxu0 0.0
  %6121 = vmatprep.subr.mxu0 0.0
  %6122 = vmatpush1.msra.mxu0 0.0
  %6123 = vmatprep.subr.mxu0 0.0
  %6124 = vmatpush1.msra.mxu0 0.0
  %6125 = vmatprep.subr.mxu0 0.0
  %6126 = vmatpush1.msra.mxu0 0.0
  %6127 = vmatprep.subr.mxu0 0.0
  %6128 = vmatpush1.msra.mxu0 0.0
  %6129 = vmatprep.subr.mxu0 0.0
  %6130 = vmatpush1.msra.mxu0 0.0
  %6131 = vmatprep.subr.mxu0 0.0
  %6132 = vmatpush1.msra.mxu0 0.0
  %6133 = vmatprep.subr.mxu0 0.0
  %6134 = vmatpush1.msra.mxu0 0.0
  %6135 = vmatprep.subr.mxu0 0.0
  %6136 = vmatpush1.msra.mxu0 0.0
  %6137 = vmatprep.subr.mxu0 0.0
  %6138 = vmatpush1.msra.mxu0 0.0
  %6139 = vmatprep.subr.mxu0 0.0
  %6140 = vmatpush1.msra.mxu0 0.0
  %6141 = vmatprep.subr.mxu0 0.0
  %6142 = vmatpush1.msra.mxu0 0.0
  %6143 = vmatprep.mubr.f32.mxu0 0.0
  %6144 = vmatmul.mubr.f32.gmra.mrb[0].mxu0 %v6077
  %v6145 = vpop.f32.mrb[0].mxu0
  %v6146 = vadd.f32 %v6073, %v6145
  %v6147 = vpop.f32.mrb[0].mxu0
  %6148 = vdwg.mxu0
  %v6149 = vld [vmem:[%s8] sm:$0x1]
  %v6151 = vlaneseq
  %v6152 = vshrl.u32 %v6151, 7
  %v6153 = vsub.s32 0, %v6152
  %v6154 = vrot.slane %v6149, %v6153
  %v6156 = vadd.f32 %v6146, %v6154
  %vm6157 = vcmask 15360
  %6158 = vst.msk [vmem:[%s9] sm:$0xff] %vm6157, %v6156
  // Predicated region
  $region38: #{tpu_custom_call.1} parent=0 // pred_check
    _
  $region39: #{tpu_custom_call.1} parent=0 // pred_check_branch
    %6160 = sbr.rel (0) target = $region41
  $region40: #{tpu_custom_call.1} parent=0 // pred_region
    _
  $region41: #{tpu_custom_call.1} parent=0 // pred_fallthru
    _
  // Predicated region
  $region42: #{tpu_custom_call.1} parent=0 // pred_check
    _
  $region43: #{tpu_custom_call.1} parent=0 // pred_check_branch
    %6162 = sbr.rel (0) target = $region45
  $region44: #{tpu_custom_call.1} parent=0 // pred_region
    _
  $region45: #{tpu_custom_call.1} parent=0 // pred_fallthru
    _

</llo_original>
